<compile_context>
chip_gen: v6e
topology: v6e:2x2x1
jax: 0.10.0
libtpu: 0.0.40
codegen_flags: <defaults>
</compile_context>

<pallas_src>
import functools

import jax
import jax.numpy as jnp
from jax.experimental import pallas as pl
from jax.experimental.pallas import tpu as pltpu


def _sepconv_kernel(xb_ref, wdw_ref, wpw_ref, o_ref, dw_ref,
                    *, H, W, Cin, Cout, RC):
    # xb_ref : (1, H, W, Cin)   bf16 input image (auto-pipelined into VMEM)
    # wdw_ref: (9, Cin)         f32 depthwise taps, tap-major (ky*3 + kx)
    # wpw_ref: (Cin, Cout)      bf16 pointwise weights
    # o_ref  : (1, H, W, Cout)  f32 output image
    # dw_ref : (H*W, Cin)       bf16 VMEM staging for the depthwise result
    f32 = jnp.float32

    # ---- depthwise taps: ONE load, hoisted out of all loops
    taps = wdw_ref[...]                                   # (9, Cin) f32

    def shifted_slab(r0, kx):
        """(RC+2, W, Cin) f32 slab: input rows [r0-1, r0+RC], columns shifted by
        (kx-1), zero-padded at the image borders.  All offsets are static."""
        lo, hi = max(r0 - 1, 0), min(r0 + RC + 1, H)      # valid input rows
        wlo, whi = max(kx - 1, 0), min(W + kx - 1, W)     # valid input cols
        s = xb_ref[0, lo:hi, wlo:whi, :].astype(f32)      # (hi-lo, whi-wlo, Cin)
        # zero-pad the W (sublane) border column
        if kx == 0:      # needs column -1
            s = jnp.concatenate(
                [jnp.zeros((hi - lo, 1, Cin), f32), s], axis=1)
        elif kx == 2:    # needs column W
            s = jnp.concatenate(
                [s, jnp.zeros((hi - lo, 1, Cin), f32)], axis=1)
        # zero-pad the H border rows (outermost dim -> just vreg placement)
        rows = [s]
        if r0 == 0:              # needs row -1
            rows.insert(0, jnp.zeros((1, W, Cin), f32))
        if r0 + RC == H:         # needs row H
            rows.append(jnp.zeros((1, W, Cin), f32))
        return jnp.concatenate(rows, axis=0) if len(rows) > 1 else s

    # ---- depthwise 3x3 (VPU, f32 acc), chunked over RC output rows to bound
    #      vreg pressure; each chunk staged to VMEM as bf16 matmul rows.
    for c in range(H // RC):
        r0 = c * RC
        acc = jnp.zeros((RC, W, Cin), f32)
        for kx in range(3):
            xs = shifted_slab(r0, kx)                     # (RC+2, W, Cin)
            for ky in range(3):
                acc = acc + xs[ky:ky + RC] * taps[ky * 3 + kx]
        dw_ref[r0 * W:(r0 + RC) * W, :] = (
            acc.reshape(RC * W, Cin).astype(jnp.bfloat16))

    # ---- pointwise 1x1 == ONE (H*W, Cin) @ (Cin, Cout) bf16 MXU pass, f32 acc
    y = jnp.dot(dw_ref[...], wpw_ref[...], preferred_element_type=jnp.float32)
    o_ref[0] = y.reshape(H, W, Cout).astype(o_ref.dtype)


def _pick_row_chunk(H, W, Cin, vreg_budget=40):
    """Largest divisor of H whose f32 working set (one (RC+2)-row shifted slab
    + the RC-row accumulator) fits in ~vreg_budget vregs."""
    limit = vreg_budget * 8 * 128           # f32 elements
    rc = 1
    for d in range(1, H + 1):
        if H % d == 0 and (2 * d + 2) * W * Cin <= limit:
            rc = d
    return rc


def separable_conv2d(x_nchw, w_dw, w_pw):
    """SeparableConv2d(k=3, s=1, p=1, dilation=1, bias=False) forward.
    NCHW in / NCHW out, matching the PyTorch module."""
    N, Cin, H, W = x_nchw.shape
    Cout = w_pw.shape[0]
    assert w_dw.shape == (Cin, 1, 3, 3) and w_pw.shape[1:] == (Cin, 1, 1)

    # ---- glue (layout only): NCHW -> NHWC, PyTorch weight layouts -> kernel layouts
    x = jnp.transpose(x_nchw, (0, 2, 3, 1)).astype(jnp.bfloat16)       # (N,H,W,Cin)
    wdw = jnp.transpose(w_dw[:, 0], (1, 2, 0)).reshape(9, Cin)         # (Cin,1,3,3)->(9,Cin)
    wdw = wdw.astype(jnp.float32)
    wpw = w_pw[:, :, 0, 0].T.astype(jnp.bfloat16)                      # (Cout,Cin,1,1)->(Cin,Cout)

    RC = _pick_row_chunk(H, W, Cin)

    # ---- generation-aware VMEM budget (v7x: 64 MiB/TC; v5e/v6e: 128 MiB)
    try:
        vmem_cap = pltpu.get_tpu_info().vmem_capacity_bytes
    except Exception:
        vmem_cap = 64 * 1024 * 1024
    vmem_limit = min((3 * vmem_cap) // 4, 100 * 1024 * 1024)

    # one whole image per step: 2x double-buffered in/out blocks + staging scratch
    need = (2 * H * W * Cin * 2 + 2 * H * W * Cout * 4 + H * W * Cin * 2
            + 2 * (9 * Cin * 4 + Cin * Cout * 2))
    # TODO(synk): add an H-strip + halo-exchange path for feature maps too large
    # for one-image-per-step (not needed for the semantic-head shapes).
    assert need <= vmem_limit, (need, vmem_limit)

    kern = functools.partial(_sepconv_kernel,
                             H=H, W=W, Cin=Cin, Cout=Cout, RC=RC)

    flops = 2 * N * H * W * Cin * (Cout + 9)
    bytes_accessed = (x.size * 2 + N * H * W * Cout * 4
                      + wdw.size * 4 + wpw.size * 2)

    out_nhwc = pl.pallas_call(
        kern,
        out_shape=jax.ShapeDtypeStruct((N, H, W, Cout), jnp.float32),
        grid_spec=pltpu.PrefetchScalarGridSpec(
            num_scalar_prefetch=0,
            grid=(N,),                                        # one image per step
            in_specs=[
                pl.BlockSpec((1, H, W, Cin), lambda n: (n, 0, 0, 0)),  # image
                pl.BlockSpec((9, Cin), lambda n: (0, 0)),              # dw taps
                pl.BlockSpec((Cin, Cout), lambda n: (0, 0)),           # pw weights
            ],
            out_specs=pl.BlockSpec((1, H, W, Cout), lambda n: (n, 0, 0, 0)),
            scratch_shapes=[pltpu.VMEM((H * W, Cin), jnp.bfloat16)],   # dw staging
        ),
        compiler_params=pltpu.CompilerParams(
            dimension_semantics=("parallel",),                # v7x: 1 image / TC
            vmem_limit_bytes=vmem_limit,
        ),
        cost_estimate=pl.CostEstimate(
            flops=flops, transcendentals=0, bytes_accessed=bytes_accessed),
    )(x, wdw, wpw)

    return jnp.transpose(out_nhwc, (0, 3, 1, 2))


# ------------------------- pure-JAX reference (checking only) -------------------------
def _ref_separable_conv2d(x, w_dw, w_pw):
    y = jax.lax.conv_general_dilated(
        x, w_dw, (1, 1), ((1, 1), (1, 1)),
        feature_group_count=x.shape[1],
        dimension_numbers=("NCHW", "OIHW", "NCHW"),
        precision=jax.lax.Precision.HIGHEST)
    y = jax.lax.conv_general_dilated(
        y, w_pw, (1, 1), ((0, 0), (0, 0)),
        dimension_numbers=("NCHW", "OIHW", "NCHW"),
        precision=jax.lax.Precision.HIGHEST)
    return y


if __name__ == "__main__":
    key = jax.random.PRNGKey(0)
    k0, k1, k2 = jax.random.split(key, 3)

    # small shapes consistent with the semantic-head usage: SeparableConv2d(256 -> 128, 3)
    N, CIN, COUT, H, W = 2, 256, 128, 16, 16

    x = jax.random.normal(k0, (N, CIN, H, W), jnp.float32)
    w_dw = 0.10 * jax.random.normal(k1, (CIN, 1, 3, 3), jnp.float32)
    w_pw = 0.05 * jax.random.normal(k2, (COUT, CIN, 1, 1), jnp.float32)

    out = jax.block_until_ready(separable_conv2d(x, w_dw, w_pw))
    assert out.shape == (N, COUT, H, W), out.shape

    ref = jax.block_until_ready(_ref_separable_conv2d(x, w_dw, w_pw))
    max_err = float(jnp.max(jnp.abs(out - ref)))
    # bf16 input carry + single-pass bf16 MXU pointwise (f32 accumulation) is an
    # accepted accuracy tradeoff vs. the full-f32 HIGHEST-precision reference.
    assert jnp.allclose(out, ref, atol=2e-2, rtol=2e-2), max_err

    print("KERNEL_OK")
</pallas_src>

<mosaic_0001>
module attributes {stable_mosaic.version = 11 : i64} {
  func.func @_sepconv_kernel(%arg0: i32, %arg1: memref<1x16x16x256xbf16, #tpu.memory_space<vmem>>, %arg2: memref<9x256xf32, #tpu.memory_space<vmem>>, %arg3: memref<256x128xbf16, #tpu.memory_space<vmem>>, %arg4: memref<1x16x16x128xf32, #tpu.memory_space<vmem>>, %arg5: memref<256x256xbf16, #tpu.memory_space<vmem>>) attributes {dimension_semantics = [#tpu.dimension_semantics<parallel>], iteration_bounds = array<i64: 2>, scalar_prefetch = 0 : i64, scratch_operands = 1 : i64, tpu.core_type = #tpu.core_type<tc>, window_params = [{transform_indices = @transform_0, window_bounds = array<i64: 1, 16, 16, 256>}, {pipeline_mode = #tpu.pipeline_mode<synchronous>, transform_indices = @transform_1, window_bounds = array<i64: 9, 256>}, {pipeline_mode = #tpu.pipeline_mode<synchronous>, transform_indices = @transform_2, window_bounds = array<i64: 256, 128>}, {transform_indices = @transform_3, window_bounds = array<i64: 1, 16, 16, 128>}]} {
    %c0 = arith.constant 0 : index
    %c0_0 = arith.constant 0 : index
    %0 = vector.load %arg2[%c0, %c0_0] : memref<9x256xf32, #tpu.memory_space<vmem>>, vector<9x256xf32>
    %cst = arith.constant 0.000000e+00 : f32
    %1 = vector.broadcast %cst : f32 to vector<4x16x256xf32>
    %c0_1 = arith.constant 0 : index
    %c0_2 = arith.constant 0 : index
    %c0_3 = arith.constant 0 : index
    %c0_4 = arith.constant 0 : index
    %2 = vector.load %arg1[%c0_1, %c0_2, %c0_3, %c0_4] : memref<1x16x16x256xbf16, #tpu.memory_space<vmem>>, vector<1x5x15x256xbf16>
    %3 = vector.shape_cast %2 : vector<1x5x15x256xbf16> to vector<5x15x256xbf16>
    %4 = arith.extf %3 : vector<5x15x256xbf16> to vector<5x15x256xf32>
    %cst_5 = arith.constant 0.000000e+00 : f32
    %5 = vector.broadcast %cst_5 : f32 to vector<5x1x256xf32>
    %6 = tpu.concatenate %5, %4 in 1 : vector<5x1x256xf32>, vector<5x15x256xf32> -> vector<5x16x256xf32>
    %cst_6 = arith.constant 0.000000e+00 : f32
    %7 = vector.broadcast %cst_6 : f32 to vector<1x16x256xf32>
    %8 = tpu.concatenate %7, %6 in 0 : vector<1x16x256xf32>, vector<5x16x256xf32> -> vector<6x16x256xf32>
    %9 = vector.extract_strided_slice %8 {offsets = [0, 0, 0], sizes = [4, 16, 256], strides = [1, 1, 1]} : vector<6x16x256xf32> to vector<4x16x256xf32>
    %10 = vector.extract_strided_slice %0 {offsets = [0, 0], sizes = [1, 256], strides = [1, 1]} : vector<9x256xf32> to vector<1x256xf32>
    %11 = vector.shape_cast %10 : vector<1x256xf32> to vector<256xf32>
    %12 = vector.shape_cast %11 : vector<256xf32> to vector<1x1x256xf32>
    %13 = vector.broadcast %12 : vector<1x1x256xf32> to vector<4x16x256xf32>
    %14 = arith.mulf %9, %13 : vector<4x16x256xf32>
    %15 = arith.addf %1, %14 : vector<4x16x256xf32>
    %16 = vector.extract_strided_slice %8 {offsets = [1, 0, 0], sizes = [4, 16, 256], strides = [1, 1, 1]} : vector<6x16x256xf32> to vector<4x16x256xf32>
    %17 = vector.extract_strided_slice %0 {offsets = [3, 0], sizes = [1, 256], strides = [1, 1]} : vector<9x256xf32> to vector<1x256xf32>
    %18 = vector.shape_cast %17 : vector<1x256xf32> to vector<256xf32>
    %19 = vector.shape_cast %18 : vector<256xf32> to vector<1x1x256xf32>
    %20 = vector.broadcast %19 : vector<1x1x256xf32> to vector<4x16x256xf32>
    %21 = arith.mulf %16, %20 : vector<4x16x256xf32>
    %22 = arith.addf %15, %21 : vector<4x16x256xf32>
    %23 = vector.extract_strided_slice %8 {offsets = [2, 0, 0], sizes = [4, 16, 256], strides = [1, 1, 1]} : vector<6x16x256xf32> to vector<4x16x256xf32>
    %24 = vector.extract_strided_slice %0 {offsets = [6, 0], sizes = [1, 256], strides = [1, 1]} : vector<9x256xf32> to vector<1x256xf32>
    %25 = vector.shape_cast %24 : vector<1x256xf32> to vector<256xf32>
    %26 = vector.shape_cast %25 : vector<256xf32> to vector<1x1x256xf32>
    %27 = vector.broadcast %26 : vector<1x1x256xf32> to vector<4x16x256xf32>
    %28 = arith.mulf %23, %27 : vector<4x16x256xf32>
    %29 = arith.addf %22, %28 : vector<4x16x256xf32>
    %c0_7 = arith.constant 0 : index
    %c0_8 = arith.constant 0 : index
    %c0_9 = arith.constant 0 : index
    %c0_10 = arith.constant 0 : index
    %30 = vector.load %arg1[%c0_7, %c0_8, %c0_9, %c0_10] : memref<1x16x16x256xbf16, #tpu.memory_space<vmem>>, vector<1x5x16x256xbf16>
    %31 = vector.shape_cast %30 : vector<1x5x16x256xbf16> to vector<5x16x256xbf16>
    %32 = arith.extf %31 : vector<5x16x256xbf16> to vector<5x16x256xf32>
    %cst_11 = arith.constant 0.000000e+00 : f32
    %33 = vector.broadcast %cst_11 : f32 to vector<1x16x256xf32>
    %34 = tpu.concatenate %33, %32 in 0 : vector<1x16x256xf32>, vector<5x16x256xf32> -> vector<6x16x256xf32>
    %35 = vector.extract_strided_slice %34 {offsets = [0, 0, 0], sizes = [4, 16, 256], strides = [1, 1, 1]} : vector<6x16x256xf32> to vector<4x16x256xf32>
    %36 = vector.extract_strided_slice %0 {offsets = [1, 0], sizes = [1, 256], strides = [1, 1]} : vector<9x256xf32> to vector<1x256xf32>
    %37 = vector.shape_cast %36 : vector<1x256xf32> to vector<256xf32>
    %38 = vector.shape_cast %37 : vector<256xf32> to vector<1x1x256xf32>
    %39 = vector.broadcast %38 : vector<1x1x256xf32> to vector<4x16x256xf32>
    %40 = arith.mulf %35, %39 : vector<4x16x256xf32>
    %41 = arith.addf %29, %40 : vector<4x16x256xf32>
    %42 = vector.extract_strided_slice %34 {offsets = [1, 0, 0], sizes = [4, 16, 256], strides = [1, 1, 1]} : vector<6x16x256xf32> to vector<4x16x256xf32>
    %43 = vector.extract_strided_slice %0 {offsets = [4, 0], sizes = [1, 256], strides = [1, 1]} : vector<9x256xf32> to vector<1x256xf32>
    %44 = vector.shape_cast %43 : vector<1x256xf32> to vector<256xf32>
    %45 = vector.shape_cast %44 : vector<256xf32> to vector<1x1x256xf32>
    %46 = vector.broadcast %45 : vector<1x1x256xf32> to vector<4x16x256xf32>
    %47 = arith.mulf %42, %46 : vector<4x16x256xf32>
    %48 = arith.addf %41, %47 : vector<4x16x256xf32>
    %49 = vector.extract_strided_slice %34 {offsets = [2, 0, 0], sizes = [4, 16, 256], strides = [1, 1, 1]} : vector<6x16x256xf32> to vector<4x16x256xf32>
    %50 = vector.extract_strided_slice %0 {offsets = [7, 0], sizes = [1, 256], strides = [1, 1]} : vector<9x256xf32> to vector<1x256xf32>
    %51 = vector.shape_cast %50 : vector<1x256xf32> to vector<256xf32>
    %52 = vector.shape_cast %51 : vector<256xf32> to vector<1x1x256xf32>
    %53 = vector.broadcast %52 : vector<1x1x256xf32> to vector<4x16x256xf32>
    %54 = arith.mulf %49, %53 : vector<4x16x256xf32>
    %55 = arith.addf %48, %54 : vector<4x16x256xf32>
    %c0_12 = arith.constant 0 : index
    %c0_13 = arith.constant 0 : index
    %c1 = arith.constant 1 : index
    %c0_14 = arith.constant 0 : index
    %56 = vector.load %arg1[%c0_12, %c0_13, %c1, %c0_14] : memref<1x16x16x256xbf16, #tpu.memory_space<vmem>>, vector<1x5x15x256xbf16>
    %57 = vector.shape_cast %56 : vector<1x5x15x256xbf16> to vector<5x15x256xbf16>
    %58 = arith.extf %57 : vector<5x15x256xbf16> to vector<5x15x256xf32>
    %cst_15 = arith.constant 0.000000e+00 : f32
    %59 = vector.broadcast %cst_15 : f32 to vector<5x1x256xf32>
    %60 = tpu.concatenate %58, %59 in 1 : vector<5x15x256xf32>, vector<5x1x256xf32> -> vector<5x16x256xf32>
    %cst_16 = arith.constant 0.000000e+00 : f32
    %61 = vector.broadcast %cst_16 : f32 to vector<1x16x256xf32>
    %62 = tpu.concatenate %61, %60 in 0 : vector<1x16x256xf32>, vector<5x16x256xf32> -> vector<6x16x256xf32>
    %63 = vector.extract_strided_slice %62 {offsets = [0, 0, 0], sizes = [4, 16, 256], strides = [1, 1, 1]} : vector<6x16x256xf32> to vector<4x16x256xf32>
    %64 = vector.extract_strided_slice %0 {offsets = [2, 0], sizes = [1, 256], strides = [1, 1]} : vector<9x256xf32> to vector<1x256xf32>
    %65 = vector.shape_cast %64 : vector<1x256xf32> to vector<256xf32>
    %66 = vector.shape_cast %65 : vector<256xf32> to vector<1x1x256xf32>
    %67 = vector.broadcast %66 : vector<1x1x256xf32> to vector<4x16x256xf32>
    %68 = arith.mulf %63, %67 : vector<4x16x256xf32>
    %69 = arith.addf %55, %68 : vector<4x16x256xf32>
    %70 = vector.extract_strided_slice %62 {offsets = [1, 0, 0], sizes = [4, 16, 256], strides = [1, 1, 1]} : vector<6x16x256xf32> to vector<4x16x256xf32>
    %71 = vector.extract_strided_slice %0 {offsets = [5, 0], sizes = [1, 256], strides = [1, 1]} : vector<9x256xf32> to vector<1x256xf32>
    %72 = vector.shape_cast %71 : vector<1x256xf32> to vector<256xf32>
    %73 = vector.shape_cast %72 : vector<256xf32> to vector<1x1x256xf32>
    %74 = vector.broadcast %73 : vector<1x1x256xf32> to vector<4x16x256xf32>
    %75 = arith.mulf %70, %74 : vector<4x16x256xf32>
    %76 = arith.addf %69, %75 : vector<4x16x256xf32>
    %77 = vector.extract_strided_slice %62 {offsets = [2, 0, 0], sizes = [4, 16, 256], strides = [1, 1, 1]} : vector<6x16x256xf32> to vector<4x16x256xf32>
    %78 = vector.extract_strided_slice %0 {offsets = [8, 0], sizes = [1, 256], strides = [1, 1]} : vector<9x256xf32> to vector<1x256xf32>
    %79 = vector.shape_cast %78 : vector<1x256xf32> to vector<256xf32>
    %80 = vector.shape_cast %79 : vector<256xf32> to vector<1x1x256xf32>
    %81 = vector.broadcast %80 : vector<1x1x256xf32> to vector<4x16x256xf32>
    %82 = arith.mulf %77, %81 : vector<4x16x256xf32>
    %83 = arith.addf %76, %82 : vector<4x16x256xf32>
    %84 = vector.shape_cast %83 : vector<4x16x256xf32> to vector<64x256xf32>
    %85 = arith.truncf %84 : vector<64x256xf32> to vector<64x256xbf16>
    %c0_17 = arith.constant 0 : index
    %c0_18 = arith.constant 0 : index
    %86 = vector.load %arg5[%c0_17, %c0_18] : memref<256x256xbf16, #tpu.memory_space<vmem>>, vector<64x256xbf16>
    tpu.vector_store %arg5[%c0_17, %c0_18], %85 {strides = array<i32>} : memref<256x256xbf16, #tpu.memory_space<vmem>>, vector<64x256xbf16>,
    %cst_19 = arith.constant 0.000000e+00 : f32
    %87 = vector.broadcast %cst_19 : f32 to vector<4x16x256xf32>
    %c0_20 = arith.constant 0 : index
    %c3 = arith.constant 3 : index
    %c0_21 = arith.constant 0 : index
    %c0_22 = arith.constant 0 : index
    %88 = vector.load %arg1[%c0_20, %c3, %c0_21, %c0_22] : memref<1x16x16x256xbf16, #tpu.memory_space<vmem>>, vector<1x6x15x256xbf16>
    %89 = vector.shape_cast %88 : vector<1x6x15x256xbf16> to vector<6x15x256xbf16>
    %90 = arith.extf %89 : vector<6x15x256xbf16> to vector<6x15x256xf32>
    %cst_23 = arith.constant 0.000000e+00 : f32
    %91 = vector.broadcast %cst_23 : f32 to vector<6x1x256xf32>
    %92 = tpu.concatenate %91, %90 in 1 : vector<6x1x256xf32>, vector<6x15x256xf32> -> vector<6x16x256xf32>
    %93 = vector.extract_strided_slice %92 {offsets = [0, 0, 0], sizes = [4, 16, 256], strides = [1, 1, 1]} : vector<6x16x256xf32> to vector<4x16x256xf32>
    %94 = vector.extract_strided_slice %0 {offsets = [0, 0], sizes = [1, 256], strides = [1, 1]} : vector<9x256xf32> to vector<1x256xf32>
    %95 = vector.shape_cast %94 : vector<1x256xf32> to vector<256xf32>
    %96 = vector.shape_cast %95 : vector<256xf32> to vector<1x1x256xf32>
    %97 = vector.broadcast %96 : vector<1x1x256xf32> to vector<4x16x256xf32>
    %98 = arith.mulf %93, %97 : vector<4x16x256xf32>
    %99 = arith.addf %87, %98 : vector<4x16x256xf32>
    %100 = vector.extract_strided_slice %92 {offsets = [1, 0, 0], sizes = [4, 16, 256], strides = [1, 1, 1]} : vector<6x16x256xf32> to vector<4x16x256xf32>
    %101 = vector.extract_strided_slice %0 {offsets = [3, 0], sizes = [1, 256], strides = [1, 1]} : vector<9x256xf32> to vector<1x256xf32>
    %102 = vector.shape_cast %101 : vector<1x256xf32> to vector<256xf32>
    %103 = vector.shape_cast %102 : vector<256xf32> to vector<1x1x256xf32>
    %104 = vector.broadcast %103 : vector<1x1x256xf32> to vector<4x16x256xf32>
    %105 = arith.mulf %100, %104 : vector<4x16x256xf32>
    %106 = arith.addf %99, %105 : vector<4x16x256xf32>
    %107 = vector.extract_strided_slice %92 {offsets = [2, 0, 0], sizes = [4, 16, 256], strides = [1, 1, 1]} : vector<6x16x256xf32> to vector<4x16x256xf32>
    %108 = vector.extract_strided_slice %0 {offsets = [6, 0], sizes = [1, 256], strides = [1, 1]} : vector<9x256xf32> to vector<1x256xf32>
    %109 = vector.shape_cast %108 : vector<1x256xf32> to vector<256xf32>
    %110 = vector.shape_cast %109 : vector<256xf32> to vector<1x1x256xf32>
    %111 = vector.broadcast %110 : vector<1x1x256xf32> to vector<4x16x256xf32>
    %112 = arith.mulf %107, %111 : vector<4x16x256xf32>
    %113 = arith.addf %106, %112 : vector<4x16x256xf32>
    %c0_24 = arith.constant 0 : index
    %c3_25 = arith.constant 3 : index
    %c0_26 = arith.constant 0 : index
    %c0_27 = arith.constant 0 : index
    %114 = vector.load %arg1[%c0_24, %c3_25, %c0_26, %c0_27] : memref<1x16x16x256xbf16, #tpu.memory_space<vmem>>, vector<1x6x16x256xbf16>
    %115 = vector.shape_cast %114 : vector<1x6x16x256xbf16> to vector<6x16x256xbf16>
    %116 = arith.extf %115 : vector<6x16x256xbf16> to vector<6x16x256xf32>
    %117 = vector.extract_strided_slice %116 {offsets = [0, 0, 0], sizes = [4, 16, 256], strides = [1, 1, 1]} : vector<6x16x256xf32> to vector<4x16x256xf32>
    %118 = vector.extract_strided_slice %0 {offsets = [1, 0], sizes = [1, 256], strides = [1, 1]} : vector<9x256xf32> to vector<1x256xf32>
    %119 = vector.shape_cast %118 : vector<1x256xf32> to vector<256xf32>
    %120 = vector.shape_cast %119 : vector<256xf32> to vector<1x1x256xf32>
    %121 = vector.broadcast %120 : vector<1x1x256xf32> to vector<4x16x256xf32>
    %122 = arith.mulf %117, %121 : vector<4x16x256xf32>
    %123 = arith.addf %113, %122 : vector<4x16x256xf32>
    %124 = vector.extract_strided_slice %116 {offsets = [1, 0, 0], sizes = [4, 16, 256], strides = [1, 1, 1]} : vector<6x16x256xf32> to vector<4x16x256xf32>
    %125 = vector.extract_strided_slice %0 {offsets = [4, 0], sizes = [1, 256], strides = [1, 1]} : vector<9x256xf32> to vector<1x256xf32>
    %126 = vector.shape_cast %125 : vector<1x256xf32> to vector<256xf32>
    %127 = vector.shape_cast %126 : vector<256xf32> to vector<1x1x256xf32>
    %128 = vector.broadcast %127 : vector<1x1x256xf32> to vector<4x16x256xf32>
    %129 = arith.mulf %124, %128 : vector<4x16x256xf32>
    %130 = arith.addf %123, %129 : vector<4x16x256xf32>
    %131 = vector.extract_strided_slice %116 {offsets = [2, 0, 0], sizes = [4, 16, 256], strides = [1, 1, 1]} : vector<6x16x256xf32> to vector<4x16x256xf32>
    %132 = vector.extract_strided_slice %0 {offsets = [7, 0], sizes = [1, 256], strides = [1, 1]} : vector<9x256xf32> to vector<1x256xf32>
    %133 = vector.shape_cast %132 : vector<1x256xf32> to vector<256xf32>
    %134 = vector.shape_cast %133 : vector<256xf32> to vector<1x1x256xf32>
    %135 = vector.broadcast %134 : vector<1x1x256xf32> to vector<4x16x256xf32>
    %136 = arith.mulf %131, %135 : vector<4x16x256xf32>
    %137 = arith.addf %130, %136 : vector<4x16x256xf32>
    %c0_28 = arith.constant 0 : index
    %c3_29 = arith.constant 3 : index
    %c1_30 = arith.constant 1 : index
    %c0_31 = arith.constant 0 : index
    %138 = vector.load %arg1[%c0_28, %c3_29, %c1_30, %c0_31] : memref<1x16x16x256xbf16, #tpu.memory_space<vmem>>, vector<1x6x15x256xbf16>
    %139 = vector.shape_cast %138 : vector<1x6x15x256xbf16> to vector<6x15x256xbf16>
    %140 = arith.extf %139 : vector<6x15x256xbf16> to vector<6x15x256xf32>
    %cst_32 = arith.constant 0.000000e+00 : f32
    %141 = vector.broadcast %cst_32 : f32 to vector<6x1x256xf32>
    %142 = tpu.concatenate %140, %141 in 1 : vector<6x15x256xf32>, vector<6x1x256xf32> -> vector<6x16x256xf32>
    %143 = vector.extract_strided_slice %142 {offsets = [0, 0, 0], sizes = [4, 16, 256], strides = [1, 1, 1]} : vector<6x16x256xf32> to vector<4x16x256xf32>
    %144 = vector.extract_strided_slice %0 {offsets = [2, 0], sizes = [1, 256], strides = [1, 1]} : vector<9x256xf32> to vector<1x256xf32>
    %145 = vector.shape_cast %144 : vector<1x256xf32> to vector<256xf32>
    %146 = vector.shape_cast %145 : vector<256xf32> to vector<1x1x256xf32>
    %147 = vector.broadcast %146 : vector<1x1x256xf32> to vector<4x16x256xf32>
    %148 = arith.mulf %143, %147 : vector<4x16x256xf32>
    %149 = arith.addf %137, %148 : vector<4x16x256xf32>
    %150 = vector.extract_strided_slice %142 {offsets = [1, 0, 0], sizes = [4, 16, 256], strides = [1, 1, 1]} : vector<6x16x256xf32> to vector<4x16x256xf32>
    %151 = vector.extract_strided_slice %0 {offsets = [5, 0], sizes = [1, 256], strides = [1, 1]} : vector<9x256xf32> to vector<1x256xf32>
    %152 = vector.shape_cast %151 : vector<1x256xf32> to vector<256xf32>
    %153 = vector.shape_cast %152 : vector<256xf32> to vector<1x1x256xf32>
    %154 = vector.broadcast %153 : vector<1x1x256xf32> to vector<4x16x256xf32>
    %155 = arith.mulf %150, %154 : vector<4x16x256xf32>
    %156 = arith.addf %149, %155 : vector<4x16x256xf32>
    %157 = vector.extract_strided_slice %142 {offsets = [2, 0, 0], sizes = [4, 16, 256], strides = [1, 1, 1]} : vector<6x16x256xf32> to vector<4x16x256xf32>
    %158 = vector.extract_strided_slice %0 {offsets = [8, 0], sizes = [1, 256], strides = [1, 1]} : vector<9x256xf32> to vector<1x256xf32>
    %159 = vector.shape_cast %158 : vector<1x256xf32> to vector<256xf32>
    %160 = vector.shape_cast %159 : vector<256xf32> to vector<1x1x256xf32>
    %161 = vector.broadcast %160 : vector<1x1x256xf32> to vector<4x16x256xf32>
    %162 = arith.mulf %157, %161 : vector<4x16x256xf32>
    %163 = arith.addf %156, %162 : vector<4x16x256xf32>
    %164 = vector.shape_cast %163 : vector<4x16x256xf32> to vector<64x256xf32>
    %165 = arith.truncf %164 : vector<64x256xf32> to vector<64x256xbf16>
    %c64 = arith.constant 64 : index
    %c0_33 = arith.constant 0 : index
    %166 = vector.load %arg5[%c64, %c0_33] : memref<256x256xbf16, #tpu.memory_space<vmem>>, vector<64x256xbf16>
    tpu.vector_store %arg5[%c64, %c0_33], %165 {strides = array<i32>} : memref<256x256xbf16, #tpu.memory_space<vmem>>, vector<64x256xbf16>,
    %cst_34 = arith.constant 0.000000e+00 : f32
    %167 = vector.broadcast %cst_34 : f32 to vector<4x16x256xf32>
    %c0_35 = arith.constant 0 : index
    %c7 = arith.constant 7 : index
    %c0_36 = arith.constant 0 : index
    %c0_37 = arith.constant 0 : index
    %168 = vector.load %arg1[%c0_35, %c7, %c0_36, %c0_37] : memref<1x16x16x256xbf16, #tpu.memory_space<vmem>>, vector<1x6x15x256xbf16>
    %169 = vector.shape_cast %168 : vector<1x6x15x256xbf16> to vector<6x15x256xbf16>
    %170 = arith.extf %169 : vector<6x15x256xbf16> to vector<6x15x256xf32>
    %cst_38 = arith.constant 0.000000e+00 : f32
    %171 = vector.broadcast %cst_38 : f32 to vector<6x1x256xf32>
    %172 = tpu.concatenate %171, %170 in 1 : vector<6x1x256xf32>, vector<6x15x256xf32> -> vector<6x16x256xf32>
    %173 = vector.extract_strided_slice %172 {offsets = [0, 0, 0], sizes = [4, 16, 256], strides = [1, 1, 1]} : vector<6x16x256xf32> to vector<4x16x256xf32>
    %174 = vector.extract_strided_slice %0 {offsets = [0, 0], sizes = [1, 256], strides = [1, 1]} : vector<9x256xf32> to vector<1x256xf32>
    %175 = vector.shape_cast %174 : vector<1x256xf32> to vector<256xf32>
    %176 = vector.shape_cast %175 : vector<256xf32> to vector<1x1x256xf32>
    %177 = vector.broadcast %176 : vector<1x1x256xf32> to vector<4x16x256xf32>
    %178 = arith.mulf %173, %177 : vector<4x16x256xf32>
    %179 = arith.addf %167, %178 : vector<4x16x256xf32>
    %180 = vector.extract_strided_slice %172 {offsets = [1, 0, 0], sizes = [4, 16, 256], strides = [1, 1, 1]} : vector<6x16x256xf32> to vector<4x16x256xf32>
    %181 = vector.extract_strided_slice %0 {offsets = [3, 0], sizes = [1, 256], strides = [1, 1]} : vector<9x256xf32> to vector<1x256xf32>
    %182 = vector.shape_cast %181 : vector<1x256xf32> to vector<256xf32>
    %183 = vector.shape_cast %182 : vector<256xf32> to vector<1x1x256xf32>
    %184 = vector.broadcast %183 : vector<1x1x256xf32> to vector<4x16x256xf32>
    %185 = arith.mulf %180, %184 : vector<4x16x256xf32>
    %186 = arith.addf %179, %185 : vector<4x16x256xf32>
    %187 = vector.extract_strided_slice %172 {offsets = [2, 0, 0], sizes = [4, 16, 256], strides = [1, 1, 1]} : vector<6x16x256xf32> to vector<4x16x256xf32>
    %188 = vector.extract_strided_slice %0 {offsets = [6, 0], sizes = [1, 256], strides = [1, 1]} : vector<9x256xf32> to vector<1x256xf32>
    %189 = vector.shape_cast %188 : vector<1x256xf32> to vector<256xf32>
    %190 = vector.shape_cast %189 : vector<256xf32> to vector<1x1x256xf32>
    %191 = vector.broadcast %190 : vector<1x1x256xf32> to vector<4x16x256xf32>
    %192 = arith.mulf %187, %191 : vector<4x16x256xf32>
    %193 = arith.addf %186, %192 : vector<4x16x256xf32>
    %c0_39 = arith.constant 0 : index
    %c7_40 = arith.constant 7 : index
    %c0_41 = arith.constant 0 : index
    %c0_42 = arith.constant 0 : index
    %194 = vector.load %arg1[%c0_39, %c7_40, %c0_41, %c0_42] : memref<1x16x16x256xbf16, #tpu.memory_space<vmem>>, vector<1x6x16x256xbf16>
    %195 = vector.shape_cast %194 : vector<1x6x16x256xbf16> to vector<6x16x256xbf16>
    %196 = arith.extf %195 : vector<6x16x256xbf16> to vector<6x16x256xf32>
    %197 = vector.extract_strided_slice %196 {offsets = [0, 0, 0], sizes = [4, 16, 256], strides = [1, 1, 1]} : vector<6x16x256xf32> to vector<4x16x256xf32>
    %198 = vector.extract_strided_slice %0 {offsets = [1, 0], sizes = [1, 256], strides = [1, 1]} : vector<9x256xf32> to vector<1x256xf32>
    %199 = vector.shape_cast %198 : vector<1x256xf32> to vector<256xf32>
    %200 = vector.shape_cast %199 : vector<256xf32> to vector<1x1x256xf32>
    %201 = vector.broadcast %200 : vector<1x1x256xf32> to vector<4x16x256xf32>
    %202 = arith.mulf %197, %201 : vector<4x16x256xf32>
    %203 = arith.addf %193, %202 : vector<4x16x256xf32>
    %204 = vector.extract_strided_slice %196 {offsets = [1, 0, 0], sizes = [4, 16, 256], strides = [1, 1, 1]} : vector<6x16x256xf32> to vector<4x16x256xf32>
    %205 = vector.extract_strided_slice %0 {offsets = [4, 0], sizes = [1, 256], strides = [1, 1]} : vector<9x256xf32> to vector<1x256xf32>
    %206 = vector.shape_cast %205 : vector<1x256xf32> to vector<256xf32>
    %207 = vector.shape_cast %206 : vector<256xf32> to vector<1x1x256xf32>
    %208 = vector.broadcast %207 : vector<1x1x256xf32> to vector<4x16x256xf32>
    %209 = arith.mulf %204, %208 : vector<4x16x256xf32>
    %210 = arith.addf %203, %209 : vector<4x16x256xf32>
    %211 = vector.extract_strided_slice %196 {offsets = [2, 0, 0], sizes = [4, 16, 256], strides = [1, 1, 1]} : vector<6x16x256xf32> to vector<4x16x256xf32>
    %212 = vector.extract_strided_slice %0 {offsets = [7, 0], sizes = [1, 256], strides = [1, 1]} : vector<9x256xf32> to vector<1x256xf32>
    %213 = vector.shape_cast %212 : vector<1x256xf32> to vector<256xf32>
    %214 = vector.shape_cast %213 : vector<256xf32> to vector<1x1x256xf32>
    %215 = vector.broadcast %214 : vector<1x1x256xf32> to vector<4x16x256xf32>
    %216 = arith.mulf %211, %215 : vector<4x16x256xf32>
    %217 = arith.addf %210, %216 : vector<4x16x256xf32>
    %c0_43 = arith.constant 0 : index
    %c7_44 = arith.constant 7 : index
    %c1_45 = arith.constant 1 : index
    %c0_46 = arith.constant 0 : index
    %218 = vector.load %arg1[%c0_43, %c7_44, %c1_45, %c0_46] : memref<1x16x16x256xbf16, #tpu.memory_space<vmem>>, vector<1x6x15x256xbf16>
    %219 = vector.shape_cast %218 : vector<1x6x15x256xbf16> to vector<6x15x256xbf16>
    %220 = arith.extf %219 : vector<6x15x256xbf16> to vector<6x15x256xf32>
    %cst_47 = arith.constant 0.000000e+00 : f32
    %221 = vector.broadcast %cst_47 : f32 to vector<6x1x256xf32>
    %222 = tpu.concatenate %220, %221 in 1 : vector<6x15x256xf32>, vector<6x1x256xf32> -> vector<6x16x256xf32>
    %223 = vector.extract_strided_slice %222 {offsets = [0, 0, 0], sizes = [4, 16, 256], strides = [1, 1, 1]} : vector<6x16x256xf32> to vector<4x16x256xf32>
    %224 = vector.extract_strided_slice %0 {offsets = [2, 0], sizes = [1, 256], strides = [1, 1]} : vector<9x256xf32> to vector<1x256xf32>
    %225 = vector.shape_cast %224 : vector<1x256xf32> to vector<256xf32>
    %226 = vector.shape_cast %225 : vector<256xf32> to vector<1x1x256xf32>
    %227 = vector.broadcast %226 : vector<1x1x256xf32> to vector<4x16x256xf32>
    %228 = arith.mulf %223, %227 : vector<4x16x256xf32>
    %229 = arith.addf %217, %228 : vector<4x16x256xf32>
    %230 = vector.extract_strided_slice %222 {offsets = [1, 0, 0], sizes = [4, 16, 256], strides = [1, 1, 1]} : vector<6x16x256xf32> to vector<4x16x256xf32>
    %231 = vector.extract_strided_slice %0 {offsets = [5, 0], sizes = [1, 256], strides = [1, 1]} : vector<9x256xf32> to vector<1x256xf32>
    %232 = vector.shape_cast %231 : vector<1x256xf32> to vector<256xf32>
    %233 = vector.shape_cast %232 : vector<256xf32> to vector<1x1x256xf32>
    %234 = vector.broadcast %233 : vector<1x1x256xf32> to vector<4x16x256xf32>
    %235 = arith.mulf %230, %234 : vector<4x16x256xf32>
    %236 = arith.addf %229, %235 : vector<4x16x256xf32>
    %237 = vector.extract_strided_slice %222 {offsets = [2, 0, 0], sizes = [4, 16, 256], strides = [1, 1, 1]} : vector<6x16x256xf32> to vector<4x16x256xf32>
    %238 = vector.extract_strided_slice %0 {offsets = [8, 0], sizes = [1, 256], strides = [1, 1]} : vector<9x256xf32> to vector<1x256xf32>
    %239 = vector.shape_cast %238 : vector<1x256xf32> to vector<256xf32>
    %240 = vector.shape_cast %239 : vector<256xf32> to vector<1x1x256xf32>
    %241 = vector.broadcast %240 : vector<1x1x256xf32> to vector<4x16x256xf32>
    %242 = arith.mulf %237, %241 : vector<4x16x256xf32>
    %243 = arith.addf %236, %242 : vector<4x16x256xf32>
    %244 = vector.shape_cast %243 : vector<4x16x256xf32> to vector<64x256xf32>
    %245 = arith.truncf %244 : vector<64x256xf32> to vector<64x256xbf16>
    %c128 = arith.constant 128 : index
    %c0_48 = arith.constant 0 : index
    %246 = vector.load %arg5[%c128, %c0_48] : memref<256x256xbf16, #tpu.memory_space<vmem>>, vector<64x256xbf16>
    tpu.vector_store %arg5[%c128, %c0_48], %245 {strides = array<i32>} : memref<256x256xbf16, #tpu.memory_space<vmem>>, vector<64x256xbf16>,
    %cst_49 = arith.constant 0.000000e+00 : f32
    %247 = vector.broadcast %cst_49 : f32 to vector<4x16x256xf32>
    %c0_50 = arith.constant 0 : index
    %c11 = arith.constant 11 : index
    %c0_51 = arith.constant 0 : index
    %c0_52 = arith.constant 0 : index
    %248 = vector.load %arg1[%c0_50, %c11, %c0_51, %c0_52] : memref<1x16x16x256xbf16, #tpu.memory_space<vmem>>, vector<1x5x15x256xbf16>
    %249 = vector.shape_cast %248 : vector<1x5x15x256xbf16> to vector<5x15x256xbf16>
    %250 = arith.extf %249 : vector<5x15x256xbf16> to vector<5x15x256xf32>
    %cst_53 = arith.constant 0.000000e+00 : f32
    %251 = vector.broadcast %cst_53 : f32 to vector<5x1x256xf32>
    %252 = tpu.concatenate %251, %250 in 1 : vector<5x1x256xf32>, vector<5x15x256xf32> -> vector<5x16x256xf32>
    %cst_54 = arith.constant 0.000000e+00 : f32
    %253 = vector.broadcast %cst_54 : f32 to vector<1x16x256xf32>
    %254 = tpu.concatenate %252, %253 in 0 : vector<5x16x256xf32>, vector<1x16x256xf32> -> vector<6x16x256xf32>
    %255 = vector.extract_strided_slice %254 {offsets = [0, 0, 0], sizes = [4, 16, 256], strides = [1, 1, 1]} : vector<6x16x256xf32> to vector<4x16x256xf32>
    %256 = vector.extract_strided_slice %0 {offsets = [0, 0], sizes = [1, 256], strides = [1, 1]} : vector<9x256xf32> to vector<1x256xf32>
    %257 = vector.shape_cast %256 : vector<1x256xf32> to vector<256xf32>
    %258 = vector.shape_cast %257 : vector<256xf32> to vector<1x1x256xf32>
    %259 = vector.broadcast %258 : vector<1x1x256xf32> to vector<4x16x256xf32>
    %260 = arith.mulf %255, %259 : vector<4x16x256xf32>
    %261 = arith.addf %247, %260 : vector<4x16x256xf32>
    %262 = vector.extract_strided_slice %254 {offsets = [1, 0, 0], sizes = [4, 16, 256], strides = [1, 1, 1]} : vector<6x16x256xf32> to vector<4x16x256xf32>
    %263 = vector.extract_strided_slice %0 {offsets = [3, 0], sizes = [1, 256], strides = [1, 1]} : vector<9x256xf32> to vector<1x256xf32>
    %264 = vector.shape_cast %263 : vector<1x256xf32> to vector<256xf32>
    %265 = vector.shape_cast %264 : vector<256xf32> to vector<1x1x256xf32>
    %266 = vector.broadcast %265 : vector<1x1x256xf32> to vector<4x16x256xf32>
    %267 = arith.mulf %262, %266 : vector<4x16x256xf32>
    %268 = arith.addf %261, %267 : vector<4x16x256xf32>
    %269 = vector.extract_strided_slice %254 {offsets = [2, 0, 0], sizes = [4, 16, 256], strides = [1, 1, 1]} : vector<6x16x256xf32> to vector<4x16x256xf32>
    %270 = vector.extract_strided_slice %0 {offsets = [6, 0], sizes = [1, 256], strides = [1, 1]} : vector<9x256xf32> to vector<1x256xf32>
    %271 = vector.shape_cast %270 : vector<1x256xf32> to vector<256xf32>
    %272 = vector.shape_cast %271 : vector<256xf32> to vector<1x1x256xf32>
    %273 = vector.broadcast %272 : vector<1x1x256xf32> to vector<4x16x256xf32>
    %274 = arith.mulf %269, %273 : vector<4x16x256xf32>
    %275 = arith.addf %268, %274 : vector<4x16x256xf32>
    %c0_55 = arith.constant 0 : index
    %c11_56 = arith.constant 11 : index
    %c0_57 = arith.constant 0 : index
    %c0_58 = arith.constant 0 : index
    %276 = vector.load %arg1[%c0_55, %c11_56, %c0_57, %c0_58] : memref<1x16x16x256xbf16, #tpu.memory_space<vmem>>, vector<1x5x16x256xbf16>
    %277 = vector.shape_cast %276 : vector<1x5x16x256xbf16> to vector<5x16x256xbf16>
    %278 = arith.extf %277 : vector<5x16x256xbf16> to vector<5x16x256xf32>
    %cst_59 = arith.constant 0.000000e+00 : f32
    %279 = vector.broadcast %cst_59 : f32 to vector<1x16x256xf32>
    %280 = tpu.concatenate %278, %279 in 0 : vector<5x16x256xf32>, vector<1x16x256xf32> -> vector<6x16x256xf32>
    %281 = vector.extract_strided_slice %280 {offsets = [0, 0, 0], sizes = [4, 16, 256], strides = [1, 1, 1]} : vector<6x16x256xf32> to vector<4x16x256xf32>
    %282 = vector.extract_strided_slice %0 {offsets = [1, 0], sizes = [1, 256], strides = [1, 1]} : vector<9x256xf32> to vector<1x256xf32>
    %283 = vector.shape_cast %282 : vector<1x256xf32> to vector<256xf32>
    %284 = vector.shape_cast %283 : vector<256xf32> to vector<1x1x256xf32>
    %285 = vector.broadcast %284 : vector<1x1x256xf32> to vector<4x16x256xf32>
    %286 = arith.mulf %281, %285 : vector<4x16x256xf32>
    %287 = arith.addf %275, %286 : vector<4x16x256xf32>
    %288 = vector.extract_strided_slice %280 {offsets = [1, 0, 0], sizes = [4, 16, 256], strides = [1, 1, 1]} : vector<6x16x256xf32> to vector<4x16x256xf32>
    %289 = vector.extract_strided_slice %0 {offsets = [4, 0], sizes = [1, 256], strides = [1, 1]} : vector<9x256xf32> to vector<1x256xf32>
    %290 = vector.shape_cast %289 : vector<1x256xf32> to vector<256xf32>
    %291 = vector.shape_cast %290 : vector<256xf32> to vector<1x1x256xf32>
    %292 = vector.broadcast %291 : vector<1x1x256xf32> to vector<4x16x256xf32>
    %293 = arith.mulf %288, %292 : vector<4x16x256xf32>
    %294 = arith.addf %287, %293 : vector<4x16x256xf32>
    %295 = vector.extract_strided_slice %280 {offsets = [2, 0, 0], sizes = [4, 16, 256], strides = [1, 1, 1]} : vector<6x16x256xf32> to vector<4x16x256xf32>
    %296 = vector.extract_strided_slice %0 {offsets = [7, 0], sizes = [1, 256], strides = [1, 1]} : vector<9x256xf32> to vector<1x256xf32>
    %297 = vector.shape_cast %296 : vector<1x256xf32> to vector<256xf32>
    %298 = vector.shape_cast %297 : vector<256xf32> to vector<1x1x256xf32>
    %299 = vector.broadcast %298 : vector<1x1x256xf32> to vector<4x16x256xf32>
    %300 = arith.mulf %295, %299 : vector<4x16x256xf32>
    %301 = arith.addf %294, %300 : vector<4x16x256xf32>
    %c0_60 = arith.constant 0 : index
    %c11_61 = arith.constant 11 : index
    %c1_62 = arith.constant 1 : index
    %c0_63 = arith.constant 0 : index
    %302 = vector.load %arg1[%c0_60, %c11_61, %c1_62, %c0_63] : memref<1x16x16x256xbf16, #tpu.memory_space<vmem>>, vector<1x5x15x256xbf16>
    %303 = vector.shape_cast %302 : vector<1x5x15x256xbf16> to vector<5x15x256xbf16>
    %304 = arith.extf %303 : vector<5x15x256xbf16> to vector<5x15x256xf32>
    %cst_64 = arith.constant 0.000000e+00 : f32
    %305 = vector.broadcast %cst_64 : f32 to vector<5x1x256xf32>
    %306 = tpu.concatenate %304, %305 in 1 : vector<5x15x256xf32>, vector<5x1x256xf32> -> vector<5x16x256xf32>
    %cst_65 = arith.constant 0.000000e+00 : f32
    %307 = vector.broadcast %cst_65 : f32 to vector<1x16x256xf32>
    %308 = tpu.concatenate %306, %307 in 0 : vector<5x16x256xf32>, vector<1x16x256xf32> -> vector<6x16x256xf32>
    %309 = vector.extract_strided_slice %308 {offsets = [0, 0, 0], sizes = [4, 16, 256], strides = [1, 1, 1]} : vector<6x16x256xf32> to vector<4x16x256xf32>
    %310 = vector.extract_strided_slice %0 {offsets = [2, 0], sizes = [1, 256], strides = [1, 1]} : vector<9x256xf32> to vector<1x256xf32>
    %311 = vector.shape_cast %310 : vector<1x256xf32> to vector<256xf32>
    %312 = vector.shape_cast %311 : vector<256xf32> to vector<1x1x256xf32>
    %313 = vector.broadcast %312 : vector<1x1x256xf32> to vector<4x16x256xf32>
    %314 = arith.mulf %309, %313 : vector<4x16x256xf32>
    %315 = arith.addf %301, %314 : vector<4x16x256xf32>
    %316 = vector.extract_strided_slice %308 {offsets = [1, 0, 0], sizes = [4, 16, 256], strides = [1, 1, 1]} : vector<6x16x256xf32> to vector<4x16x256xf32>
    %317 = vector.extract_strided_slice %0 {offsets = [5, 0], sizes = [1, 256], strides = [1, 1]} : vector<9x256xf32> to vector<1x256xf32>
    %318 = vector.shape_cast %317 : vector<1x256xf32> to vector<256xf32>
    %319 = vector.shape_cast %318 : vector<256xf32> to vector<1x1x256xf32>
    %320 = vector.broadcast %319 : vector<1x1x256xf32> to vector<4x16x256xf32>
    %321 = arith.mulf %316, %320 : vector<4x16x256xf32>
    %322 = arith.addf %315, %321 : vector<4x16x256xf32>
    %323 = vector.extract_strided_slice %308 {offsets = [2, 0, 0], sizes = [4, 16, 256], strides = [1, 1, 1]} : vector<6x16x256xf32> to vector<4x16x256xf32>
    %324 = vector.extract_strided_slice %0 {offsets = [8, 0], sizes = [1, 256], strides = [1, 1]} : vector<9x256xf32> to vector<1x256xf32>
    %325 = vector.shape_cast %324 : vector<1x256xf32> to vector<256xf32>
    %326 = vector.shape_cast %325 : vector<256xf32> to vector<1x1x256xf32>
    %327 = vector.broadcast %326 : vector<1x1x256xf32> to vector<4x16x256xf32>
    %328 = arith.mulf %323, %327 : vector<4x16x256xf32>
    %329 = arith.addf %322, %328 : vector<4x16x256xf32>
    %330 = vector.shape_cast %329 : vector<4x16x256xf32> to vector<64x256xf32>
    %331 = arith.truncf %330 : vector<64x256xf32> to vector<64x256xbf16>
    %c192 = arith.constant 192 : index
    %c0_66 = arith.constant 0 : index
    %332 = vector.load %arg5[%c192, %c0_66] : memref<256x256xbf16, #tpu.memory_space<vmem>>, vector<64x256xbf16>
    tpu.vector_store %arg5[%c192, %c0_66], %331 {strides = array<i32>} : memref<256x256xbf16, #tpu.memory_space<vmem>>, vector<64x256xbf16>,
    %c0_67 = arith.constant 0 : index
    %c0_68 = arith.constant 0 : index
    %333 = vector.load %arg5[%c0_67, %c0_68] : memref<256x256xbf16, #tpu.memory_space<vmem>>, vector<256x256xbf16>
    %c0_69 = arith.constant 0 : index
    %c0_70 = arith.constant 0 : index
    %334 = vector.load %arg3[%c0_69, %c0_70] : memref<256x128xbf16, #tpu.memory_space<vmem>>, vector<256x128xbf16>
    %cst_71 = arith.constant dense<0.000000e+00> : vector<256x128xf32>
    %335 = tpu.matmul %333, %334, %cst_71 {dimension_numbers = #tpu.dot_dimension_numbers<[1], [0], [0], [1], [0, 0, 1, 1], [], []>} : vector<256x256xbf16>, vector<256x128xbf16>, vector<256x128xf32> -> vector<256x128xf32>
    %336 = vector.shape_cast %335 : vector<256x128xf32> to vector<16x16x128xf32>
    %c0_72 = arith.constant 0 : index
    %c0_73 = arith.constant 0 : index
    %c0_74 = arith.constant 0 : index
    %c0_75 = arith.constant 0 : index
    %337 = vector.load %arg4[%c0_72, %c0_73, %c0_74, %c0_75] : memref<1x16x16x128xf32, #tpu.memory_space<vmem>>, vector<1x16x16x128xf32>
    %338 = vector.shape_cast %337 : vector<1x16x16x128xf32> to vector<16x16x128xf32>
    %339 = vector.shape_cast %336 : vector<16x16x128xf32> to vector<1x16x16x128xf32>
    tpu.vector_store %arg4[%c0_72, %c0_73, %c0_74, %c0_75], %339 {strides = array<i32>} : memref<1x16x16x128xf32, #tpu.memory_space<vmem>>, vector<1x16x16x128xf32>,
    return
  }
  func.func @transform_0(%arg0: i32) -> (i32, i32, i32, i32) {
    %c0_i32 = arith.constant 0 : i32
    %c0_i32_0 = arith.constant 0 : i32
    %c0_i32_1 = arith.constant 0 : i32
    %c0_i32_2 = arith.constant 0 : i32
    return %arg0, %c0_i32, %c0_i32_0, %c0_i32_1 : i32, i32, i32, i32
  }
  func.func @transform_1(%arg0: i32) -> (i32, i32) {
    %c0_i32 = arith.constant 0 : i32
    %c0_i32_0 = arith.constant 0 : i32
    %c0_i32_1 = arith.constant 0 : i32
    return %c0_i32, %c0_i32_0 : i32, i32
  }
  func.func @transform_2(%arg0: i32) -> (i32, i32) {
    %c0_i32 = arith.constant 0 : i32
    %c0_i32_0 = arith.constant 0 : i32
    %c0_i32_1 = arith.constant 0 : i32
    return %c0_i32, %c0_i32_0 : i32, i32
  }
  func.func @transform_3(%arg0: i32) -> (i32, i32, i32, i32) {
    %c0_i32 = arith.constant 0 : i32
    %c0_i32_0 = arith.constant 0 : i32
    %c0_i32_1 = arith.constant 0 : i32
    %c0_i32_2 = arith.constant 0 : i32
    return %arg0, %c0_i32, %c0_i32_0, %c0_i32_1 : i32, i32, i32, i32
  }
}

</mosaic_0001>

<llo_original>
// kernel: tpu_custom_call.1
$region0: #{tpu_custom_call.1}
  #allocation0 [shape = 'u32[]', space=smem, size = 0x4, offset = 0x4, fixed_abs, tag = 'smem constant byte address 0x4 - core index']
  #allocation1 [shape = 'u32[144,128]{1,0:T(1,128)}', space=vmem, size = 0x12000, scoped, tag = 'internal scratch']
  #allocation2 [shape = 'bf16[256,256]{1,0:T(8,128)(2,1)}', space=vmem, size = 0x20000, scoped, tag = 'scratch operand']
  %s0 = inlined_call_operand.hbm [shape: bf16[2,16,16,256], index: 0, kind: input, shape index: {}]
  %s1 = inlined_call_operand.hbm [shape: f32[9,256], index: 1, kind: input, shape index: {}]
  %s2 = inlined_call_operand.hbm [shape: bf16[256,128], index: 2, kind: input, shape index: {}]
  %s3 = inlined_call_operand.hbm [shape: f32[2,16,16,128], index: 3, kind: output, shape index: {}]
  %s4 = sld [smem:[#allocation0]]
  $region57: #{tpu_custom_call.1} parent=0
    _
  %s6 = ssub.s32 1, %s4
  %s7 = scalar_select 0, %s6, %s4
  $region1: #{tpu_custom_call.1} parent=0
    #allocation3 [shape = 'u8[262144]{0}', space=vmem, size = 0x40000, scoped, tag = 'input window, operand 0']
    #allocation4 [shape = 's32[2]{0}', space=sflag, size = 0x8, scoped, tag = 'scoped memory for tpu_custom_call.1']
    #allocation5 [shape = 's32[2]{0}', space=sflag, size = 0x8, scoped, tag = 'scoped memory for tpu_custom_call.1']
    #allocation6 [shape = 'u8[16384]{0}', space=vmem, size = 0x4000, scoped, tag = 'input window, operand 1, single buffered']
    #allocation7 [shape = 's32[1]{0}', space=sflag, size = 0x4, scoped, tag = 'scoped memory for tpu_custom_call.1']
    #allocation8 [shape = 'u8[65536]{0}', space=vmem, size = 0x10000, scoped, tag = 'input window, operand 2, single buffered']
    #allocation9 [shape = 'u8[262144]{0}', space=vmem, size = 0x40000, scoped, tag = 'output window, operand 0']
    %8 = vsyncpa [#allocation4], 0
    %s9 = scalar_lea.sflag [#allocation4], 1
    %10 = vsyncpa %s9, 0
    %11 = vsyncpa [#allocation7], 0
    %12 = vsyncpa [#allocation5], 0
    %s13 = scalar_lea.sflag [#allocation5], 1
    %14 = vsyncpa %s13, 0
    loop: start=0, step=1, limit=4
    $region2: #{tpu_custom_call.1} parent=1 // loop_pre_header
      _
    $region3: #{tpu_custom_call.1} parent=1 // loop_header
      %s16 = sphi 0, %s20
      %p17 = scmp.ge.s32.totalorder %s16, 4
      %s26 = sphi 0, %s28
      %s29 = sphi 0, %s26
      %s30 = sphi 0, %s29
      %s46 = sphi 0, %s30
      %s50 = sphi 0, %s50
      %s52 = sphi 0, %s50
      %s53 = sphi 0, %s52
      %s67 = sphi 0, %s53
      %s71 = sphi 0, %s71
      %s73 = sphi 0, %s71
      %s74 = sphi 0, %s73
      %s88 = sphi 0, %s74
      %s94 = sphi 0, %s96
      %s97 = sphi 0, %s94
      %s98 = sphi 0, %s97
      %s114 = sphi 0, %s98
    $region4: #{tpu_custom_call.1} parent=1 // loop_header_branch
      %19 = sbr.rel (%p17) target = $region8
    $region5: #{tpu_custom_call.1} parent=1 // loop_body
      %s21 = ssub.s32 %s16, 1
      %s22 = ssub.s32 %s16, 2
      %s23 = sadd.s32 %s16, 1
      %s24 = ssub.s32 %s16, %s23
      %p25 = scmp.eq.s32.totalorder %s24, 0
      %s27 = sadd.s32 %s26, 1
      %s28 = scalar_select %p25, %s26, %s27
      %p31 = pneg %p25
      %p32 = scmp.eq.s32.totalorder %s16, 1
      %p33 = por %p31, %p32
      %p34 = scmp.ne.s32.totalorder %s26, %s29
      %p35 = scmp.eq.s32.totalorder %s16, 0
      %p36 = por %p34, %p35
      %p37 = scmp.ne.s32.totalorder %s26, %s29
      %p38 = scmp.eq.s32.totalorder %s21, 1
      %p39 = por %p37, %p38
      %p40 = scmp.ne.s32.totalorder %s29, %s30
      %p41 = scmp.eq.s32.totalorder %s21, 0
      %p42 = por %p40, %p41
      %p43 = scmp.ne.s32.totalorder %s29, %s30
      %p44 = scmp.eq.s32.totalorder %s22, 1
      %p45 = por %p43, %p44
      %p47 = scmp.ne.s32.totalorder %s30, %s46
      %p48 = scmp.eq.s32.totalorder %s22, 0
      %p49 = por %p47, %p48
      %s51 = sadd.s32 %s50, 1
      %p54 = scmp.eq.s32.totalorder %s16, 1
      %p55 = scmp.ne.s32.totalorder %s50, %s52
      %p56 = scmp.eq.s32.totalorder %s16, 0
      %p57 = por %p55, %p56
      %p58 = scmp.ne.s32.totalorder %s50, %s52
      %p59 = scmp.eq.s32.totalorder %s21, 1
      %p60 = por %p58, %p59
      %p61 = scmp.ne.s32.totalorder %s52, %s53
      %p62 = scmp.eq.s32.totalorder %s21, 0
      %p63 = por %p61, %p62
      %p64 = scmp.ne.s32.totalorder %s52, %s53
      %p65 = scmp.eq.s32.totalorder %s22, 1
      %p66 = por %p64, %p65
      %p68 = scmp.ne.s32.totalorder %s53, %s67
      %p69 = scmp.eq.s32.totalorder %s22, 0
      %p70 = por %p68, %p69
      %s72 = sadd.s32 %s71, 1
      %p75 = scmp.eq.s32.totalorder %s16, 1
      %p76 = scmp.ne.s32.totalorder %s71, %s73
      %p77 = scmp.eq.s32.totalorder %s16, 0
      %p78 = por %p76, %p77
      %p79 = scmp.ne.s32.totalorder %s71, %s73
      %p80 = scmp.eq.s32.totalorder %s21, 1
      %p81 = por %p79, %p80
      %p82 = scmp.ne.s32.totalorder %s73, %s74
      %p83 = scmp.eq.s32.totalorder %s21, 0
      %p84 = por %p82, %p83
      %p85 = scmp.ne.s32.totalorder %s73, %s74
      %p86 = scmp.eq.s32.totalorder %s22, 1
      %p87 = por %p85, %p86
      %p89 = scmp.ne.s32.totalorder %s74, %s88
      %p90 = scmp.eq.s32.totalorder %s22, 0
      %p91 = por %p89, %p90
      %s92 = ssub.s32 %s16, %s23
      %p93 = scmp.eq.s32.totalorder %s92, 0
      %s95 = sadd.s32 %s94, 1
      %s96 = scalar_select %p93, %s94, %s95
      %p99 = pneg %p93
      %p100 = scmp.eq.s32.totalorder %s16, 1
      %p101 = por %p99, %p100
      %p102 = scmp.ne.s32.totalorder %s94, %s97
      %p103 = scmp.eq.s32.totalorder %s16, 0
      %p104 = por %p102, %p103
      %p105 = scmp.ne.s32.totalorder %s94, %s97
      %p106 = scmp.eq.s32.totalorder %s21, 1
      %p107 = por %p105, %p106
      %p108 = scmp.ne.s32.totalorder %s97, %s98
      %p109 = scmp.eq.s32.totalorder %s21, 0
      %p110 = por %p108, %p109
      %p111 = scmp.ne.s32.totalorder %s97, %s98
      %p112 = scmp.eq.s32.totalorder %s22, 1
      %p113 = por %p111, %p112
      %p115 = scmp.ne.s32.totalorder %s98, %s114
      %p116 = scmp.eq.s32.totalorder %s22, 0
      %p117 = por %p115, %p116
      %p118 = scmp.le.s32.totalorder 1, %s16
      %p119 = scmp.lt.s32.totalorder %s16, 3
      %p120 = pnand %p118, %p119
      %p121 = pneg %p120
      // Predicated region
      $region9: #{tpu_custom_call.1} parent=5 // pred_check
        _
      $region10: #{tpu_custom_call.1} parent=5 // pred_check_branch
        %123 = sbr.rel (%p120) target = $region12
      $region11: #{tpu_custom_call.1} parent=5 // pred_region
        %s124 = ssub.s32 %s16, 1
        // Predicated region
        $region13: #{tpu_custom_call.1} parent=11 // pred_check
          %p125 = pneg %p63
        $region14: #{tpu_custom_call.1} parent=11 // pred_check_branch
          %127 = sbr.rel (%p125) target = $region16
        $region15: #{tpu_custom_call.1} parent=11 // pred_region
          %s129 = ssub.s32 512, 512
          %130 = vsyncadd [#allocation7], %s129
          %s131 = sshll.u32 [#allocation6], 4
          %s132 = int_to_ptr.vmem [resolvable:$true] %s131
          %137 = dma.hbm_to_vmem [thread:$0]  %s1, 512, %s132, [#allocation7], 256, 256, 16
        $region16: #{tpu_custom_call.1} parent=11 // pred_fallthru
          _
        // Predicated region
        $region17: #{tpu_custom_call.1} parent=11 // pred_check
          %p138 = pneg %p84
        $region18: #{tpu_custom_call.1} parent=11 // pred_check_branch
          %140 = sbr.rel (%p138) target = $region20
        $region19: #{tpu_custom_call.1} parent=11 // pred_region
          %s142 = ssub.s32 2048, 2048
          %143 = vsyncadd [#allocation7], %s142
          %s144 = sshll.u32 [#allocation8], 4
          %s145 = int_to_ptr.vmem [resolvable:$true] %s144
          %150 = dma.hbm_to_vmem [thread:$0]  %s2, 2048, %s145, [#allocation7], 64, 64, 4
        $region20: #{tpu_custom_call.1} parent=11 // pred_fallthru
          _
      $region12: #{tpu_custom_call.1} parent=5 // pred_fallthru
        _
      %p151 = scmp.lt.s32.totalorder %s16, 2
      // Predicated region
      $region21: #{tpu_custom_call.1} parent=5 // pred_check
        %p152 = pneg %p151
      $region22: #{tpu_custom_call.1} parent=5 // pred_check_branch
        %154 = sbr.rel (%p152) target = $region24
      $region23: #{tpu_custom_call.1} parent=5 // pred_region
        // Predicated region
        $region25: #{tpu_custom_call.1} parent=23 // pred_check
          %p155 = pneg %p36
        $region26: #{tpu_custom_call.1} parent=23 // pred_check_branch
          %157 = sbr.rel (%p155) target = $region28
        $region27: #{tpu_custom_call.1} parent=23 // pred_region
          %s158 = sand.u32 %s26, 1
          %s159 = scalar_lea.sflag [#allocation4], %s158
          %s160 = sand.u32 %s26, 1
          %s161 = smul.addr %s160, 256
          %s162 = scalar_lea.vmem [#allocation3], %s161
          %s164 = ssub.s32 4096, 4096
          %165 = vsyncadd %s159, %s164
          %s166 = smul.addr %s16, 64
          %s167 = smul.addr %s166, 64
          %s168 = scalar_lea.hbm %s0, %s167
          %s169 = sshll.u32 %s162, 4
          %s170 = int_to_ptr.vmem [resolvable:$true] %s169
          %175 = dma.hbm_to_vmem [thread:$0]  %s168, 4096, %s170, %s159, 128, 128, 8
        $region28: #{tpu_custom_call.1} parent=23 // pred_fallthru
          _
      $region24: #{tpu_custom_call.1} parent=5 // pred_fallthru
        _
      %p176 = scmp.le.s32.totalorder 1, %s16
      %p177 = scmp.lt.s32.totalorder %s16, 3
      %p178 = pnand %p176, %p177
      %p179 = pneg %p178
      // Predicated region
      $region29: #{tpu_custom_call.1} parent=5 // pred_check
        _
      $region30: #{tpu_custom_call.1} parent=5 // pred_check_branch
        %181 = sbr.rel (%p178) target = $region32
      $region31: #{tpu_custom_call.1} parent=5 // pred_region
        %s182 = ssub.s32 %s16, 1
        %s183 = sand.u32 %s29, 1
        %s184 = scalar_lea.sflag [#allocation4], %s183
        %s185 = sand.u32 %s29, 1
        %s186 = smul.addr %s185, 256
        %s187 = scalar_lea.vmem [#allocation3], %s186
        // Predicated region
        $region33: #{tpu_custom_call.1} parent=31 // pred_check
          %p188 = pneg %p42
        $region34: #{tpu_custom_call.1} parent=31 // pred_check_branch
          %190 = sbr.rel (%p188) target = $region36
        $region35: #{tpu_custom_call.1} parent=31 // pred_region
          %191 = dma.done %s184, 4096
        $region36: #{tpu_custom_call.1} parent=31 // pred_fallthru
          _
        // Predicated region
        $region37: #{tpu_custom_call.1} parent=31 // pred_check
          %p192 = pneg %p63
        $region38: #{tpu_custom_call.1} parent=31 // pred_check_branch
          %194 = sbr.rel (%p192) target = $region40
        $region39: #{tpu_custom_call.1} parent=31 // pred_region
          %195 = dma.done [#allocation7], 512
        $region40: #{tpu_custom_call.1} parent=31 // pred_fallthru
          _
        // Predicated region
        $region41: #{tpu_custom_call.1} parent=31 // pred_check
          %p196 = pneg %p84
        $region42: #{tpu_custom_call.1} parent=31 // pred_check_branch
          %198 = sbr.rel (%p196) target = $region44
        $region43: #{tpu_custom_call.1} parent=31 // pred_region
          %199 = dma.done [#allocation7], 2048
        $region44: #{tpu_custom_call.1} parent=31 // pred_fallthru
          _
        %s200 = sand.u32 %s29, 1
        %s201 = scalar_lea.sflag [#allocation4], %s200
        %s202 = sand.u32 %s29, 1
        %s203 = smul.addr %s202, 256
        %s204 = scalar_lea.vmem [#allocation3], %s203
        %p205 = pneg %p42
        %p206 = pneg %p39
        %p207 = pneg %p63
        %p208 = pneg %p60
        %p209 = pneg %p84
        %p210 = pneg %p81
        %p211 = pneg %p110
        %p212 = pneg %p107
        %s213 = sand.u32 %s97, 1
        %s214 = scalar_lea.sflag [#allocation5], %s213
        %s215 = sand.u32 %s97, 1
        %s216 = smul.addr %s215, 256
        %s217 = scalar_lea.vmem [#allocation9], %s216
        %v219 = vld [vmem:[#allocation6] sm:$0xff]
        %v220 = vld [vmem:[#allocation6 + $0x8] sm:$0xff]
        %v221 = vld [vmem:[#allocation6 + $0x10] sm:$0x1]
        %v222 = vld [vmem:[#allocation6 + $0x18] sm:$0x1]
        %v223 = vld [vmem:[%s187] sm:$0xff]
        %v224 = vld [vmem:[%s187 + $0x8] sm:$0xff]
        %v225 = vld [vmem:[%s187 + $0x10] sm:$0xff]
        %v226 = vld [vmem:[%s187 + $0x18] sm:$0xff]
        %v227 = vld [vmem:[%s187 + $0x20] sm:$0xff]
        %v228 = vld [vmem:[%s187 + $0x28] sm:$0xff]
        %v229 = vld [vmem:[%s187 + $0x30] sm:$0xff]
        %v230 = vld [vmem:[%s187 + $0x38] sm:$0xff]
        %v231 = vld [vmem:[%s187 + $0x40] sm:$0xff]
        %v232 = vld [vmem:[%s187 + $0x48] sm:$0xff]
        %v233 = vunpack.c.l.bf16 %v223
        %v234 = vunpack.c.h.bf16 %v223
        %v235 = vunpack.c.l.bf16 %v224
        %v236 = vunpack.c.h.bf16 %v224
        %v237 = vunpack.c.l.bf16 %v225
        %v238 = vunpack.c.h.bf16 %v225
        %v239 = vunpack.c.l.bf16 %v226
        %v240 = vunpack.c.h.bf16 %v226
        %v241 = vunpack.c.l.bf16 %v227
        %v242 = vunpack.c.h.bf16 %v227
        %v243 = vunpack.c.l.bf16 %v228
        %v244 = vunpack.c.h.bf16 %v228
        %v245 = vunpack.c.l.bf16 %v229
        %v246 = vunpack.c.h.bf16 %v229
        %v247 = vunpack.c.l.bf16 %v230
        %v248 = vunpack.c.h.bf16 %v230
        %v249 = vunpack.c.l.bf16 %v231
        %v250 = vunpack.c.h.bf16 %v231
        %v251 = vunpack.c.l.bf16 %v232
        %v252 = vunpack.c.h.bf16 %v232
        %vm273 = vcmask 1040384
        %v274 = vrot.slane %v233, 7
        %v275 = vrot.slane %v234, 7
        %v276 = vrot.slane %v235, 7
        %v277 = vsel %vm273, %v274, %v276
        %v278 = vrot.slane %v236, 7
        %v279 = vsel %vm273, %v275, %v278
        %v280 = vrot.slane %v237, 7
        %v281 = vrot.slane %v238, 7
        %v282 = vrot.slane %v239, 7
        %v283 = vsel %vm273, %v280, %v282
        %v284 = vrot.slane %v240, 7
        %v285 = vsel %vm273, %v281, %v284
        %v286 = vrot.slane %v241, 7
        %v287 = vrot.slane %v242, 7
        %v288 = vrot.slane %v243, 7
        %v289 = vsel %vm273, %v286, %v288
        %v290 = vrot.slane %v244, 7
        %v291 = vsel %vm273, %v287, %v290
        %v292 = vrot.slane %v245, 7
        %v293 = vrot.slane %v246, 7
        %v294 = vrot.slane %v247, 7
        %v295 = vsel %vm273, %v292, %v294
        %v296 = vrot.slane %v248, 7
        %v297 = vsel %vm273, %v293, %v296
        %v298 = vrot.slane %v249, 7
        %v299 = vrot.slane %v250, 7
        %v300 = vrot.slane %v251, 7
        %v301 = vsel %vm273, %v298, %v300
        %v302 = vrot.slane %v252, 7
        %v303 = vsel %vm273, %v299, %v302
        %v324 = vsel %vm273, 0.0, %v274
        %v325 = vsel %vm273, 0.0, %v275
        %v326 = vsel %vm273, 0.0, %v280
        %v327 = vsel %vm273, 0.0, %v281
        %v328 = vsel %vm273, 0.0, %v286
        %v329 = vsel %vm273, 0.0, %v287
        %v330 = vsel %vm273, 0.0, %v292
        %v331 = vsel %vm273, 0.0, %v293
        %v332 = vsel %vm273, 0.0, %v298
        %v333 = vsel %vm273, 0.0, %v299
        %v334 = vlaneseq
        %v335 = vshrl.u32 %v334, 7
        %v336 = vsub.s32 0, %v335
        %v337 = vrot.slane %v219, %v336
        %v338 = vlaneseq
        %v339 = vshrl.u32 %v338, 7
        %v340 = vsub.s32 0, %v339
        %v341 = vrot.slane %v220, %v340
        %v342 = vmul.f32 %v337, 0.0
        %v343 = vmul.f32 %v341, 0.0
        %v344 = vmul.f32 %v324, %v337
        %v345 = vmul.f32 %v325, %v341
        %v346 = vmul.f32 %v277, %v337
        %v347 = vmul.f32 %v279, %v341
        %v348 = vmul.f32 %v326, %v337
        %v349 = vmul.f32 %v327, %v341
        %v350 = vmul.f32 %v283, %v337
        %v351 = vmul.f32 %v285, %v341
        %v352 = vmul.f32 %v328, %v337
        %v353 = vmul.f32 %v329, %v341
        %v354 = vmul.f32 %v289, %v337
        %v355 = vmul.f32 %v291, %v341
        %v356 = vadd.f32 %v342, 0.0
        %v357 = vadd.f32 %v343, 0.0
        %v358 = vadd.f32 %v344, 0.0
        %v359 = vadd.f32 %v345, 0.0
        %v360 = vadd.f32 %v346, 0.0
        %v361 = vadd.f32 %v347, 0.0
        %v362 = vadd.f32 %v348, 0.0
        %v363 = vadd.f32 %v349, 0.0
        %v364 = vadd.f32 %v350, 0.0
        %v365 = vadd.f32 %v351, 0.0
        %v366 = vadd.f32 %v352, 0.0
        %v367 = vadd.f32 %v353, 0.0
        %v368 = vadd.f32 %v354, 0.0
        %v369 = vadd.f32 %v355, 0.0
        %v370 = vlaneseq
        %v371 = vshrl.u32 %v370, 7
        %v372 = vsub.s32 3, %v371
        %v373 = vrot.slane %v219, %v372
        %v374 = vlaneseq
        %v375 = vshrl.u32 %v374, 7
        %v376 = vsub.s32 3, %v375
        %v377 = vrot.slane %v220, %v376
        %v378 = vmul.f32 %v324, %v373
        %v379 = vmul.f32 %v325, %v377
        %v380 = vmul.f32 %v277, %v373
        %v381 = vmul.f32 %v279, %v377
        %v382 = vmul.f32 %v326, %v373
        %v383 = vmul.f32 %v327, %v377
        %v384 = vmul.f32 %v283, %v373
        %v385 = vmul.f32 %v285, %v377
        %v386 = vmul.f32 %v328, %v373
        %v387 = vmul.f32 %v329, %v377
        %v388 = vmul.f32 %v289, %v373
        %v389 = vmul.f32 %v291, %v377
        %v390 = vmul.f32 %v330, %v373
        %v391 = vmul.f32 %v331, %v377
        %v392 = vmul.f32 %v295, %v373
        %v393 = vmul.f32 %v297, %v377
        %v394 = vadd.f32 %v356, %v378
        %v395 = vadd.f32 %v357, %v379
        %v396 = vadd.f32 %v356, %v380
        %v397 = vadd.f32 %v357, %v381
        %v398 = vadd.f32 %v358, %v382
        %v399 = vadd.f32 %v359, %v383
        %v400 = vadd.f32 %v360, %v384
        %v401 = vadd.f32 %v361, %v385
        %v402 = vadd.f32 %v362, %v386
        %v403 = vadd.f32 %v363, %v387
        %v404 = vadd.f32 %v364, %v388
        %v405 = vadd.f32 %v365, %v389
        %v406 = vadd.f32 %v366, %v390
        %v407 = vadd.f32 %v367, %v391
        %v408 = vadd.f32 %v368, %v392
        %v409 = vadd.f32 %v369, %v393
        %v410 = vlaneseq
        %v411 = vshrl.u32 %v410, 7
        %v412 = vsub.s32 6, %v411
        %v413 = vrot.slane %v219, %v412
        %v414 = vlaneseq
        %v415 = vshrl.u32 %v414, 7
        %v416 = vsub.s32 6, %v415
        %v417 = vrot.slane %v220, %v416
        %v418 = vmul.f32 %v326, %v413
        %v419 = vmul.f32 %v327, %v417
        %v420 = vmul.f32 %v283, %v413
        %v421 = vmul.f32 %v285, %v417
        %v422 = vmul.f32 %v328, %v413
        %v423 = vmul.f32 %v329, %v417
        %v424 = vmul.f32 %v289, %v413
        %v425 = vmul.f32 %v291, %v417
        %v426 = vmul.f32 %v330, %v413
        %v427 = vmul.f32 %v331, %v417
        %v428 = vmul.f32 %v295, %v413
        %v429 = vmul.f32 %v297, %v417
        %v430 = vmul.f32 %v332, %v413
        %v431 = vmul.f32 %v333, %v417
        %v432 = vmul.f32 %v301, %v413
        %v433 = vmul.f32 %v303, %v417
        %v434 = vadd.f32 %v394, %v418
        %v435 = vadd.f32 %v395, %v419
        %v436 = vadd.f32 %v396, %v420
        %v437 = vadd.f32 %v397, %v421
        %v438 = vadd.f32 %v398, %v422
        %v439 = vadd.f32 %v399, %v423
        %v440 = vadd.f32 %v400, %v424
        %v441 = vadd.f32 %v401, %v425
        %v442 = vadd.f32 %v402, %v426
        %v443 = vadd.f32 %v403, %v427
        %v444 = vadd.f32 %v404, %v428
        %v445 = vadd.f32 %v405, %v429
        %v446 = vadd.f32 %v406, %v430
        %v447 = vadd.f32 %v407, %v431
        %v448 = vadd.f32 %v408, %v432
        %v449 = vadd.f32 %v409, %v433
        %v450 = vlaneseq
        %v451 = vshrl.u32 %v450, 7
        %v452 = vsub.s32 1, %v451
        %v453 = vrot.slane %v219, %v452
        %v454 = vlaneseq
        %v455 = vshrl.u32 %v454, 7
        %v456 = vsub.s32 1, %v455
        %v457 = vrot.slane %v220, %v456
        %v458 = vmul.f32 %v453, 0.0
        %v459 = vmul.f32 %v457, 0.0
        %v460 = vmul.f32 %v233, %v453
        %v461 = vmul.f32 %v234, %v457
        %v462 = vmul.f32 %v235, %v453
        %v463 = vmul.f32 %v236, %v457
        %v464 = vmul.f32 %v237, %v453
        %v465 = vmul.f32 %v238, %v457
        %v466 = vmul.f32 %v239, %v453
        %v467 = vmul.f32 %v240, %v457
        %v468 = vmul.f32 %v241, %v453
        %v469 = vmul.f32 %v242, %v457
        %v470 = vmul.f32 %v243, %v453
        %v471 = vmul.f32 %v244, %v457
        %v472 = vadd.f32 %v434, %v458
        %v473 = vadd.f32 %v435, %v459
        %v474 = vadd.f32 %v436, %v458
        %v475 = vadd.f32 %v437, %v459
        %v476 = vadd.f32 %v438, %v460
        %v477 = vadd.f32 %v439, %v461
        %v478 = vadd.f32 %v440, %v462
        %v479 = vadd.f32 %v441, %v463
        %v480 = vadd.f32 %v442, %v464
        %v481 = vadd.f32 %v443, %v465
        %v482 = vadd.f32 %v444, %v466
        %v483 = vadd.f32 %v445, %v467
        %v484 = vadd.f32 %v446, %v468
        %v485 = vadd.f32 %v447, %v469
        %v486 = vadd.f32 %v448, %v470
        %v487 = vadd.f32 %v449, %v471
        %v488 = vlaneseq
        %v489 = vshrl.u32 %v488, 7
        %v490 = vsub.s32 4, %v489
        %v491 = vrot.slane %v219, %v490
        %v492 = vlaneseq
        %v493 = vshrl.u32 %v492, 7
        %v494 = vsub.s32 4, %v493
        %v495 = vrot.slane %v220, %v494
        %v496 = vmul.f32 %v233, %v491
        %v497 = vmul.f32 %v234, %v495
        %v498 = vmul.f32 %v235, %v491
        %v499 = vmul.f32 %v236, %v495
        %v500 = vmul.f32 %v237, %v491
        %v501 = vmul.f32 %v238, %v495
        %v502 = vmul.f32 %v239, %v491
        %v503 = vmul.f32 %v240, %v495
        %v504 = vmul.f32 %v241, %v491
        %v505 = vmul.f32 %v242, %v495
        %v506 = vmul.f32 %v243, %v491
        %v507 = vmul.f32 %v244, %v495
        %v508 = vmul.f32 %v245, %v491
        %v509 = vmul.f32 %v246, %v495
        %v510 = vmul.f32 %v247, %v491
        %v511 = vmul.f32 %v248, %v495
        %v512 = vadd.f32 %v472, %v496
        %v513 = vadd.f32 %v473, %v497
        %v514 = vadd.f32 %v474, %v498
        %v515 = vadd.f32 %v475, %v499
        %v516 = vadd.f32 %v476, %v500
        %v517 = vadd.f32 %v477, %v501
        %v518 = vadd.f32 %v478, %v502
        %v519 = vadd.f32 %v479, %v503
        %v520 = vadd.f32 %v480, %v504
        %v521 = vadd.f32 %v481, %v505
        %v522 = vadd.f32 %v482, %v506
        %v523 = vadd.f32 %v483, %v507
        %v524 = vadd.f32 %v484, %v508
        %v525 = vadd.f32 %v485, %v509
        %v526 = vadd.f32 %v486, %v510
        %v527 = vadd.f32 %v487, %v511
        %v528 = vlaneseq
        %v529 = vshrl.u32 %v528, 7
        %v530 = vsub.s32 7, %v529
        %v531 = vrot.slane %v219, %v530
        %v532 = vlaneseq
        %v533 = vshrl.u32 %v532, 7
        %v534 = vsub.s32 7, %v533
        %v535 = vrot.slane %v220, %v534
        %v536 = vmul.f32 %v237, %v531
        %v537 = vmul.f32 %v238, %v535
        %v538 = vmul.f32 %v239, %v531
        %v539 = vmul.f32 %v240, %v535
        %v540 = vmul.f32 %v241, %v531
        %v541 = vmul.f32 %v242, %v535
        %v542 = vmul.f32 %v243, %v531
        %v543 = vmul.f32 %v244, %v535
        %v544 = vmul.f32 %v245, %v531
        %v545 = vmul.f32 %v246, %v535
        %v546 = vmul.f32 %v247, %v531
        %v547 = vmul.f32 %v248, %v535
        %v548 = vmul.f32 %v249, %v531
        %v549 = vmul.f32 %v250, %v535
        %v550 = vmul.f32 %v251, %v531
        %v551 = vmul.f32 %v252, %v535
        %v552 = vadd.f32 %v512, %v536
        %v553 = vadd.f32 %v513, %v537
        %v554 = vadd.f32 %v514, %v538
        %v555 = vadd.f32 %v515, %v539
        %v556 = vadd.f32 %v516, %v540
        %v557 = vadd.f32 %v517, %v541
        %v558 = vadd.f32 %v518, %v542
        %v559 = vadd.f32 %v519, %v543
        %v560 = vadd.f32 %v520, %v544
        %v561 = vadd.f32 %v521, %v545
        %v562 = vadd.f32 %v522, %v546
        %v563 = vadd.f32 %v523, %v547
        %v564 = vadd.f32 %v524, %v548
        %v565 = vadd.f32 %v525, %v549
        %v566 = vadd.f32 %v526, %v550
        %v567 = vadd.f32 %v527, %v551
        %vm568 = vcmask 1046528
        %v569 = vrot.slane %v233, 1
        %v570 = vrot.slane %v235, 1
        %v571 = vsel %vm568, %v569, %v570
        %v572 = vrot.slane %v234, 1
        %v573 = vrot.slane %v236, 1
        %v574 = vsel %vm568, %v572, %v573
        %v575 = vrot.slane %v237, 1
        %v576 = vrot.slane %v239, 1
        %v577 = vsel %vm568, %v575, %v576
        %v578 = vrot.slane %v238, 1
        %v579 = vrot.slane %v240, 1
        %v580 = vsel %vm568, %v578, %v579
        %v581 = vrot.slane %v241, 1
        %v582 = vrot.slane %v243, 1
        %v583 = vsel %vm568, %v581, %v582
        %v584 = vrot.slane %v242, 1
        %v585 = vrot.slane %v244, 1
        %v586 = vsel %vm568, %v584, %v585
        %v587 = vrot.slane %v245, 1
        %v588 = vrot.slane %v247, 1
        %v589 = vsel %vm568, %v587, %v588
        %v590 = vrot.slane %v246, 1
        %v591 = vrot.slane %v248, 1
        %v592 = vsel %vm568, %v590, %v591
        %v593 = vrot.slane %v249, 1
        %v594 = vrot.slane %v251, 1
        %v595 = vsel %vm568, %v593, %v594
        %v596 = vrot.slane %v250, 1
        %v597 = vrot.slane %v252, 1
        %v598 = vsel %vm568, %v596, %v597
        %v619 = vsel %vm568, %v570, 0.0
        %v620 = vsel %vm568, %v573, 0.0
        %v621 = vsel %vm568, %v576, 0.0
        %v622 = vsel %vm568, %v579, 0.0
        %v623 = vsel %vm568, %v582, 0.0
        %v624 = vsel %vm568, %v585, 0.0
        %v625 = vsel %vm568, %v588, 0.0
        %v626 = vsel %vm568, %v591, 0.0
        %v627 = vsel %vm568, %v594, 0.0
        %v628 = vsel %vm568, %v597, 0.0
        %v629 = vlaneseq
        %v630 = vshrl.u32 %v629, 7
        %v631 = vsub.s32 2, %v630
        %v632 = vrot.slane %v219, %v631
        %v633 = vlaneseq
        %v634 = vshrl.u32 %v633, 7
        %v635 = vsub.s32 2, %v634
        %v636 = vrot.slane %v220, %v635
        %v637 = vmul.f32 %v632, 0.0
        %v638 = vmul.f32 %v636, 0.0
        %v639 = vmul.f32 %v571, %v632
        %v640 = vmul.f32 %v574, %v636
        %v641 = vmul.f32 %v619, %v632
        %v642 = vmul.f32 %v620, %v636
        %v643 = vmul.f32 %v577, %v632
        %v644 = vmul.f32 %v580, %v636
        %v645 = vmul.f32 %v621, %v632
        %v646 = vmul.f32 %v622, %v636
        %v647 = vmul.f32 %v583, %v632
        %v648 = vmul.f32 %v586, %v636
        %v649 = vmul.f32 %v623, %v632
        %v650 = vmul.f32 %v624, %v636
        %v651 = vadd.f32 %v552, %v637
        %v652 = vadd.f32 %v553, %v638
        %v653 = vadd.f32 %v554, %v637
        %v654 = vadd.f32 %v555, %v638
        %v655 = vadd.f32 %v556, %v639
        %v656 = vadd.f32 %v557, %v640
        %v657 = vadd.f32 %v558, %v641
        %v658 = vadd.f32 %v559, %v642
        %v659 = vadd.f32 %v560, %v643
        %v660 = vadd.f32 %v561, %v644
        %v661 = vadd.f32 %v562, %v645
        %v662 = vadd.f32 %v563, %v646
        %v663 = vadd.f32 %v564, %v647
        %v664 = vadd.f32 %v565, %v648
        %v665 = vadd.f32 %v566, %v649
        %v666 = vadd.f32 %v567, %v650
        %v667 = vlaneseq
        %v668 = vshrl.u32 %v667, 7
        %v669 = vsub.s32 5, %v668
        %v670 = vrot.slane %v219, %v669
        %v671 = vlaneseq
        %v672 = vshrl.u32 %v671, 7
        %v673 = vsub.s32 5, %v672
        %v674 = vrot.slane %v220, %v673
        %v675 = vmul.f32 %v571, %v670
        %v676 = vmul.f32 %v574, %v674
        %v677 = vmul.f32 %v619, %v670
        %v678 = vmul.f32 %v620, %v674
        %v679 = vmul.f32 %v577, %v670
        %v680 = vmul.f32 %v580, %v674
        %v681 = vmul.f32 %v621, %v670
        %v682 = vmul.f32 %v622, %v674
        %v683 = vmul.f32 %v583, %v670
        %v684 = vmul.f32 %v586, %v674
        %v685 = vmul.f32 %v623, %v670
        %v686 = vmul.f32 %v624, %v674
        %v687 = vmul.f32 %v589, %v670
        %v688 = vmul.f32 %v592, %v674
        %v689 = vmul.f32 %v625, %v670
        %v690 = vmul.f32 %v626, %v674
        %v691 = vadd.f32 %v651, %v675
        %v692 = vadd.f32 %v652, %v676
        %v693 = vadd.f32 %v653, %v677
        %v694 = vadd.f32 %v654, %v678
        %v695 = vadd.f32 %v655, %v679
        %v696 = vadd.f32 %v656, %v680
        %v697 = vadd.f32 %v657, %v681
        %v698 = vadd.f32 %v658, %v682
        %v699 = vadd.f32 %v659, %v683
        %v700 = vadd.f32 %v660, %v684
        %v701 = vadd.f32 %v661, %v685
        %v702 = vadd.f32 %v662, %v686
        %v703 = vadd.f32 %v663, %v687
        %v704 = vadd.f32 %v664, %v688
        %v705 = vadd.f32 %v665, %v689
        %v706 = vadd.f32 %v666, %v690
        %v707 = vlaneseq
        %v708 = vshrl.u32 %v707, 7
        %v709 = vsub.s32 0, %v708
        %v710 = vrot.slane %v221, %v709
        %v711 = vlaneseq
        %v712 = vshrl.u32 %v711, 7
        %v713 = vsub.s32 0, %v712
        %v714 = vrot.slane %v222, %v713
        %v715 = vmul.f32 %v577, %v710
        %v716 = vmul.f32 %v580, %v714
        %v717 = vmul.f32 %v621, %v710
        %v718 = vmul.f32 %v622, %v714
        %v719 = vmul.f32 %v583, %v710
        %v720 = vmul.f32 %v586, %v714
        %v721 = vmul.f32 %v623, %v710
        %v722 = vmul.f32 %v624, %v714
        %v723 = vmul.f32 %v589, %v710
        %v724 = vmul.f32 %v592, %v714
        %v725 = vmul.f32 %v625, %v710
        %v726 = vmul.f32 %v626, %v714
        %v727 = vmul.f32 %v595, %v710
        %v728 = vmul.f32 %v598, %v714
        %v729 = vmul.f32 %v627, %v710
        %v730 = vmul.f32 %v628, %v714
        %v731 = vadd.f32 %v691, %v715
        %v732 = vadd.f32 %v692, %v716
        %v733 = vadd.f32 %v693, %v717
        %v734 = vadd.f32 %v694, %v718
        %v735 = vadd.f32 %v695, %v719
        %v736 = vadd.f32 %v696, %v720
        %v737 = vadd.f32 %v697, %v721
        %v738 = vadd.f32 %v698, %v722
        %v739 = vadd.f32 %v699, %v723
        %v740 = vadd.f32 %v700, %v724
        %v741 = vadd.f32 %v701, %v725
        %v742 = vadd.f32 %v702, %v726
        %v743 = vadd.f32 %v703, %v727
        %v744 = vadd.f32 %v704, %v728
        %v745 = vadd.f32 %v705, %v729
        %v746 = vadd.f32 %v706, %v730
        %v747 = vpack.c.bf16 %v733, %v731
        %v748 = vpack.c.bf16 %v734, %v732
        %v749 = vpack.c.bf16 %v737, %v735
        %v750 = vpack.c.bf16 %v738, %v736
        %v751 = vpack.c.bf16 %v741, %v739
        %v752 = vpack.c.bf16 %v742, %v740
        %v753 = vpack.c.bf16 %v745, %v743
        %v754 = vpack.c.bf16 %v746, %v744
        %v763 = vunpack.c.l.b16 %v747
        %v764 = vunpack.c.l.b16 %v748
        %v765 = vunpack.c.h.b16 %v747
        %v766 = vunpack.c.h.b16 %v748
        %v767 = vunpack.c.l.b16 %v749
        %v768 = vunpack.c.l.b16 %v750
        %v769 = vunpack.c.h.b16 %v749
        %v770 = vunpack.c.h.b16 %v750
        %v771 = vunpack.c.l.b16 %v751
        %v772 = vunpack.c.l.b16 %v752
        %v773 = vunpack.c.h.b16 %v751
        %v774 = vunpack.c.h.b16 %v752
        %v775 = vunpack.c.l.b16 %v753
        %v776 = vunpack.c.l.b16 %v754
        %v777 = vunpack.c.h.b16 %v753
        %v778 = vunpack.c.h.b16 %v754
        %v779 = vpack.c.b16 %v764, %v763
        %v780 = vpack.c.b16 %v766, %v765
        %v781 = vpack.c.b16 %v768, %v767
        %v782 = vpack.c.b16 %v770, %v769
        %v783 = vpack.c.b16 %v772, %v771
        %v784 = vpack.c.b16 %v774, %v773
        %v785 = vpack.c.b16 %v776, %v775
        %v786 = vpack.c.b16 %v778, %v777
        %795 = vst [vmem:[#allocation2] sm:$0xff] %v779
        %796 = vst [vmem:[#allocation2 + $0x8] sm:$0xff] %v780
        %797 = vst [vmem:[#allocation2 + $0x10] sm:$0xff] %v781
        %798 = vst [vmem:[#allocation2 + $0x18] sm:$0xff] %v782
        %799 = vst [vmem:[#allocation2 + $0x20] sm:$0xff] %v783
        %800 = vst [vmem:[#allocation2 + $0x28] sm:$0xff] %v784
        %801 = vst [vmem:[#allocation2 + $0x30] sm:$0xff] %v785
        %802 = vst [vmem:[#allocation2 + $0x38] sm:$0xff] %v786
        %s803 = scalar_lea.vmem %s187, 48 [#allocation3]
        %v804 = vld [vmem:[%s803] sm:$0xff]
        %v805 = vld [vmem:[%s803 + $0x8] sm:$0xff]
        %v806 = vld [vmem:[%s803 + $0x10] sm:$0xff]
        %v807 = vld [vmem:[%s803 + $0x18] sm:$0xff]
        %v808 = vld [vmem:[%s803 + $0x20] sm:$0xff]
        %v809 = vld [vmem:[%s803 + $0x28] sm:$0xff]
        %v810 = vld [vmem:[%s803 + $0x30] sm:$0xff]
        %v811 = vld [vmem:[%s803 + $0x38] sm:$0xff]
        %v812 = vld [vmem:[%s803 + $0x40] sm:$0xff]
        %v813 = vld [vmem:[%s803 + $0x48] sm:$0xff]
        %v814 = vld [vmem:[%s803 + $0x50] sm:$0xff]
        %v815 = vld [vmem:[%s803 + $0x58] sm:$0xff]
        %v816 = vunpack.c.l.bf16 %v804
        %v817 = vunpack.c.h.bf16 %v804
        %v818 = vunpack.c.l.bf16 %v805
        %v819 = vunpack.c.h.bf16 %v805
        %v820 = vunpack.c.l.bf16 %v806
        %v821 = vunpack.c.h.bf16 %v806
        %v822 = vunpack.c.l.bf16 %v807
        %v823 = vunpack.c.h.bf16 %v807
        %v824 = vunpack.c.l.bf16 %v808
        %v825 = vunpack.c.h.bf16 %v808
        %v826 = vunpack.c.l.bf16 %v809
        %v827 = vunpack.c.h.bf16 %v809
        %v828 = vunpack.c.l.bf16 %v810
        %v829 = vunpack.c.h.bf16 %v810
        %v830 = vunpack.c.l.bf16 %v811
        %v831 = vunpack.c.h.bf16 %v811
        %v832 = vunpack.c.l.bf16 %v812
        %v833 = vunpack.c.h.bf16 %v812
        %v834 = vunpack.c.l.bf16 %v813
        %v835 = vunpack.c.h.bf16 %v813
        %v836 = vunpack.c.l.bf16 %v814
        %v837 = vunpack.c.h.bf16 %v814
        %v838 = vunpack.c.l.bf16 %v815
        %v839 = vunpack.c.h.bf16 %v815
        %v864 = vrot.slane %v816, 7
        %v865 = vrot.slane %v817, 7
        %v866 = vrot.slane %v818, 7
        %v867 = vsel %vm273, %v864, %v866
        %v868 = vrot.slane %v819, 7
        %v869 = vsel %vm273, %v865, %v868
        %v870 = vrot.slane %v820, 7
        %v871 = vrot.slane %v821, 7
        %v872 = vrot.slane %v822, 7
        %v873 = vsel %vm273, %v870, %v872
        %v874 = vrot.slane %v823, 7
        %v875 = vsel %vm273, %v871, %v874
        %v876 = vrot.slane %v824, 7
        %v877 = vrot.slane %v825, 7
        %v878 = vrot.slane %v826, 7
        %v879 = vsel %vm273, %v876, %v878
        %v880 = vrot.slane %v827, 7
        %v881 = vsel %vm273, %v877, %v880
        %v882 = vrot.slane %v828, 7
        %v883 = vrot.slane %v829, 7
        %v884 = vrot.slane %v830, 7
        %v885 = vsel %vm273, %v882, %v884
        %v886 = vrot.slane %v831, 7
        %v887 = vsel %vm273, %v883, %v886
        %v888 = vrot.slane %v832, 7
        %v889 = vrot.slane %v833, 7
        %v890 = vrot.slane %v834, 7
        %v891 = vsel %vm273, %v888, %v890
        %v892 = vrot.slane %v835, 7
        %v893 = vsel %vm273, %v889, %v892
        %v894 = vrot.slane %v836, 7
        %v895 = vrot.slane %v837, 7
        %v896 = vrot.slane %v838, 7
        %v897 = vsel %vm273, %v894, %v896
        %v898 = vrot.slane %v839, 7
        %v899 = vsel %vm273, %v895, %v898
        %v924 = vsel %vm273, 0.0, %v864
        %v925 = vsel %vm273, 0.0, %v865
        %v926 = vsel %vm273, 0.0, %v870
        %v927 = vsel %vm273, 0.0, %v871
        %v928 = vsel %vm273, 0.0, %v876
        %v929 = vsel %vm273, 0.0, %v877
        %v930 = vsel %vm273, 0.0, %v882
        %v931 = vsel %vm273, 0.0, %v883
        %v932 = vsel %vm273, 0.0, %v888
        %v933 = vsel %vm273, 0.0, %v889
        %v934 = vsel %vm273, 0.0, %v894
        %v935 = vsel %vm273, 0.0, %v895
        %v936 = vmul.f32 %v924, %v337
        %v937 = vmul.f32 %v925, %v341
        %v938 = vmul.f32 %v867, %v337
        %v939 = vmul.f32 %v869, %v341
        %v940 = vmul.f32 %v926, %v337
        %v941 = vmul.f32 %v927, %v341
        %v942 = vmul.f32 %v873, %v337
        %v943 = vmul.f32 %v875, %v341
        %v944 = vmul.f32 %v928, %v337
        %v945 = vmul.f32 %v929, %v341
        %v946 = vmul.f32 %v879, %v337
        %v947 = vmul.f32 %v881, %v341
        %v948 = vmul.f32 %v930, %v337
        %v949 = vmul.f32 %v931, %v341
        %v950 = vmul.f32 %v885, %v337
        %v951 = vmul.f32 %v887, %v341
        %v952 = vadd.f32 %v936, 0.0
        %v953 = vadd.f32 %v937, 0.0
        %v954 = vadd.f32 %v938, 0.0
        %v955 = vadd.f32 %v939, 0.0
        %v956 = vadd.f32 %v940, 0.0
        %v957 = vadd.f32 %v941, 0.0
        %v958 = vadd.f32 %v942, 0.0
        %v959 = vadd.f32 %v943, 0.0
        %v960 = vadd.f32 %v944, 0.0
        %v961 = vadd.f32 %v945, 0.0
        %v962 = vadd.f32 %v946, 0.0
        %v963 = vadd.f32 %v947, 0.0
        %v964 = vadd.f32 %v948, 0.0
        %v965 = vadd.f32 %v949, 0.0
        %v966 = vadd.f32 %v950, 0.0
        %v967 = vadd.f32 %v951, 0.0
        %v968 = vmul.f32 %v926, %v373
        %v969 = vmul.f32 %v927, %v377
        %v970 = vmul.f32 %v873, %v373
        %v971 = vmul.f32 %v875, %v377
        %v972 = vmul.f32 %v928, %v373
        %v973 = vmul.f32 %v929, %v377
        %v974 = vmul.f32 %v879, %v373
        %v975 = vmul.f32 %v881, %v377
        %v976 = vmul.f32 %v930, %v373
        %v977 = vmul.f32 %v931, %v377
        %v978 = vmul.f32 %v885, %v373
        %v979 = vmul.f32 %v887, %v377
        %v980 = vmul.f32 %v932, %v373
        %v981 = vmul.f32 %v933, %v377
        %v982 = vmul.f32 %v891, %v373
        %v983 = vmul.f32 %v893, %v377
        %v984 = vadd.f32 %v952, %v968
        %v985 = vadd.f32 %v953, %v969
        %v986 = vadd.f32 %v954, %v970
        %v987 = vadd.f32 %v955, %v971
        %v988 = vadd.f32 %v956, %v972
        %v989 = vadd.f32 %v957, %v973
        %v990 = vadd.f32 %v958, %v974
        %v991 = vadd.f32 %v959, %v975
        %v992 = vadd.f32 %v960, %v976
        %v993 = vadd.f32 %v961, %v977
        %v994 = vadd.f32 %v962, %v978
        %v995 = vadd.f32 %v963, %v979
        %v996 = vadd.f32 %v964, %v980
        %v997 = vadd.f32 %v965, %v981
        %v998 = vadd.f32 %v966, %v982
        %v999 = vadd.f32 %v967, %v983
        %v1000 = vmul.f32 %v928, %v413
        %v1001 = vmul.f32 %v929, %v417
        %v1002 = vmul.f32 %v879, %v413
        %v1003 = vmul.f32 %v881, %v417
        %v1004 = vmul.f32 %v930, %v413
        %v1005 = vmul.f32 %v931, %v417
        %v1006 = vmul.f32 %v885, %v413
        %v1007 = vmul.f32 %v887, %v417
        %v1008 = vmul.f32 %v932, %v413
        %v1009 = vmul.f32 %v933, %v417
        %v1010 = vmul.f32 %v891, %v413
        %v1011 = vmul.f32 %v893, %v417
        %v1012 = vmul.f32 %v934, %v413
        %v1013 = vmul.f32 %v935, %v417
        %v1014 = vmul.f32 %v897, %v413
        %v1015 = vmul.f32 %v899, %v417
        %v1016 = vadd.f32 %v984, %v1000
        %v1017 = vadd.f32 %v985, %v1001
        %v1018 = vadd.f32 %v986, %v1002
        %v1019 = vadd.f32 %v987, %v1003
        %v1020 = vadd.f32 %v988, %v1004
        %v1021 = vadd.f32 %v989, %v1005
        %v1022 = vadd.f32 %v990, %v1006
        %v1023 = vadd.f32 %v991, %v1007
        %v1024 = vadd.f32 %v992, %v1008
        %v1025 = vadd.f32 %v993, %v1009
        %v1026 = vadd.f32 %v994, %v1010
        %v1027 = vadd.f32 %v995, %v1011
        %v1028 = vadd.f32 %v996, %v1012
        %v1029 = vadd.f32 %v997, %v1013
        %v1030 = vadd.f32 %v998, %v1014
        %v1031 = vadd.f32 %v999, %v1015
        %v1032 = vmul.f32 %v816, %v453
        %v1033 = vmul.f32 %v817, %v457
        %v1034 = vmul.f32 %v818, %v453
        %v1035 = vmul.f32 %v819, %v457
        %v1036 = vmul.f32 %v820, %v453
        %v1037 = vmul.f32 %v821, %v457
        %v1038 = vmul.f32 %v822, %v453
        %v1039 = vmul.f32 %v823, %v457
        %v1040 = vmul.f32 %v824, %v453
        %v1041 = vmul.f32 %v825, %v457
        %v1042 = vmul.f32 %v826, %v453
        %v1043 = vmul.f32 %v827, %v457
        %v1044 = vmul.f32 %v828, %v453
        %v1045 = vmul.f32 %v829, %v457
        %v1046 = vmul.f32 %v830, %v453
        %v1047 = vmul.f32 %v831, %v457
        %v1048 = vadd.f32 %v1016, %v1032
        %v1049 = vadd.f32 %v1017, %v1033
        %v1050 = vadd.f32 %v1018, %v1034
        %v1051 = vadd.f32 %v1019, %v1035
        %v1052 = vadd.f32 %v1020, %v1036
        %v1053 = vadd.f32 %v1021, %v1037
        %v1054 = vadd.f32 %v1022, %v1038
        %v1055 = vadd.f32 %v1023, %v1039
        %v1056 = vadd.f32 %v1024, %v1040
        %v1057 = vadd.f32 %v1025, %v1041
        %v1058 = vadd.f32 %v1026, %v1042
        %v1059 = vadd.f32 %v1027, %v1043
        %v1060 = vadd.f32 %v1028, %v1044
        %v1061 = vadd.f32 %v1029, %v1045
        %v1062 = vadd.f32 %v1030, %v1046
        %v1063 = vadd.f32 %v1031, %v1047
        %v1064 = vmul.f32 %v820, %v491
        %v1065 = vmul.f32 %v821, %v495
        %v1066 = vmul.f32 %v822, %v491
        %v1067 = vmul.f32 %v823, %v495
        %v1068 = vmul.f32 %v824, %v491
        %v1069 = vmul.f32 %v825, %v495
        %v1070 = vmul.f32 %v826, %v491
        %v1071 = vmul.f32 %v827, %v495
        %v1072 = vmul.f32 %v828, %v491
        %v1073 = vmul.f32 %v829, %v495
        %v1074 = vmul.f32 %v830, %v491
        %v1075 = vmul.f32 %v831, %v495
        %v1076 = vmul.f32 %v832, %v491
        %v1077 = vmul.f32 %v833, %v495
        %v1078 = vmul.f32 %v834, %v491
        %v1079 = vmul.f32 %v835, %v495
        %v1080 = vadd.f32 %v1048, %v1064
        %v1081 = vadd.f32 %v1049, %v1065
        %v1082 = vadd.f32 %v1050, %v1066
        %v1083 = vadd.f32 %v1051, %v1067
        %v1084 = vadd.f32 %v1052, %v1068
        %v1085 = vadd.f32 %v1053, %v1069
        %v1086 = vadd.f32 %v1054, %v1070
        %v1087 = vadd.f32 %v1055, %v1071
        %v1088 = vadd.f32 %v1056, %v1072
        %v1089 = vadd.f32 %v1057, %v1073
        %v1090 = vadd.f32 %v1058, %v1074
        %v1091 = vadd.f32 %v1059, %v1075
        %v1092 = vadd.f32 %v1060, %v1076
        %v1093 = vadd.f32 %v1061, %v1077
        %v1094 = vadd.f32 %v1062, %v1078
        %v1095 = vadd.f32 %v1063, %v1079
        %v1096 = vmul.f32 %v824, %v531
        %v1097 = vmul.f32 %v825, %v535
        %v1098 = vmul.f32 %v826, %v531
        %v1099 = vmul.f32 %v827, %v535
        %v1100 = vmul.f32 %v828, %v531
        %v1101 = vmul.f32 %v829, %v535
        %v1102 = vmul.f32 %v830, %v531
        %v1103 = vmul.f32 %v831, %v535
        %v1104 = vmul.f32 %v832, %v531
        %v1105 = vmul.f32 %v833, %v535
        %v1106 = vmul.f32 %v834, %v531
        %v1107 = vmul.f32 %v835, %v535
        %v1108 = vmul.f32 %v836, %v531
        %v1109 = vmul.f32 %v837, %v535
        %v1110 = vmul.f32 %v838, %v531
        %v1111 = vmul.f32 %v839, %v535
        %v1112 = vadd.f32 %v1080, %v1096
        %v1113 = vadd.f32 %v1081, %v1097
        %v1114 = vadd.f32 %v1082, %v1098
        %v1115 = vadd.f32 %v1083, %v1099
        %v1116 = vadd.f32 %v1084, %v1100
        %v1117 = vadd.f32 %v1085, %v1101
        %v1118 = vadd.f32 %v1086, %v1102
        %v1119 = vadd.f32 %v1087, %v1103
        %v1120 = vadd.f32 %v1088, %v1104
        %v1121 = vadd.f32 %v1089, %v1105
        %v1122 = vadd.f32 %v1090, %v1106
        %v1123 = vadd.f32 %v1091, %v1107
        %v1124 = vadd.f32 %v1092, %v1108
        %v1125 = vadd.f32 %v1093, %v1109
        %v1126 = vadd.f32 %v1094, %v1110
        %v1127 = vadd.f32 %v1095, %v1111
        %v1128 = vrot.slane %v816, 1
        %v1129 = vrot.slane %v818, 1
        %v1130 = vsel %vm568, %v1128, %v1129
        %v1131 = vrot.slane %v817, 1
        %v1132 = vrot.slane %v819, 1
        %v1133 = vsel %vm568, %v1131, %v1132
        %v1134 = vrot.slane %v820, 1
        %v1135 = vrot.slane %v822, 1
        %v1136 = vsel %vm568, %v1134, %v1135
        %v1137 = vrot.slane %v821, 1
        %v1138 = vrot.slane %v823, 1
        %v1139 = vsel %vm568, %v1137, %v1138
        %v1140 = vrot.slane %v824, 1
        %v1141 = vrot.slane %v826, 1
        %v1142 = vsel %vm568, %v1140, %v1141
        %v1143 = vrot.slane %v825, 1
        %v1144 = vrot.slane %v827, 1
        %v1145 = vsel %vm568, %v1143, %v1144
        %v1146 = vrot.slane %v828, 1
        %v1147 = vrot.slane %v830, 1
        %v1148 = vsel %vm568, %v1146, %v1147
        %v1149 = vrot.slane %v829, 1
        %v1150 = vrot.slane %v831, 1
        %v1151 = vsel %vm568, %v1149, %v1150
        %v1152 = vrot.slane %v832, 1
        %v1153 = vrot.slane %v834, 1
        %v1154 = vsel %vm568, %v1152, %v1153
        %v1155 = vrot.slane %v833, 1
        %v1156 = vrot.slane %v835, 1
        %v1157 = vsel %vm568, %v1155, %v1156
        %v1158 = vrot.slane %v836, 1
        %v1159 = vrot.slane %v838, 1
        %v1160 = vsel %vm568, %v1158, %v1159
        %v1161 = vrot.slane %v837, 1
        %v1162 = vrot.slane %v839, 1
        %v1163 = vsel %vm568, %v1161, %v1162
        %v1188 = vsel %vm568, %v1129, 0.0
        %v1189 = vsel %vm568, %v1132, 0.0
        %v1190 = vsel %vm568, %v1135, 0.0
        %v1191 = vsel %vm568, %v1138, 0.0
        %v1192 = vsel %vm568, %v1141, 0.0
        %v1193 = vsel %vm568, %v1144, 0.0
        %v1194 = vsel %vm568, %v1147, 0.0
        %v1195 = vsel %vm568, %v1150, 0.0
        %v1196 = vsel %vm568, %v1153, 0.0
        %v1197 = vsel %vm568, %v1156, 0.0
        %v1198 = vsel %vm568, %v1159, 0.0
        %v1199 = vsel %vm568, %v1162, 0.0
        %v1200 = vmul.f32 %v1130, %v632
        %v1201 = vmul.f32 %v1133, %v636
        %v1202 = vmul.f32 %v1188, %v632
        %v1203 = vmul.f32 %v1189, %v636
        %v1204 = vmul.f32 %v1136, %v632
        %v1205 = vmul.f32 %v1139, %v636
        %v1206 = vmul.f32 %v1190, %v632
        %v1207 = vmul.f32 %v1191, %v636
        %v1208 = vmul.f32 %v1142, %v632
        %v1209 = vmul.f32 %v1145, %v636
        %v1210 = vmul.f32 %v1192, %v632
        %v1211 = vmul.f32 %v1193, %v636
        %v1212 = vmul.f32 %v1148, %v632
        %v1213 = vmul.f32 %v1151, %v636
        %v1214 = vmul.f32 %v1194, %v632
        %v1215 = vmul.f32 %v1195, %v636
        %v1216 = vadd.f32 %v1112, %v1200
        %v1217 = vadd.f32 %v1113, %v1201
        %v1218 = vadd.f32 %v1114, %v1202
        %v1219 = vadd.f32 %v1115, %v1203
        %v1220 = vadd.f32 %v1116, %v1204
        %v1221 = vadd.f32 %v1117, %v1205
        %v1222 = vadd.f32 %v1118, %v1206
        %v1223 = vadd.f32 %v1119, %v1207
        %v1224 = vadd.f32 %v1120, %v1208
        %v1225 = vadd.f32 %v1121, %v1209
        %v1226 = vadd.f32 %v1122, %v1210
        %v1227 = vadd.f32 %v1123, %v1211
        %v1228 = vadd.f32 %v1124, %v1212
        %v1229 = vadd.f32 %v1125, %v1213
        %v1230 = vadd.f32 %v1126, %v1214
        %v1231 = vadd.f32 %v1127, %v1215
        %v1232 = vmul.f32 %v1136, %v670
        %v1233 = vmul.f32 %v1139, %v674
        %v1234 = vmul.f32 %v1190, %v670
        %v1235 = vmul.f32 %v1191, %v674
        %v1236 = vmul.f32 %v1142, %v670
        %v1237 = vmul.f32 %v1145, %v674
        %v1238 = vmul.f32 %v1192, %v670
        %v1239 = vmul.f32 %v1193, %v674
        %v1240 = vmul.f32 %v1148, %v670
        %v1241 = vmul.f32 %v1151, %v674
        %v1242 = vmul.f32 %v1194, %v670
        %v1243 = vmul.f32 %v1195, %v674
        %v1244 = vmul.f32 %v1154, %v670
        %v1245 = vmul.f32 %v1157, %v674
        %v1246 = vmul.f32 %v1196, %v670
        %v1247 = vmul.f32 %v1197, %v674
        %v1248 = vadd.f32 %v1216, %v1232
        %v1249 = vadd.f32 %v1217, %v1233
        %v1250 = vadd.f32 %v1218, %v1234
        %v1251 = vadd.f32 %v1219, %v1235
        %v1252 = vadd.f32 %v1220, %v1236
        %v1253 = vadd.f32 %v1221, %v1237
        %v1254 = vadd.f32 %v1222, %v1238
        %v1255 = vadd.f32 %v1223, %v1239
        %v1256 = vadd.f32 %v1224, %v1240
        %v1257 = vadd.f32 %v1225, %v1241
        %v1258 = vadd.f32 %v1226, %v1242
        %v1259 = vadd.f32 %v1227, %v1243
        %v1260 = vadd.f32 %v1228, %v1244
        %v1261 = vadd.f32 %v1229, %v1245
        %v1262 = vadd.f32 %v1230, %v1246
        %v1263 = vadd.f32 %v1231, %v1247
        %v1264 = vmul.f32 %v1142, %v710
        %v1265 = vmul.f32 %v1145, %v714
        %v1266 = vmul.f32 %v1192, %v710
        %v1267 = vmul.f32 %v1193, %v714
        %v1268 = vmul.f32 %v1148, %v710
        %v1269 = vmul.f32 %v1151, %v714
        %v1270 = vmul.f32 %v1194, %v710
        %v1271 = vmul.f32 %v1195, %v714
        %v1272 = vmul.f32 %v1154, %v710
        %v1273 = vmul.f32 %v1157, %v714
        %v1274 = vmul.f32 %v1196, %v710
        %v1275 = vmul.f32 %v1197, %v714
        %v1276 = vmul.f32 %v1160, %v710
        %v1277 = vmul.f32 %v1163, %v714
        %v1278 = vmul.f32 %v1198, %v710
        %v1279 = vmul.f32 %v1199, %v714
        %v1280 = vadd.f32 %v1248, %v1264
        %v1281 = vadd.f32 %v1249, %v1265
        %v1282 = vadd.f32 %v1250, %v1266
        %v1283 = vadd.f32 %v1251, %v1267
        %v1284 = vadd.f32 %v1252, %v1268
        %v1285 = vadd.f32 %v1253, %v1269
        %v1286 = vadd.f32 %v1254, %v1270
        %v1287 = vadd.f32 %v1255, %v1271
        %v1288 = vadd.f32 %v1256, %v1272
        %v1289 = vadd.f32 %v1257, %v1273
        %v1290 = vadd.f32 %v1258, %v1274
        %v1291 = vadd.f32 %v1259, %v1275
        %v1292 = vadd.f32 %v1260, %v1276
        %v1293 = vadd.f32 %v1261, %v1277
        %v1294 = vadd.f32 %v1262, %v1278
        %v1295 = vadd.f32 %v1263, %v1279
        %v1296 = vpack.c.bf16 %v1282, %v1280
        %v1297 = vpack.c.bf16 %v1283, %v1281
        %v1298 = vpack.c.bf16 %v1286, %v1284
        %v1299 = vpack.c.bf16 %v1287, %v1285
        %v1300 = vpack.c.bf16 %v1290, %v1288
        %v1301 = vpack.c.bf16 %v1291, %v1289
        %v1302 = vpack.c.bf16 %v1294, %v1292
        %v1303 = vpack.c.bf16 %v1295, %v1293
        %v1312 = vunpack.c.l.b16 %v1296
        %v1313 = vunpack.c.l.b16 %v1297
        %v1314 = vunpack.c.h.b16 %v1296
        %v1315 = vunpack.c.h.b16 %v1297
        %v1316 = vunpack.c.l.b16 %v1298
        %v1317 = vunpack.c.l.b16 %v1299
        %v1318 = vunpack.c.h.b16 %v1298
        %v1319 = vunpack.c.h.b16 %v1299
        %v1320 = vunpack.c.l.b16 %v1300
        %v1321 = vunpack.c.l.b16 %v1301
        %v1322 = vunpack.c.h.b16 %v1300
        %v1323 = vunpack.c.h.b16 %v1301
        %v1324 = vunpack.c.l.b16 %v1302
        %v1325 = vunpack.c.l.b16 %v1303
        %v1326 = vunpack.c.h.b16 %v1302
        %v1327 = vunpack.c.h.b16 %v1303
        %v1328 = vpack.c.b16 %v1313, %v1312
        %v1329 = vpack.c.b16 %v1315, %v1314
        %v1330 = vpack.c.b16 %v1317, %v1316
        %v1331 = vpack.c.b16 %v1319, %v1318
        %v1332 = vpack.c.b16 %v1321, %v1320
        %v1333 = vpack.c.b16 %v1323, %v1322
        %v1334 = vpack.c.b16 %v1325, %v1324
        %v1335 = vpack.c.b16 %v1327, %v1326
        %1344 = vst [vmem:[#allocation2 + $0x40] sm:$0xff] %v1328
        %1345 = vst [vmem:[#allocation2 + $0x48] sm:$0xff] %v1329
        %1346 = vst [vmem:[#allocation2 + $0x50] sm:$0xff] %v1330
        %1347 = vst [vmem:[#allocation2 + $0x58] sm:$0xff] %v1331
        %1348 = vst [vmem:[#allocation2 + $0x60] sm:$0xff] %v1332
        %1349 = vst [vmem:[#allocation2 + $0x68] sm:$0xff] %v1333
        %1350 = vst [vmem:[#allocation2 + $0x70] sm:$0xff] %v1334
        %1351 = vst [vmem:[#allocation2 + $0x78] sm:$0xff] %v1335
        %s1352 = scalar_lea.vmem %s187, 112 [#allocation3]
        %v1353 = vld [vmem:[%s1352] sm:$0xff]
        %v1354 = vld [vmem:[%s1352 + $0x8] sm:$0xff]
        %v1355 = vld [vmem:[%s1352 + $0x10] sm:$0xff]
        %v1356 = vld [vmem:[%s1352 + $0x18] sm:$0xff]
        %v1357 = vld [vmem:[%s1352 + $0x20] sm:$0xff]
        %v1358 = vld [vmem:[%s1352 + $0x28] sm:$0xff]
        %v1359 = vld [vmem:[%s1352 + $0x30] sm:$0xff]
        %v1360 = vld [vmem:[%s1352 + $0x38] sm:$0xff]
        %v1361 = vld [vmem:[%s1352 + $0x40] sm:$0xff]
        %v1362 = vld [vmem:[%s1352 + $0x48] sm:$0xff]
        %v1363 = vld [vmem:[%s1352 + $0x50] sm:$0xff]
        %v1364 = vld [vmem:[%s1352 + $0x58] sm:$0xff]
        %v1365 = vunpack.c.l.bf16 %v1353
        %v1366 = vunpack.c.h.bf16 %v1353
        %v1367 = vunpack.c.l.bf16 %v1354
        %v1368 = vunpack.c.h.bf16 %v1354
        %v1369 = vunpack.c.l.bf16 %v1355
        %v1370 = vunpack.c.h.bf16 %v1355
        %v1371 = vunpack.c.l.bf16 %v1356
        %v1372 = vunpack.c.h.bf16 %v1356
        %v1373 = vunpack.c.l.bf16 %v1357
        %v1374 = vunpack.c.h.bf16 %v1357
        %v1375 = vunpack.c.l.bf16 %v1358
        %v1376 = vunpack.c.h.bf16 %v1358
        %v1377 = vunpack.c.l.bf16 %v1359
        %v1378 = vunpack.c.h.bf16 %v1359
        %v1379 = vunpack.c.l.bf16 %v1360
        %v1380 = vunpack.c.h.bf16 %v1360
        %v1381 = vunpack.c.l.bf16 %v1361
        %v1382 = vunpack.c.h.bf16 %v1361
        %v1383 = vunpack.c.l.bf16 %v1362
        %v1384 = vunpack.c.h.bf16 %v1362
        %v1385 = vunpack.c.l.bf16 %v1363
        %v1386 = vunpack.c.h.bf16 %v1363
        %v1387 = vunpack.c.l.bf16 %v1364
        %v1388 = vunpack.c.h.bf16 %v1364
        %v1413 = vrot.slane %v1365, 7
        %v1414 = vrot.slane %v1366, 7
        %v1415 = vrot.slane %v1367, 7
        %v1416 = vsel %vm273, %v1413, %v1415
        %v1417 = vrot.slane %v1368, 7
        %v1418 = vsel %vm273, %v1414, %v1417
        %v1419 = vrot.slane %v1369, 7
        %v1420 = vrot.slane %v1370, 7
        %v1421 = vrot.slane %v1371, 7
        %v1422 = vsel %vm273, %v1419, %v1421
        %v1423 = vrot.slane %v1372, 7
        %v1424 = vsel %vm273, %v1420, %v1423
        %v1425 = vrot.slane %v1373, 7
        %v1426 = vrot.slane %v1374, 7
        %v1427 = vrot.slane %v1375, 7
        %v1428 = vsel %vm273, %v1425, %v1427
        %v1429 = vrot.slane %v1376, 7
        %v1430 = vsel %vm273, %v1426, %v1429
        %v1431 = vrot.slane %v1377, 7
        %v1432 = vrot.slane %v1378, 7
        %v1433 = vrot.slane %v1379, 7
        %v1434 = vsel %vm273, %v1431, %v1433
        %v1435 = vrot.slane %v1380, 7
        %v1436 = vsel %vm273, %v1432, %v1435
        %v1437 = vrot.slane %v1381, 7
        %v1438 = vrot.slane %v1382, 7
        %v1439 = vrot.slane %v1383, 7
        %v1440 = vsel %vm273, %v1437, %v1439
        %v1441 = vrot.slane %v1384, 7
        %v1442 = vsel %vm273, %v1438, %v1441
        %v1443 = vrot.slane %v1385, 7
        %v1444 = vrot.slane %v1386, 7
        %v1445 = vrot.slane %v1387, 7
        %v1446 = vsel %vm273, %v1443, %v1445
        %v1447 = vrot.slane %v1388, 7
        %v1448 = vsel %vm273, %v1444, %v1447
        %v1473 = vsel %vm273, 0.0, %v1413
        %v1474 = vsel %vm273, 0.0, %v1414
        %v1475 = vsel %vm273, 0.0, %v1419
        %v1476 = vsel %vm273, 0.0, %v1420
        %v1477 = vsel %vm273, 0.0, %v1425
        %v1478 = vsel %vm273, 0.0, %v1426
        %v1479 = vsel %vm273, 0.0, %v1431
        %v1480 = vsel %vm273, 0.0, %v1432
        %v1481 = vsel %vm273, 0.0, %v1437
        %v1482 = vsel %vm273, 0.0, %v1438
        %v1483 = vsel %vm273, 0.0, %v1443
        %v1484 = vsel %vm273, 0.0, %v1444
        %v1485 = vmul.f32 %v1473, %v337
        %v1486 = vmul.f32 %v1474, %v341
        %v1487 = vmul.f32 %v1416, %v337
        %v1488 = vmul.f32 %v1418, %v341
        %v1489 = vmul.f32 %v1475, %v337
        %v1490 = vmul.f32 %v1476, %v341
        %v1491 = vmul.f32 %v1422, %v337
        %v1492 = vmul.f32 %v1424, %v341
        %v1493 = vmul.f32 %v1477, %v337
        %v1494 = vmul.f32 %v1478, %v341
        %v1495 = vmul.f32 %v1428, %v337
        %v1496 = vmul.f32 %v1430, %v341
        %v1497 = vmul.f32 %v1479, %v337
        %v1498 = vmul.f32 %v1480, %v341
        %v1499 = vmul.f32 %v1434, %v337
        %v1500 = vmul.f32 %v1436, %v341
        %v1501 = vadd.f32 %v1485, 0.0
        %v1502 = vadd.f32 %v1486, 0.0
        %v1503 = vadd.f32 %v1487, 0.0
        %v1504 = vadd.f32 %v1488, 0.0
        %v1505 = vadd.f32 %v1489, 0.0
        %v1506 = vadd.f32 %v1490, 0.0
        %v1507 = vadd.f32 %v1491, 0.0
        %v1508 = vadd.f32 %v1492, 0.0
        %v1509 = vadd.f32 %v1493, 0.0
        %v1510 = vadd.f32 %v1494, 0.0
        %v1511 = vadd.f32 %v1495, 0.0
        %v1512 = vadd.f32 %v1496, 0.0
        %v1513 = vadd.f32 %v1497, 0.0
        %v1514 = vadd.f32 %v1498, 0.0
        %v1515 = vadd.f32 %v1499, 0.0
        %v1516 = vadd.f32 %v1500, 0.0
        %v1517 = vmul.f32 %v1475, %v373
        %v1518 = vmul.f32 %v1476, %v377
        %v1519 = vmul.f32 %v1422, %v373
        %v1520 = vmul.f32 %v1424, %v377
        %v1521 = vmul.f32 %v1477, %v373
        %v1522 = vmul.f32 %v1478, %v377
        %v1523 = vmul.f32 %v1428, %v373
        %v1524 = vmul.f32 %v1430, %v377
        %v1525 = vmul.f32 %v1479, %v373
        %v1526 = vmul.f32 %v1480, %v377
        %v1527 = vmul.f32 %v1434, %v373
        %v1528 = vmul.f32 %v1436, %v377
        %v1529 = vmul.f32 %v1481, %v373
        %v1530 = vmul.f32 %v1482, %v377
        %v1531 = vmul.f32 %v1440, %v373
        %v1532 = vmul.f32 %v1442, %v377
        %v1533 = vadd.f32 %v1501, %v1517
        %v1534 = vadd.f32 %v1502, %v1518
        %v1535 = vadd.f32 %v1503, %v1519
        %v1536 = vadd.f32 %v1504, %v1520
        %v1537 = vadd.f32 %v1505, %v1521
        %v1538 = vadd.f32 %v1506, %v1522
        %v1539 = vadd.f32 %v1507, %v1523
        %v1540 = vadd.f32 %v1508, %v1524
        %v1541 = vadd.f32 %v1509, %v1525
        %v1542 = vadd.f32 %v1510, %v1526
        %v1543 = vadd.f32 %v1511, %v1527
        %v1544 = vadd.f32 %v1512, %v1528
        %v1545 = vadd.f32 %v1513, %v1529
        %v1546 = vadd.f32 %v1514, %v1530
        %v1547 = vadd.f32 %v1515, %v1531
        %v1548 = vadd.f32 %v1516, %v1532
        %v1549 = vmul.f32 %v1477, %v413
        %v1550 = vmul.f32 %v1478, %v417
        %v1551 = vmul.f32 %v1428, %v413
        %v1552 = vmul.f32 %v1430, %v417
        %v1553 = vmul.f32 %v1479, %v413
        %v1554 = vmul.f32 %v1480, %v417
        %v1555 = vmul.f32 %v1434, %v413
        %v1556 = vmul.f32 %v1436, %v417
        %v1557 = vmul.f32 %v1481, %v413
        %v1558 = vmul.f32 %v1482, %v417
        %v1559 = vmul.f32 %v1440, %v413
        %v1560 = vmul.f32 %v1442, %v417
        %v1561 = vmul.f32 %v1483, %v413
        %v1562 = vmul.f32 %v1484, %v417
        %v1563 = vmul.f32 %v1446, %v413
        %v1564 = vmul.f32 %v1448, %v417
        %v1565 = vadd.f32 %v1533, %v1549
        %v1566 = vadd.f32 %v1534, %v1550
        %v1567 = vadd.f32 %v1535, %v1551
        %v1568 = vadd.f32 %v1536, %v1552
        %v1569 = vadd.f32 %v1537, %v1553
        %v1570 = vadd.f32 %v1538, %v1554
        %v1571 = vadd.f32 %v1539, %v1555
        %v1572 = vadd.f32 %v1540, %v1556
        %v1573 = vadd.f32 %v1541, %v1557
        %v1574 = vadd.f32 %v1542, %v1558
        %v1575 = vadd.f32 %v1543, %v1559
        %v1576 = vadd.f32 %v1544, %v1560
        %v1577 = vadd.f32 %v1545, %v1561
        %v1578 = vadd.f32 %v1546, %v1562
        %v1579 = vadd.f32 %v1547, %v1563
        %v1580 = vadd.f32 %v1548, %v1564
        %v1581 = vmul.f32 %v1365, %v453
        %v1582 = vmul.f32 %v1366, %v457
        %v1583 = vmul.f32 %v1367, %v453
        %v1584 = vmul.f32 %v1368, %v457
        %v1585 = vmul.f32 %v1369, %v453
        %v1586 = vmul.f32 %v1370, %v457
        %v1587 = vmul.f32 %v1371, %v453
        %v1588 = vmul.f32 %v1372, %v457
        %v1589 = vmul.f32 %v1373, %v453
        %v1590 = vmul.f32 %v1374, %v457
        %v1591 = vmul.f32 %v1375, %v453
        %v1592 = vmul.f32 %v1376, %v457
        %v1593 = vmul.f32 %v1377, %v453
        %v1594 = vmul.f32 %v1378, %v457
        %v1595 = vmul.f32 %v1379, %v453
        %v1596 = vmul.f32 %v1380, %v457
        %v1597 = vadd.f32 %v1565, %v1581
        %v1598 = vadd.f32 %v1566, %v1582
        %v1599 = vadd.f32 %v1567, %v1583
        %v1600 = vadd.f32 %v1568, %v1584
        %v1601 = vadd.f32 %v1569, %v1585
        %v1602 = vadd.f32 %v1570, %v1586
        %v1603 = vadd.f32 %v1571, %v1587
        %v1604 = vadd.f32 %v1572, %v1588
        %v1605 = vadd.f32 %v1573, %v1589
        %v1606 = vadd.f32 %v1574, %v1590
        %v1607 = vadd.f32 %v1575, %v1591
        %v1608 = vadd.f32 %v1576, %v1592
        %v1609 = vadd.f32 %v1577, %v1593
        %v1610 = vadd.f32 %v1578, %v1594
        %v1611 = vadd.f32 %v1579, %v1595
        %v1612 = vadd.f32 %v1580, %v1596
        %v1613 = vmul.f32 %v1369, %v491
        %v1614 = vmul.f32 %v1370, %v495
        %v1615 = vmul.f32 %v1371, %v491
        %v1616 = vmul.f32 %v1372, %v495
        %v1617 = vmul.f32 %v1373, %v491
        %v1618 = vmul.f32 %v1374, %v495
        %v1619 = vmul.f32 %v1375, %v491
        %v1620 = vmul.f32 %v1376, %v495
        %v1621 = vmul.f32 %v1377, %v491
        %v1622 = vmul.f32 %v1378, %v495
        %v1623 = vmul.f32 %v1379, %v491
        %v1624 = vmul.f32 %v1380, %v495
        %v1625 = vmul.f32 %v1381, %v491
        %v1626 = vmul.f32 %v1382, %v495
        %v1627 = vmul.f32 %v1383, %v491
        %v1628 = vmul.f32 %v1384, %v495
        %v1629 = vadd.f32 %v1597, %v1613
        %v1630 = vadd.f32 %v1598, %v1614
        %v1631 = vadd.f32 %v1599, %v1615
        %v1632 = vadd.f32 %v1600, %v1616
        %v1633 = vadd.f32 %v1601, %v1617
        %v1634 = vadd.f32 %v1602, %v1618
        %v1635 = vadd.f32 %v1603, %v1619
        %v1636 = vadd.f32 %v1604, %v1620
        %v1637 = vadd.f32 %v1605, %v1621
        %v1638 = vadd.f32 %v1606, %v1622
        %v1639 = vadd.f32 %v1607, %v1623
        %v1640 = vadd.f32 %v1608, %v1624
        %v1641 = vadd.f32 %v1609, %v1625
        %v1642 = vadd.f32 %v1610, %v1626
        %v1643 = vadd.f32 %v1611, %v1627
        %v1644 = vadd.f32 %v1612, %v1628
        %v1645 = vmul.f32 %v1373, %v531
        %v1646 = vmul.f32 %v1374, %v535
        %v1647 = vmul.f32 %v1375, %v531
        %v1648 = vmul.f32 %v1376, %v535
        %v1649 = vmul.f32 %v1377, %v531
        %v1650 = vmul.f32 %v1378, %v535
        %v1651 = vmul.f32 %v1379, %v531
        %v1652 = vmul.f32 %v1380, %v535
        %v1653 = vmul.f32 %v1381, %v531
        %v1654 = vmul.f32 %v1382, %v535
        %v1655 = vmul.f32 %v1383, %v531
        %v1656 = vmul.f32 %v1384, %v535
        %v1657 = vmul.f32 %v1385, %v531
        %v1658 = vmul.f32 %v1386, %v535
        %v1659 = vmul.f32 %v1387, %v531
        %v1660 = vmul.f32 %v1388, %v535
        %v1661 = vadd.f32 %v1629, %v1645
        %v1662 = vadd.f32 %v1630, %v1646
        %v1663 = vadd.f32 %v1631, %v1647
        %v1664 = vadd.f32 %v1632, %v1648
        %v1665 = vadd.f32 %v1633, %v1649
        %v1666 = vadd.f32 %v1634, %v1650
        %v1667 = vadd.f32 %v1635, %v1651
        %v1668 = vadd.f32 %v1636, %v1652
        %v1669 = vadd.f32 %v1637, %v1653
        %v1670 = vadd.f32 %v1638, %v1654
        %v1671 = vadd.f32 %v1639, %v1655
        %v1672 = vadd.f32 %v1640, %v1656
        %v1673 = vadd.f32 %v1641, %v1657
        %v1674 = vadd.f32 %v1642, %v1658
        %v1675 = vadd.f32 %v1643, %v1659
        %v1676 = vadd.f32 %v1644, %v1660
        %v1677 = vrot.slane %v1365, 1
        %v1678 = vrot.slane %v1367, 1
        %v1679 = vsel %vm568, %v1677, %v1678
        %v1680 = vrot.slane %v1366, 1
        %v1681 = vrot.slane %v1368, 1
        %v1682 = vsel %vm568, %v1680, %v1681
        %v1683 = vrot.slane %v1369, 1
        %v1684 = vrot.slane %v1371, 1
        %v1685 = vsel %vm568, %v1683, %v1684
        %v1686 = vrot.slane %v1370, 1
        %v1687 = vrot.slane %v1372, 1
        %v1688 = vsel %vm568, %v1686, %v1687
        %v1689 = vrot.slane %v1373, 1
        %v1690 = vrot.slane %v1375, 1
        %v1691 = vsel %vm568, %v1689, %v1690
        %v1692 = vrot.slane %v1374, 1
        %v1693 = vrot.slane %v1376, 1
        %v1694 = vsel %vm568, %v1692, %v1693
        %v1695 = vrot.slane %v1377, 1
        %v1696 = vrot.slane %v1379, 1
        %v1697 = vsel %vm568, %v1695, %v1696
        %v1698 = vrot.slane %v1378, 1
        %v1699 = vrot.slane %v1380, 1
        %v1700 = vsel %vm568, %v1698, %v1699
        %v1701 = vrot.slane %v1381, 1
        %v1702 = vrot.slane %v1383, 1
        %v1703 = vsel %vm568, %v1701, %v1702
        %v1704 = vrot.slane %v1382, 1
        %v1705 = vrot.slane %v1384, 1
        %v1706 = vsel %vm568, %v1704, %v1705
        %v1707 = vrot.slane %v1385, 1
        %v1708 = vrot.slane %v1387, 1
        %v1709 = vsel %vm568, %v1707, %v1708
        %v1710 = vrot.slane %v1386, 1
        %v1711 = vrot.slane %v1388, 1
        %v1712 = vsel %vm568, %v1710, %v1711
        %v1737 = vsel %vm568, %v1678, 0.0
        %v1738 = vsel %vm568, %v1681, 0.0
        %v1739 = vsel %vm568, %v1684, 0.0
        %v1740 = vsel %vm568, %v1687, 0.0
        %v1741 = vsel %vm568, %v1690, 0.0
        %v1742 = vsel %vm568, %v1693, 0.0
        %v1743 = vsel %vm568, %v1696, 0.0
        %v1744 = vsel %vm568, %v1699, 0.0
        %v1745 = vsel %vm568, %v1702, 0.0
        %v1746 = vsel %vm568, %v1705, 0.0
        %v1747 = vsel %vm568, %v1708, 0.0
        %v1748 = vsel %vm568, %v1711, 0.0
        %v1749 = vmul.f32 %v1679, %v632
        %v1750 = vmul.f32 %v1682, %v636
        %v1751 = vmul.f32 %v1737, %v632
        %v1752 = vmul.f32 %v1738, %v636
        %v1753 = vmul.f32 %v1685, %v632
        %v1754 = vmul.f32 %v1688, %v636
        %v1755 = vmul.f32 %v1739, %v632
        %v1756 = vmul.f32 %v1740, %v636
        %v1757 = vmul.f32 %v1691, %v632
        %v1758 = vmul.f32 %v1694, %v636
        %v1759 = vmul.f32 %v1741, %v632
        %v1760 = vmul.f32 %v1742, %v636
        %v1761 = vmul.f32 %v1697, %v632
        %v1762 = vmul.f32 %v1700, %v636
        %v1763 = vmul.f32 %v1743, %v632
        %v1764 = vmul.f32 %v1744, %v636
        %v1765 = vadd.f32 %v1661, %v1749
        %v1766 = vadd.f32 %v1662, %v1750
        %v1767 = vadd.f32 %v1663, %v1751
        %v1768 = vadd.f32 %v1664, %v1752
        %v1769 = vadd.f32 %v1665, %v1753
        %v1770 = vadd.f32 %v1666, %v1754
        %v1771 = vadd.f32 %v1667, %v1755
        %v1772 = vadd.f32 %v1668, %v1756
        %v1773 = vadd.f32 %v1669, %v1757
        %v1774 = vadd.f32 %v1670, %v1758
        %v1775 = vadd.f32 %v1671, %v1759
        %v1776 = vadd.f32 %v1672, %v1760
        %v1777 = vadd.f32 %v1673, %v1761
        %v1778 = vadd.f32 %v1674, %v1762
        %v1779 = vadd.f32 %v1675, %v1763
        %v1780 = vadd.f32 %v1676, %v1764
        %v1781 = vmul.f32 %v1685, %v670
        %v1782 = vmul.f32 %v1688, %v674
        %v1783 = vmul.f32 %v1739, %v670
        %v1784 = vmul.f32 %v1740, %v674
        %v1785 = vmul.f32 %v1691, %v670
        %v1786 = vmul.f32 %v1694, %v674
        %v1787 = vmul.f32 %v1741, %v670
        %v1788 = vmul.f32 %v1742, %v674
        %v1789 = vmul.f32 %v1697, %v670
        %v1790 = vmul.f32 %v1700, %v674
        %v1791 = vmul.f32 %v1743, %v670
        %v1792 = vmul.f32 %v1744, %v674
        %v1793 = vmul.f32 %v1703, %v670
        %v1794 = vmul.f32 %v1706, %v674
        %v1795 = vmul.f32 %v1745, %v670
        %v1796 = vmul.f32 %v1746, %v674
        %v1797 = vadd.f32 %v1765, %v1781
        %v1798 = vadd.f32 %v1766, %v1782
        %v1799 = vadd.f32 %v1767, %v1783
        %v1800 = vadd.f32 %v1768, %v1784
        %v1801 = vadd.f32 %v1769, %v1785
        %v1802 = vadd.f32 %v1770, %v1786
        %v1803 = vadd.f32 %v1771, %v1787
        %v1804 = vadd.f32 %v1772, %v1788
        %v1805 = vadd.f32 %v1773, %v1789
        %v1806 = vadd.f32 %v1774, %v1790
        %v1807 = vadd.f32 %v1775, %v1791
        %v1808 = vadd.f32 %v1776, %v1792
        %v1809 = vadd.f32 %v1777, %v1793
        %v1810 = vadd.f32 %v1778, %v1794
        %v1811 = vadd.f32 %v1779, %v1795
        %v1812 = vadd.f32 %v1780, %v1796
        %v1813 = vmul.f32 %v1691, %v710
        %v1814 = vmul.f32 %v1694, %v714
        %v1815 = vmul.f32 %v1741, %v710
        %v1816 = vmul.f32 %v1742, %v714
        %v1817 = vmul.f32 %v1697, %v710
        %v1818 = vmul.f32 %v1700, %v714
        %v1819 = vmul.f32 %v1743, %v710
        %v1820 = vmul.f32 %v1744, %v714
        %v1821 = vmul.f32 %v1703, %v710
        %v1822 = vmul.f32 %v1706, %v714
        %v1823 = vmul.f32 %v1745, %v710
        %v1824 = vmul.f32 %v1746, %v714
        %v1825 = vmul.f32 %v1709, %v710
        %v1826 = vmul.f32 %v1712, %v714
        %v1827 = vmul.f32 %v1747, %v710
        %v1828 = vmul.f32 %v1748, %v714
        %v1829 = vadd.f32 %v1797, %v1813
        %v1830 = vadd.f32 %v1798, %v1814
        %v1831 = vadd.f32 %v1799, %v1815
        %v1832 = vadd.f32 %v1800, %v1816
        %v1833 = vadd.f32 %v1801, %v1817
        %v1834 = vadd.f32 %v1802, %v1818
        %v1835 = vadd.f32 %v1803, %v1819
        %v1836 = vadd.f32 %v1804, %v1820
        %v1837 = vadd.f32 %v1805, %v1821
        %v1838 = vadd.f32 %v1806, %v1822
        %v1839 = vadd.f32 %v1807, %v1823
        %v1840 = vadd.f32 %v1808, %v1824
        %v1841 = vadd.f32 %v1809, %v1825
        %v1842 = vadd.f32 %v1810, %v1826
        %v1843 = vadd.f32 %v1811, %v1827
        %v1844 = vadd.f32 %v1812, %v1828
        %v1845 = vpack.c.bf16 %v1831, %v1829
        %v1846 = vpack.c.bf16 %v1832, %v1830
        %v1847 = vpack.c.bf16 %v1835, %v1833
        %v1848 = vpack.c.bf16 %v1836, %v1834
        %v1849 = vpack.c.bf16 %v1839, %v1837
        %v1850 = vpack.c.bf16 %v1840, %v1838
        %v1851 = vpack.c.bf16 %v1843, %v1841
        %v1852 = vpack.c.bf16 %v1844, %v1842
        %v1861 = vunpack.c.l.b16 %v1845
        %v1862 = vunpack.c.l.b16 %v1846
        %v1863 = vunpack.c.h.b16 %v1845
        %v1864 = vunpack.c.h.b16 %v1846
        %v1865 = vunpack.c.l.b16 %v1847
        %v1866 = vunpack.c.l.b16 %v1848
        %v1867 = vunpack.c.h.b16 %v1847
        %v1868 = vunpack.c.h.b16 %v1848
        %v1869 = vunpack.c.l.b16 %v1849
        %v1870 = vunpack.c.l.b16 %v1850
        %v1871 = vunpack.c.h.b16 %v1849
        %v1872 = vunpack.c.h.b16 %v1850
        %v1873 = vunpack.c.l.b16 %v1851
        %v1874 = vunpack.c.l.b16 %v1852
        %v1875 = vunpack.c.h.b16 %v1851
        %v1876 = vunpack.c.h.b16 %v1852
        %v1877 = vpack.c.b16 %v1862, %v1861
        %v1878 = vpack.c.b16 %v1864, %v1863
        %v1879 = vpack.c.b16 %v1866, %v1865
        %v1880 = vpack.c.b16 %v1868, %v1867
        %v1881 = vpack.c.b16 %v1870, %v1869
        %v1882 = vpack.c.b16 %v1872, %v1871
        %v1883 = vpack.c.b16 %v1874, %v1873
        %v1884 = vpack.c.b16 %v1876, %v1875
        %1893 = vst [vmem:[#allocation2 + $0x80] sm:$0xff] %v1877
        %1894 = vst [vmem:[#allocation2 + $0x88] sm:$0xff] %v1878
        %1895 = vst [vmem:[#allocation2 + $0x90] sm:$0xff] %v1879
        %1896 = vst [vmem:[#allocation2 + $0x98] sm:$0xff] %v1880
        %1897 = vst [vmem:[#allocation2 + $0xa0] sm:$0xff] %v1881
        %1898 = vst [vmem:[#allocation2 + $0xa8] sm:$0xff] %v1882
        %1899 = vst [vmem:[#allocation2 + $0xb0] sm:$0xff] %v1883
        %1900 = vst [vmem:[#allocation2 + $0xb8] sm:$0xff] %v1884
        %s1901 = scalar_lea.vmem %s187, 176 [#allocation3]
        %v1902 = vld [vmem:[%s1901] sm:$0xff]
        %v1903 = vld [vmem:[%s1901 + $0x8] sm:$0xff]
        %v1904 = vld [vmem:[%s1901 + $0x10] sm:$0xff]
        %v1905 = vld [vmem:[%s1901 + $0x18] sm:$0xff]
        %v1906 = vld [vmem:[%s1901 + $0x20] sm:$0xff]
        %v1907 = vld [vmem:[%s1901 + $0x28] sm:$0xff]
        %v1908 = vld [vmem:[%s1901 + $0x30] sm:$0xff]
        %v1909 = vld [vmem:[%s1901 + $0x38] sm:$0xff]
        %v1910 = vld [vmem:[%s1901 + $0x40] sm:$0xff]
        %v1911 = vld [vmem:[%s1901 + $0x48] sm:$0xff]
        %v1912 = vunpack.c.l.bf16 %v1902
        %v1913 = vunpack.c.h.bf16 %v1902
        %v1914 = vunpack.c.l.bf16 %v1903
        %v1915 = vunpack.c.h.bf16 %v1903
        %v1916 = vunpack.c.l.bf16 %v1904
        %v1917 = vunpack.c.h.bf16 %v1904
        %v1918 = vunpack.c.l.bf16 %v1905
        %v1919 = vunpack.c.h.bf16 %v1905
        %v1920 = vunpack.c.l.bf16 %v1906
        %v1921 = vunpack.c.h.bf16 %v1906
        %v1922 = vunpack.c.l.bf16 %v1907
        %v1923 = vunpack.c.h.bf16 %v1907
        %v1924 = vunpack.c.l.bf16 %v1908
        %v1925 = vunpack.c.h.bf16 %v1908
        %v1926 = vunpack.c.l.bf16 %v1909
        %v1927 = vunpack.c.h.bf16 %v1909
        %v1928 = vunpack.c.l.bf16 %v1910
        %v1929 = vunpack.c.h.bf16 %v1910
        %v1930 = vunpack.c.l.bf16 %v1911
        %v1931 = vunpack.c.h.bf16 %v1911
        %v1952 = vrot.slane %v1912, 7
        %v1953 = vrot.slane %v1913, 7
        %v1954 = vrot.slane %v1914, 7
        %v1955 = vsel %vm273, %v1952, %v1954
        %v1956 = vrot.slane %v1915, 7
        %v1957 = vsel %vm273, %v1953, %v1956
        %v1958 = vrot.slane %v1916, 7
        %v1959 = vrot.slane %v1917, 7
        %v1960 = vrot.slane %v1918, 7
        %v1961 = vsel %vm273, %v1958, %v1960
        %v1962 = vrot.slane %v1919, 7
        %v1963 = vsel %vm273, %v1959, %v1962
        %v1964 = vrot.slane %v1920, 7
        %v1965 = vrot.slane %v1921, 7
        %v1966 = vrot.slane %v1922, 7
        %v1967 = vsel %vm273, %v1964, %v1966
        %v1968 = vrot.slane %v1923, 7
        %v1969 = vsel %vm273, %v1965, %v1968
        %v1970 = vrot.slane %v1924, 7
        %v1971 = vrot.slane %v1925, 7
        %v1972 = vrot.slane %v1926, 7
        %v1973 = vsel %vm273, %v1970, %v1972
        %v1974 = vrot.slane %v1927, 7
        %v1975 = vsel %vm273, %v1971, %v1974
        %v1976 = vrot.slane %v1928, 7
        %v1977 = vrot.slane %v1929, 7
        %v1978 = vrot.slane %v1930, 7
        %v1979 = vsel %vm273, %v1976, %v1978
        %v1980 = vrot.slane %v1931, 7
        %v1981 = vsel %vm273, %v1977, %v1980
        %v2002 = vsel %vm273, 0.0, %v1952
        %v2003 = vsel %vm273, 0.0, %v1953
        %v2004 = vsel %vm273, 0.0, %v1958
        %v2005 = vsel %vm273, 0.0, %v1959
        %v2006 = vsel %vm273, 0.0, %v1964
        %v2007 = vsel %vm273, 0.0, %v1965
        %v2008 = vsel %vm273, 0.0, %v1970
        %v2009 = vsel %vm273, 0.0, %v1971
        %v2010 = vsel %vm273, 0.0, %v1976
        %v2011 = vsel %vm273, 0.0, %v1977
        %v2012 = vmul.f32 %v2002, %v337
        %v2013 = vmul.f32 %v2003, %v341
        %v2014 = vmul.f32 %v1955, %v337
        %v2015 = vmul.f32 %v1957, %v341
        %v2016 = vmul.f32 %v2004, %v337
        %v2017 = vmul.f32 %v2005, %v341
        %v2018 = vmul.f32 %v1961, %v337
        %v2019 = vmul.f32 %v1963, %v341
        %v2020 = vmul.f32 %v2006, %v337
        %v2021 = vmul.f32 %v2007, %v341
        %v2022 = vmul.f32 %v1967, %v337
        %v2023 = vmul.f32 %v1969, %v341
        %v2024 = vmul.f32 %v2008, %v337
        %v2025 = vmul.f32 %v2009, %v341
        %v2026 = vmul.f32 %v1973, %v337
        %v2027 = vmul.f32 %v1975, %v341
        %v2028 = vadd.f32 %v2012, 0.0
        %v2029 = vadd.f32 %v2013, 0.0
        %v2030 = vadd.f32 %v2014, 0.0
        %v2031 = vadd.f32 %v2015, 0.0
        %v2032 = vadd.f32 %v2016, 0.0
        %v2033 = vadd.f32 %v2017, 0.0
        %v2034 = vadd.f32 %v2018, 0.0
        %v2035 = vadd.f32 %v2019, 0.0
        %v2036 = vadd.f32 %v2020, 0.0
        %v2037 = vadd.f32 %v2021, 0.0
        %v2038 = vadd.f32 %v2022, 0.0
        %v2039 = vadd.f32 %v2023, 0.0
        %v2040 = vadd.f32 %v2024, 0.0
        %v2041 = vadd.f32 %v2025, 0.0
        %v2042 = vadd.f32 %v2026, 0.0
        %v2043 = vadd.f32 %v2027, 0.0
        %v2044 = vmul.f32 %v2004, %v373
        %v2045 = vmul.f32 %v2005, %v377
        %v2046 = vmul.f32 %v1961, %v373
        %v2047 = vmul.f32 %v1963, %v377
        %v2048 = vmul.f32 %v2006, %v373
        %v2049 = vmul.f32 %v2007, %v377
        %v2050 = vmul.f32 %v1967, %v373
        %v2051 = vmul.f32 %v1969, %v377
        %v2052 = vmul.f32 %v2008, %v373
        %v2053 = vmul.f32 %v2009, %v377
        %v2054 = vmul.f32 %v1973, %v373
        %v2055 = vmul.f32 %v1975, %v377
        %v2056 = vmul.f32 %v2010, %v373
        %v2057 = vmul.f32 %v2011, %v377
        %v2058 = vmul.f32 %v1979, %v373
        %v2059 = vmul.f32 %v1981, %v377
        %v2060 = vadd.f32 %v2028, %v2044
        %v2061 = vadd.f32 %v2029, %v2045
        %v2062 = vadd.f32 %v2030, %v2046
        %v2063 = vadd.f32 %v2031, %v2047
        %v2064 = vadd.f32 %v2032, %v2048
        %v2065 = vadd.f32 %v2033, %v2049
        %v2066 = vadd.f32 %v2034, %v2050
        %v2067 = vadd.f32 %v2035, %v2051
        %v2068 = vadd.f32 %v2036, %v2052
        %v2069 = vadd.f32 %v2037, %v2053
        %v2070 = vadd.f32 %v2038, %v2054
        %v2071 = vadd.f32 %v2039, %v2055
        %v2072 = vadd.f32 %v2040, %v2056
        %v2073 = vadd.f32 %v2041, %v2057
        %v2074 = vadd.f32 %v2042, %v2058
        %v2075 = vadd.f32 %v2043, %v2059
        %v2076 = vmul.f32 %v2006, %v413
        %v2077 = vmul.f32 %v2007, %v417
        %v2078 = vmul.f32 %v1967, %v413
        %v2079 = vmul.f32 %v1969, %v417
        %v2080 = vmul.f32 %v2008, %v413
        %v2081 = vmul.f32 %v2009, %v417
        %v2082 = vmul.f32 %v1973, %v413
        %v2083 = vmul.f32 %v1975, %v417
        %v2084 = vmul.f32 %v2010, %v413
        %v2085 = vmul.f32 %v2011, %v417
        %v2086 = vmul.f32 %v1979, %v413
        %v2087 = vmul.f32 %v1981, %v417
        %v2088 = vmul.f32 %v413, 0.0
        %v2089 = vmul.f32 %v417, 0.0
        %v2090 = vadd.f32 %v2060, %v2076
        %v2091 = vadd.f32 %v2061, %v2077
        %v2092 = vadd.f32 %v2062, %v2078
        %v2093 = vadd.f32 %v2063, %v2079
        %v2094 = vadd.f32 %v2064, %v2080
        %v2095 = vadd.f32 %v2065, %v2081
        %v2096 = vadd.f32 %v2066, %v2082
        %v2097 = vadd.f32 %v2067, %v2083
        %v2098 = vadd.f32 %v2068, %v2084
        %v2099 = vadd.f32 %v2069, %v2085
        %v2100 = vadd.f32 %v2070, %v2086
        %v2101 = vadd.f32 %v2071, %v2087
        %v2102 = vadd.f32 %v2072, %v2088
        %v2103 = vadd.f32 %v2073, %v2089
        %v2104 = vadd.f32 %v2074, %v2088
        %v2105 = vadd.f32 %v2075, %v2089
        %v2106 = vmul.f32 %v1912, %v453
        %v2107 = vmul.f32 %v1913, %v457
        %v2108 = vmul.f32 %v1914, %v453
        %v2109 = vmul.f32 %v1915, %v457
        %v2110 = vmul.f32 %v1916, %v453
        %v2111 = vmul.f32 %v1917, %v457
        %v2112 = vmul.f32 %v1918, %v453
        %v2113 = vmul.f32 %v1919, %v457
        %v2114 = vmul.f32 %v1920, %v453
        %v2115 = vmul.f32 %v1921, %v457
        %v2116 = vmul.f32 %v1922, %v453
        %v2117 = vmul.f32 %v1923, %v457
        %v2118 = vmul.f32 %v1924, %v453
        %v2119 = vmul.f32 %v1925, %v457
        %v2120 = vmul.f32 %v1926, %v453
        %v2121 = vmul.f32 %v1927, %v457
        %v2122 = vadd.f32 %v2090, %v2106
        %v2123 = vadd.f32 %v2091, %v2107
        %v2124 = vadd.f32 %v2092, %v2108
        %v2125 = vadd.f32 %v2093, %v2109
        %v2126 = vadd.f32 %v2094, %v2110
        %v2127 = vadd.f32 %v2095, %v2111
        %v2128 = vadd.f32 %v2096, %v2112
        %v2129 = vadd.f32 %v2097, %v2113
        %v2130 = vadd.f32 %v2098, %v2114
        %v2131 = vadd.f32 %v2099, %v2115
        %v2132 = vadd.f32 %v2100, %v2116
        %v2133 = vadd.f32 %v2101, %v2117
        %v2134 = vadd.f32 %v2102, %v2118
        %v2135 = vadd.f32 %v2103, %v2119
        %v2136 = vadd.f32 %v2104, %v2120
        %v2137 = vadd.f32 %v2105, %v2121
        %v2138 = vmul.f32 %v1916, %v491
        %v2139 = vmul.f32 %v1917, %v495
        %v2140 = vmul.f32 %v1918, %v491
        %v2141 = vmul.f32 %v1919, %v495
        %v2142 = vmul.f32 %v1920, %v491
        %v2143 = vmul.f32 %v1921, %v495
        %v2144 = vmul.f32 %v1922, %v491
        %v2145 = vmul.f32 %v1923, %v495
        %v2146 = vmul.f32 %v1924, %v491
        %v2147 = vmul.f32 %v1925, %v495
        %v2148 = vmul.f32 %v1926, %v491
        %v2149 = vmul.f32 %v1927, %v495
        %v2150 = vmul.f32 %v1928, %v491
        %v2151 = vmul.f32 %v1929, %v495
        %v2152 = vmul.f32 %v1930, %v491
        %v2153 = vmul.f32 %v1931, %v495
        %v2154 = vadd.f32 %v2122, %v2138
        %v2155 = vadd.f32 %v2123, %v2139
        %v2156 = vadd.f32 %v2124, %v2140
        %v2157 = vadd.f32 %v2125, %v2141
        %v2158 = vadd.f32 %v2126, %v2142
        %v2159 = vadd.f32 %v2127, %v2143
        %v2160 = vadd.f32 %v2128, %v2144
        %v2161 = vadd.f32 %v2129, %v2145
        %v2162 = vadd.f32 %v2130, %v2146
        %v2163 = vadd.f32 %v2131, %v2147
        %v2164 = vadd.f32 %v2132, %v2148
        %v2165 = vadd.f32 %v2133, %v2149
        %v2166 = vadd.f32 %v2134, %v2150
        %v2167 = vadd.f32 %v2135, %v2151
        %v2168 = vadd.f32 %v2136, %v2152
        %v2169 = vadd.f32 %v2137, %v2153
        %v2170 = vmul.f32 %v1920, %v531
        %v2171 = vmul.f32 %v1921, %v535
        %v2172 = vmul.f32 %v1922, %v531
        %v2173 = vmul.f32 %v1923, %v535
        %v2174 = vmul.f32 %v1924, %v531
        %v2175 = vmul.f32 %v1925, %v535
        %v2176 = vmul.f32 %v1926, %v531
        %v2177 = vmul.f32 %v1927, %v535
        %v2178 = vmul.f32 %v1928, %v531
        %v2179 = vmul.f32 %v1929, %v535
        %v2180 = vmul.f32 %v1930, %v531
        %v2181 = vmul.f32 %v1931, %v535
        %v2182 = vmul.f32 %v531, 0.0
        %v2183 = vmul.f32 %v535, 0.0
        %v2184 = vadd.f32 %v2154, %v2170
        %v2185 = vadd.f32 %v2155, %v2171
        %v2186 = vadd.f32 %v2156, %v2172
        %v2187 = vadd.f32 %v2157, %v2173
        %v2188 = vadd.f32 %v2158, %v2174
        %v2189 = vadd.f32 %v2159, %v2175
        %v2190 = vadd.f32 %v2160, %v2176
        %v2191 = vadd.f32 %v2161, %v2177
        %v2192 = vadd.f32 %v2162, %v2178
        %v2193 = vadd.f32 %v2163, %v2179
        %v2194 = vadd.f32 %v2164, %v2180
        %v2195 = vadd.f32 %v2165, %v2181
        %v2196 = vadd.f32 %v2166, %v2182
        %v2197 = vadd.f32 %v2167, %v2183
        %v2198 = vadd.f32 %v2168, %v2182
        %v2199 = vadd.f32 %v2169, %v2183
        %v2200 = vrot.slane %v1912, 1
        %v2201 = vrot.slane %v1914, 1
        %v2202 = vsel %vm568, %v2200, %v2201
        %v2203 = vrot.slane %v1913, 1
        %v2204 = vrot.slane %v1915, 1
        %v2205 = vsel %vm568, %v2203, %v2204
        %v2206 = vrot.slane %v1916, 1
        %v2207 = vrot.slane %v1918, 1
        %v2208 = vsel %vm568, %v2206, %v2207
        %v2209 = vrot.slane %v1917, 1
        %v2210 = vrot.slane %v1919, 1
        %v2211 = vsel %vm568, %v2209, %v2210
        %v2212 = vrot.slane %v1920, 1
        %v2213 = vrot.slane %v1922, 1
        %v2214 = vsel %vm568, %v2212, %v2213
        %v2215 = vrot.slane %v1921, 1
        %v2216 = vrot.slane %v1923, 1
        %v2217 = vsel %vm568, %v2215, %v2216
        %v2218 = vrot.slane %v1924, 1
        %v2219 = vrot.slane %v1926, 1
        %v2220 = vsel %vm568, %v2218, %v2219
        %v2221 = vrot.slane %v1925, 1
        %v2222 = vrot.slane %v1927, 1
        %v2223 = vsel %vm568, %v2221, %v2222
        %v2224 = vrot.slane %v1928, 1
        %v2225 = vrot.slane %v1930, 1
        %v2226 = vsel %vm568, %v2224, %v2225
        %v2227 = vrot.slane %v1929, 1
        %v2228 = vrot.slane %v1931, 1
        %v2229 = vsel %vm568, %v2227, %v2228
        %v2250 = vsel %vm568, %v2201, 0.0
        %v2251 = vsel %vm568, %v2204, 0.0
        %v2252 = vsel %vm568, %v2207, 0.0
        %v2253 = vsel %vm568, %v2210, 0.0
        %v2254 = vsel %vm568, %v2213, 0.0
        %v2255 = vsel %vm568, %v2216, 0.0
        %v2256 = vsel %vm568, %v2219, 0.0
        %v2257 = vsel %vm568, %v2222, 0.0
        %v2258 = vsel %vm568, %v2225, 0.0
        %v2259 = vsel %vm568, %v2228, 0.0
        %v2260 = vmul.f32 %v2202, %v632
        %v2261 = vmul.f32 %v2205, %v636
        %v2262 = vmul.f32 %v2250, %v632
        %v2263 = vmul.f32 %v2251, %v636
        %v2264 = vmul.f32 %v2208, %v632
        %v2265 = vmul.f32 %v2211, %v636
        %v2266 = vmul.f32 %v2252, %v632
        %v2267 = vmul.f32 %v2253, %v636
        %v2268 = vmul.f32 %v2214, %v632
        %v2269 = vmul.f32 %v2217, %v636
        %v2270 = vmul.f32 %v2254, %v632
        %v2271 = vmul.f32 %v2255, %v636
        %v2272 = vmul.f32 %v2220, %v632
        %v2273 = vmul.f32 %v2223, %v636
        %v2274 = vmul.f32 %v2256, %v632
        %v2275 = vmul.f32 %v2257, %v636
        %v2276 = vadd.f32 %v2184, %v2260
        %v2277 = vadd.f32 %v2185, %v2261
        %v2278 = vadd.f32 %v2186, %v2262
        %v2279 = vadd.f32 %v2187, %v2263
        %v2280 = vadd.f32 %v2188, %v2264
        %v2281 = vadd.f32 %v2189, %v2265
        %v2282 = vadd.f32 %v2190, %v2266
        %v2283 = vadd.f32 %v2191, %v2267
        %v2284 = vadd.f32 %v2192, %v2268
        %v2285 = vadd.f32 %v2193, %v2269
        %v2286 = vadd.f32 %v2194, %v2270
        %v2287 = vadd.f32 %v2195, %v2271
        %v2288 = vadd.f32 %v2196, %v2272
        %v2289 = vadd.f32 %v2197, %v2273
        %v2290 = vadd.f32 %v2198, %v2274
        %v2291 = vadd.f32 %v2199, %v2275
        %v2292 = vmul.f32 %v2208, %v670
        %v2293 = vmul.f32 %v2211, %v674
        %v2294 = vmul.f32 %v2252, %v670
        %v2295 = vmul.f32 %v2253, %v674
        %v2296 = vmul.f32 %v2214, %v670
        %v2297 = vmul.f32 %v2217, %v674
        %v2298 = vmul.f32 %v2254, %v670
        %v2299 = vmul.f32 %v2255, %v674
        %v2300 = vmul.f32 %v2220, %v670
        %v2301 = vmul.f32 %v2223, %v674
        %v2302 = vmul.f32 %v2256, %v670
        %v2303 = vmul.f32 %v2257, %v674
        %v2304 = vmul.f32 %v2226, %v670
        %v2305 = vmul.f32 %v2229, %v674
        %v2306 = vmul.f32 %v2258, %v670
        %v2307 = vmul.f32 %v2259, %v674
        %v2308 = vadd.f32 %v2276, %v2292
        %v2309 = vadd.f32 %v2277, %v2293
        %v2310 = vadd.f32 %v2278, %v2294
        %v2311 = vadd.f32 %v2279, %v2295
        %v2312 = vadd.f32 %v2280, %v2296
        %v2313 = vadd.f32 %v2281, %v2297
        %v2314 = vadd.f32 %v2282, %v2298
        %v2315 = vadd.f32 %v2283, %v2299
        %v2316 = vadd.f32 %v2284, %v2300
        %v2317 = vadd.f32 %v2285, %v2301
        %v2318 = vadd.f32 %v2286, %v2302
        %v2319 = vadd.f32 %v2287, %v2303
        %v2320 = vadd.f32 %v2288, %v2304
        %v2321 = vadd.f32 %v2289, %v2305
        %v2322 = vadd.f32 %v2290, %v2306
        %v2323 = vadd.f32 %v2291, %v2307
        %v2324 = vmul.f32 %v2214, %v710
        %v2325 = vmul.f32 %v2217, %v714
        %v2326 = vmul.f32 %v2254, %v710
        %v2327 = vmul.f32 %v2255, %v714
        %v2328 = vmul.f32 %v2220, %v710
        %v2329 = vmul.f32 %v2223, %v714
        %v2330 = vmul.f32 %v2256, %v710
        %v2331 = vmul.f32 %v2257, %v714
        %v2332 = vmul.f32 %v2226, %v710
        %v2333 = vmul.f32 %v2229, %v714
        %v2334 = vmul.f32 %v2258, %v710
        %v2335 = vmul.f32 %v2259, %v714
        %v2336 = vmul.f32 %v710, 0.0
        %v2337 = vmul.f32 %v714, 0.0
        %v2338 = vadd.f32 %v2308, %v2324
        %v2339 = vadd.f32 %v2309, %v2325
        %v2340 = vadd.f32 %v2310, %v2326
        %v2341 = vadd.f32 %v2311, %v2327
        %v2342 = vadd.f32 %v2312, %v2328
        %v2343 = vadd.f32 %v2313, %v2329
        %v2344 = vadd.f32 %v2314, %v2330
        %v2345 = vadd.f32 %v2315, %v2331
        %v2346 = vadd.f32 %v2316, %v2332
        %v2347 = vadd.f32 %v2317, %v2333
        %v2348 = vadd.f32 %v2318, %v2334
        %v2349 = vadd.f32 %v2319, %v2335
        %v2350 = vadd.f32 %v2320, %v2336
        %v2351 = vadd.f32 %v2321, %v2337
        %v2352 = vadd.f32 %v2322, %v2336
        %v2353 = vadd.f32 %v2323, %v2337
        %v2354 = vpack.c.bf16 %v2340, %v2338
        %v2355 = vpack.c.bf16 %v2341, %v2339
        %v2356 = vpack.c.bf16 %v2344, %v2342
        %v2357 = vpack.c.bf16 %v2345, %v2343
        %v2358 = vpack.c.bf16 %v2348, %v2346
        %v2359 = vpack.c.bf16 %v2349, %v2347
        %v2360 = vpack.c.bf16 %v2352, %v2350
        %v2361 = vpack.c.bf16 %v2353, %v2351
        %v2370 = vunpack.c.l.b16 %v2354
        %v2371 = vunpack.c.l.b16 %v2355
        %v2372 = vunpack.c.h.b16 %v2354
        %v2373 = vunpack.c.h.b16 %v2355
        %v2374 = vunpack.c.l.b16 %v2356
        %v2375 = vunpack.c.l.b16 %v2357
        %v2376 = vunpack.c.h.b16 %v2356
        %v2377 = vunpack.c.h.b16 %v2357
        %v2378 = vunpack.c.l.b16 %v2358
        %v2379 = vunpack.c.l.b16 %v2359
        %v2380 = vunpack.c.h.b16 %v2358
        %v2381 = vunpack.c.h.b16 %v2359
        %v2382 = vunpack.c.l.b16 %v2360
        %v2383 = vunpack.c.l.b16 %v2361
        %v2384 = vunpack.c.h.b16 %v2360
        %v2385 = vunpack.c.h.b16 %v2361
        %v2386 = vpack.c.b16 %v2371, %v2370
        %v2387 = vpack.c.b16 %v2373, %v2372
        %v2388 = vpack.c.b16 %v2375, %v2374
        %v2389 = vpack.c.b16 %v2377, %v2376
        %v2390 = vpack.c.b16 %v2379, %v2378
        %v2391 = vpack.c.b16 %v2381, %v2380
        %v2392 = vpack.c.b16 %v2383, %v2382
        %v2393 = vpack.c.b16 %v2385, %v2384
        %2402 = vst [vmem:[#allocation2 + $0xc0] sm:$0xff] %v2386
        %2403 = vst [vmem:[#allocation2 + $0xc8] sm:$0xff] %v2387
        %2404 = vst [vmem:[#allocation2 + $0xd0] sm:$0xff] %v2388
        %2405 = vst [vmem:[#allocation2 + $0xd8] sm:$0xff] %v2389
        %2406 = vst [vmem:[#allocation2 + $0xe0] sm:$0xff] %v2390
        %2407 = vst [vmem:[#allocation2 + $0xe8] sm:$0xff] %v2391
        %2408 = vst [vmem:[#allocation2 + $0xf0] sm:$0xff] %v2392
        %2409 = vst [vmem:[#allocation2 + $0xf8] sm:$0xff] %v2393
        %v2410 = vld [vmem:[#allocation2] sm:$0xff]
        %v2411 = vld [vmem:[#allocation2 + $0x8] sm:$0xff]
        %v2412 = vld [vmem:[#allocation2 + $0x10] sm:$0xff]
        %v2413 = vld [vmem:[#allocation2 + $0x18] sm:$0xff]
        %v2414 = vld [vmem:[#allocation2 + $0x20] sm:$0xff]
        %v2415 = vld [vmem:[#allocation2 + $0x28] sm:$0xff]
        %v2416 = vld [vmem:[#allocation2 + $0x30] sm:$0xff]
        %v2417 = vld [vmem:[#allocation2 + $0x38] sm:$0xff]
        %v2418 = vld [vmem:[#allocation2 + $0x40] sm:$0xff]
        %v2419 = vld [vmem:[#allocation2 + $0x48] sm:$0xff]
        %v2420 = vld [vmem:[#allocation2 + $0x50] sm:$0xff]
        %v2421 = vld [vmem:[#allocation2 + $0x58] sm:$0xff]
        %v2422 = vld [vmem:[#allocation2 + $0x60] sm:$0xff]
        %v2423 = vld [vmem:[#allocation2 + $0x68] sm:$0xff]
        %v2424 = vld [vmem:[#allocation2 + $0x70] sm:$0xff]
        %v2425 = vld [vmem:[#allocation2 + $0x78] sm:$0xff]
        %v2426 = vld [vmem:[#allocation2 + $0x80] sm:$0xff]
        %v2427 = vld [vmem:[#allocation2 + $0x88] sm:$0xff]
        %v2428 = vld [vmem:[#allocation2 + $0x90] sm:$0xff]
        %v2429 = vld [vmem:[#allocation2 + $0x98] sm:$0xff]
        %v2430 = vld [vmem:[#allocation2 + $0xa0] sm:$0xff]
        %v2431 = vld [vmem:[#allocation2 + $0xa8] sm:$0xff]
        %v2432 = vld [vmem:[#allocation2 + $0xb0] sm:$0xff]
        %v2433 = vld [vmem:[#allocation2 + $0xb8] sm:$0xff]
        %v2434 = vld [vmem:[#allocation2 + $0xc0] sm:$0xff]
        %v2435 = vld [vmem:[#allocation2 + $0xc8] sm:$0xff]
        %v2436 = vld [vmem:[#allocation2 + $0xd0] sm:$0xff]
        %v2437 = vld [vmem:[#allocation2 + $0xd8] sm:$0xff]
        %v2438 = vld [vmem:[#allocation2 + $0xe0] sm:$0xff]
        %v2439 = vld [vmem:[#allocation2 + $0xe8] sm:$0xff]
        %v2440 = vld [vmem:[#allocation2 + $0xf0] sm:$0xff]
        %v2441 = vld [vmem:[#allocation2 + $0xf8] sm:$0xff]
        %v2442 = vld [vmem:[#allocation8] sm:$0xf]
        %v2443 = vld [vmem:[#allocation8 + $0x4] sm:$0xf]
        %v2444 = vld [vmem:[#allocation8 + $0x8] sm:$0xf]
        %v2445 = vld [vmem:[#allocation8 + $0xc] sm:$0xf]
        %v2446 = vld [vmem:[#allocation8 + $0x10] sm:$0xf]
        %v2447 = vld [vmem:[#allocation8 + $0x14] sm:$0xf]
        %v2448 = vld [vmem:[#allocation8 + $0x18] sm:$0xf]
        %v2449 = vld [vmem:[#allocation8 + $0x1c] sm:$0xf]
        %v2450 = vld [vmem:[#allocation8 + $0x20] sm:$0xf]
        %v2451 = vld [vmem:[#allocation8 + $0x24] sm:$0xf]
        %v2452 = vld [vmem:[#allocation8 + $0x28] sm:$0xf]
        %v2453 = vld [vmem:[#allocation8 + $0x2c] sm:$0xf]
        %v2454 = vld [vmem:[#allocation8 + $0x30] sm:$0xf]
        %v2455 = vld [vmem:[#allocation8 + $0x34] sm:$0xf]
        %v2456 = vld [vmem:[#allocation8 + $0x38] sm:$0xf]
        %v2457 = vld [vmem:[#allocation8 + $0x3c] sm:$0xf]
        %v2458 = vld [vmem:[#allocation8 + $0x40] sm:$0xf]
        %v2459 = vld [vmem:[#allocation8 + $0x44] sm:$0xf]
        %v2460 = vld [vmem:[#allocation8 + $0x48] sm:$0xf]
        %v2461 = vld [vmem:[#allocation8 + $0x4c] sm:$0xf]
        %v2462 = vld [vmem:[#allocation8 + $0x50] sm:$0xf]
        %v2463 = vld [vmem:[#allocation8 + $0x54] sm:$0xf]
        %v2464 = vld [vmem:[#allocation8 + $0x58] sm:$0xf]
        %v2465 = vld [vmem:[#allocation8 + $0x5c] sm:$0xf]
        %v2466 = vld [vmem:[#allocation8 + $0x60] sm:$0xf]
        %v2467 = vld [vmem:[#allocation8 + $0x64] sm:$0xf]
        %v2468 = vld [vmem:[#allocation8 + $0x68] sm:$0xf]
        %v2469 = vld [vmem:[#allocation8 + $0x6c] sm:$0xf]
        %v2470 = vld [vmem:[#allocation8 + $0x70] sm:$0xf]
        %v2471 = vld [vmem:[#allocation8 + $0x74] sm:$0xf]
        %v2472 = vld [vmem:[#allocation8 + $0x78] sm:$0xf]
        %v2473 = vld [vmem:[#allocation8 + $0x7c] sm:$0xf]
        %v2506 = vunpack.c.l.b16 %v2410
        %v2507 = vunpack.c.h.b16 %v2410
        %v2508 = vunpack.c.l.b16 %v2411
        %v2509 = vunpack.c.h.b16 %v2411
        %v2510 = vunpack.c.l.b16 %v2412
        %v2511 = vunpack.c.h.b16 %v2412
        %v2512 = vunpack.c.l.b16 %v2413
        %v2513 = vunpack.c.h.b16 %v2413
        %v2514 = vunpack.c.l.b16 %v2414
        %v2515 = vunpack.c.h.b16 %v2414
        %v2516 = vunpack.c.l.b16 %v2415
        %v2517 = vunpack.c.h.b16 %v2415
        %v2518 = vunpack.c.l.b16 %v2416
        %v2519 = vunpack.c.h.b16 %v2416
        %v2520 = vunpack.c.l.b16 %v2417
        %v2521 = vunpack.c.h.b16 %v2417
        %v2522 = vunpack.c.l.b16 %v2418
        %v2523 = vunpack.c.h.b16 %v2418
        %v2524 = vunpack.c.l.b16 %v2419
        %v2525 = vunpack.c.h.b16 %v2419
        %v2526 = vunpack.c.l.b16 %v2420
        %v2527 = vunpack.c.h.b16 %v2420
        %v2528 = vunpack.c.l.b16 %v2421
        %v2529 = vunpack.c.h.b16 %v2421
        %v2530 = vunpack.c.l.b16 %v2422
        %v2531 = vunpack.c.h.b16 %v2422
        %v2532 = vunpack.c.l.b16 %v2423
        %v2533 = vunpack.c.h.b16 %v2423
        %v2534 = vunpack.c.l.b16 %v2424
        %v2535 = vunpack.c.h.b16 %v2424
        %v2536 = vunpack.c.l.b16 %v2425
        %v2537 = vunpack.c.h.b16 %v2425
        %v2538 = vunpack.c.l.b16 %v2426
        %v2539 = vunpack.c.h.b16 %v2426
        %v2540 = vunpack.c.l.b16 %v2427
        %v2541 = vunpack.c.h.b16 %v2427
        %v2542 = vunpack.c.l.b16 %v2428
        %v2543 = vunpack.c.h.b16 %v2428
        %v2544 = vunpack.c.l.b16 %v2429
        %v2545 = vunpack.c.h.b16 %v2429
        %v2546 = vunpack.c.l.b16 %v2430
        %v2547 = vunpack.c.h.b16 %v2430
        %v2548 = vunpack.c.l.b16 %v2431
        %v2549 = vunpack.c.h.b16 %v2431
        %v2550 = vunpack.c.l.b16 %v2432
        %v2551 = vunpack.c.h.b16 %v2432
        %v2552 = vunpack.c.l.b16 %v2433
        %v2553 = vunpack.c.h.b16 %v2433
        %v2554 = vunpack.c.l.b16 %v2434
        %v2555 = vunpack.c.h.b16 %v2434
        %v2556 = vunpack.c.l.b16 %v2435
        %v2557 = vunpack.c.h.b16 %v2435
        %v2558 = vunpack.c.l.b16 %v2436
        %v2559 = vunpack.c.h.b16 %v2436
        %v2560 = vunpack.c.l.b16 %v2437
        %v2561 = vunpack.c.h.b16 %v2437
        %v2562 = vunpack.c.l.b16 %v2438
        %v2563 = vunpack.c.h.b16 %v2438
        %v2564 = vunpack.c.l.b16 %v2439
        %v2565 = vunpack.c.h.b16 %v2439
        %v2566 = vunpack.c.l.b16 %v2440
        %v2567 = vunpack.c.h.b16 %v2440
        %v2568 = vunpack.c.l.b16 %v2441
        %v2569 = vunpack.c.h.b16 %v2441
        %v2570 = vpack.c.b16 %v2508, %v2506
        %v2571 = vpack.c.b16 %v2509, %v2507
        %v2572 = vpack.c.b16 %v2512, %v2510
        %v2573 = vpack.c.b16 %v2513, %v2511
        %v2574 = vpack.c.b16 %v2516, %v2514
        %v2575 = vpack.c.b16 %v2517, %v2515
        %v2576 = vpack.c.b16 %v2520, %v2518
        %v2577 = vpack.c.b16 %v2521, %v2519
        %v2578 = vpack.c.b16 %v2524, %v2522
        %v2579 = vpack.c.b16 %v2525, %v2523
        %v2580 = vpack.c.b16 %v2528, %v2526
        %v2581 = vpack.c.b16 %v2529, %v2527
        %v2582 = vpack.c.b16 %v2532, %v2530
        %v2583 = vpack.c.b16 %v2533, %v2531
        %v2584 = vpack.c.b16 %v2536, %v2534
        %v2585 = vpack.c.b16 %v2537, %v2535
        %v2586 = vpack.c.b16 %v2540, %v2538
        %v2587 = vpack.c.b16 %v2541, %v2539
        %v2588 = vpack.c.b16 %v2544, %v2542
        %v2589 = vpack.c.b16 %v2545, %v2543
        %v2590 = vpack.c.b16 %v2548, %v2546
        %v2591 = vpack.c.b16 %v2549, %v2547
        %v2592 = vpack.c.b16 %v2552, %v2550
        %v2593 = vpack.c.b16 %v2553, %v2551
        %v2594 = vpack.c.b16 %v2556, %v2554
        %v2595 = vpack.c.b16 %v2557, %v2555
        %v2596 = vpack.c.b16 %v2560, %v2558
        %v2597 = vpack.c.b16 %v2561, %v2559
        %v2598 = vpack.c.b16 %v2564, %v2562
        %v2599 = vpack.c.b16 %v2565, %v2563
        %v2600 = vpack.c.b16 %v2568, %v2566
        %v2601 = vpack.c.b16 %v2569, %v2567
        %v2666 = vunpack.c.l.b16 %v2442
        %v2667 = vunpack.c.l.b16 %v2443
        %v2668 = vunpack.c.l.b16 %v2444
        %v2669 = vunpack.c.l.b16 %v2445
        %v2670 = vunpack.c.l.b16 %v2446
        %v2671 = vunpack.c.l.b16 %v2447
        %v2672 = vunpack.c.l.b16 %v2448
        %v2673 = vunpack.c.l.b16 %v2449
        %v2674 = vunpack.c.l.b16 %v2450
        %v2675 = vunpack.c.l.b16 %v2451
        %v2676 = vunpack.c.l.b16 %v2452
        %v2677 = vunpack.c.l.b16 %v2453
        %v2678 = vunpack.c.l.b16 %v2454
        %v2679 = vunpack.c.l.b16 %v2455
        %v2680 = vunpack.c.l.b16 %v2456
        %v2681 = vunpack.c.l.b16 %v2457
        %v2682 = vunpack.c.l.b16 %v2458
        %v2683 = vunpack.c.l.b16 %v2459
        %v2684 = vunpack.c.l.b16 %v2460
        %v2685 = vunpack.c.l.b16 %v2461
        %v2686 = vunpack.c.l.b16 %v2462
        %v2687 = vunpack.c.l.b16 %v2463
        %v2688 = vunpack.c.l.b16 %v2464
        %v2689 = vunpack.c.l.b16 %v2465
        %v2690 = vunpack.c.l.b16 %v2466
        %v2691 = vunpack.c.l.b16 %v2467
        %v2692 = vunpack.c.l.b16 %v2468
        %v2693 = vunpack.c.l.b16 %v2469
        %v2694 = vunpack.c.l.b16 %v2470
        %v2695 = vunpack.c.l.b16 %v2471
        %v2696 = vunpack.c.l.b16 %v2472
        %v2697 = vunpack.c.l.b16 %v2473
        %v2698 = vpack.c.b16 %v2667, %v2666
        %v2699 = vpack.c.b16 %v2669, %v2668
        %v2700 = vpack.c.b16 %v2671, %v2670
        %v2701 = vpack.c.b16 %v2673, %v2672
        %v2702 = vpack.c.b16 %v2675, %v2674
        %v2703 = vpack.c.b16 %v2677, %v2676
        %v2704 = vpack.c.b16 %v2679, %v2678
        %v2705 = vpack.c.b16 %v2681, %v2680
        %v2706 = vpack.c.b16 %v2683, %v2682
        %v2707 = vpack.c.b16 %v2685, %v2684
        %v2708 = vpack.c.b16 %v2687, %v2686
        %v2709 = vpack.c.b16 %v2689, %v2688
        %v2710 = vpack.c.b16 %v2691, %v2690
        %v2711 = vpack.c.b16 %v2693, %v2692
        %v2712 = vpack.c.b16 %v2695, %v2694
        %v2713 = vpack.c.b16 %v2697, %v2696
        %2730 = vmatprep.subr.bf16.mxu0 0
        %2731 = vmatpush1.bf16.msra.mxu0 %v2705
        %2732 = vmatprep.subr.bf16.mxu0 0
        %2733 = vmatpush1.bf16.msra.mxu0 %v2704
        %2734 = vmatprep.subr.bf16.mxu0 0
        %2735 = vmatpush1.bf16.msra.mxu0 %v2703
        %2736 = vmatprep.subr.bf16.mxu0 0
        %2737 = vmatpush1.bf16.msra.mxu0 %v2702
        %2738 = vmatprep.subr.bf16.mxu0 0
        %2739 = vmatpush1.bf16.msra.mxu0 %v2701
        %2740 = vmatprep.subr.bf16.mxu0 0
        %2741 = vmatpush1.bf16.msra.mxu0 %v2700
        %2742 = vmatprep.subr.bf16.mxu0 0
        %2743 = vmatpush1.bf16.msra.mxu0 %v2699
        %2744 = vmatprep.subr.bf16.mxu0 0
        %2745 = vmatpush1.bf16.msra.mxu0 %v2698
        %2746 = vmatprep.subr.bf16.mxu0 0
        %2747 = vmatpush2.bf16.msra.mxu0 %v2713
        %2748 = vmatprep.subr.bf16.mxu0 0
        %2749 = vmatpush2.bf16.msra.mxu0 %v2712
        %2750 = vmatprep.subr.bf16.mxu0 0
        %2751 = vmatpush2.bf16.msra.mxu0 %v2711
        %2752 = vmatprep.subr.bf16.mxu0 0
        %2753 = vmatpush2.bf16.msra.mxu0 %v2710
        %2754 = vmatprep.subr.bf16.mxu0 0
        %2755 = vmatpush2.bf16.msra.mxu0 %v2709
        %2756 = vmatprep.subr.bf16.mxu0 0
        %2757 = vmatpush2.bf16.msra.mxu0 %v2708
        %2758 = vmatprep.subr.bf16.mxu0 0
        %2759 = vmatpush2.bf16.msra.mxu0 %v2707
        %2760 = vmatprep.subr.bf16.mxu0 0
        %2761 = vmatpush2.bf16.msra.mxu0 %v2706
        %2762 = vmatprep.mubr.bf16.mxu0 %v2571
        %2763 = vmatmul.mubr.bf16.gmra.mxu0 %v2570
        %v2764 = vpop.f32.mrf.mxu0
        %v2765 = vadd.f32 0.0, %v2764
        %v2766 = vpop.f32.mrf.mxu0
        %v2767 = vpop.f32.mrf.mxu0
        %v2768 = vadd.f32 0.0, %v2767
        %v2769 = vpop.f32.mrf.mxu0
        %2770 = vmatprep.mubr.bf16.mxu0 %v2573
        %2771 = vmatmul.mubr.bf16.gmra.mxu0 %v2572
        %v2772 = vpop.f32.mrf.mxu0
        %v2773 = vadd.f32 0.0, %v2772
        %v2774 = vpop.f32.mrf.mxu0
        %v2775 = vpop.f32.mrf.mxu0
        %v2776 = vadd.f32 0.0, %v2775
        %v2777 = vpop.f32.mrf.mxu0
        %2778 = vmatprep.mubr.bf16.mxu0 %v2575
        %2779 = vmatmul.mubr.bf16.gmra.mxu0 %v2574
        %v2780 = vpop.f32.mrf.mxu0
        %v2781 = vadd.f32 0.0, %v2780
        %v2782 = vpop.f32.mrf.mxu0
        %v2783 = vpop.f32.mrf.mxu0
        %v2784 = vadd.f32 0.0, %v2783
        %v2785 = vpop.f32.mrf.mxu0
        %2786 = vmatprep.mubr.bf16.mxu0 %v2577
        %2787 = vmatmul.mubr.bf16.gmra.mxu0 %v2576
        %v2788 = vpop.f32.mrf.mxu0
        %v2789 = vadd.f32 0.0, %v2788
        %v2790 = vpop.f32.mrf.mxu0
        %v2791 = vpop.f32.mrf.mxu0
        %v2792 = vadd.f32 0.0, %v2791
        %v2793 = vpop.f32.mrf.mxu0
        %2794 = vmatprep.mubr.bf16.mxu0 %v2579
        %2795 = vmatmul.mubr.bf16.gmra.mxu0 %v2578
        %v2796 = vpop.f32.mrf.mxu0
        %v2797 = vadd.f32 0.0, %v2796
        %v2798 = vpop.f32.mrf.mxu0
        %v2799 = vpop.f32.mrf.mxu0
        %v2800 = vadd.f32 0.0, %v2799
        %v2801 = vpop.f32.mrf.mxu0
        %2802 = vmatprep.mubr.bf16.mxu0 %v2581
        %2803 = vmatmul.mubr.bf16.gmra.mxu0 %v2580
        %v2804 = vpop.f32.mrf.mxu0
        %v2805 = vadd.f32 0.0, %v2804
        %v2806 = vpop.f32.mrf.mxu0
        %v2807 = vpop.f32.mrf.mxu0
        %v2808 = vadd.f32 0.0, %v2807
        %v2809 = vpop.f32.mrf.mxu0
        %2810 = vmatprep.mubr.bf16.mxu0 %v2583
        %2811 = vmatmul.mubr.bf16.gmra.mxu0 %v2582
        %v2812 = vpop.f32.mrf.mxu0
        %v2813 = vadd.f32 0.0, %v2812
        %v2814 = vpop.f32.mrf.mxu0
        %v2815 = vpop.f32.mrf.mxu0
        %v2816 = vadd.f32 0.0, %v2815
        %v2817 = vpop.f32.mrf.mxu0
        %2818 = vmatprep.mubr.bf16.mxu0 %v2585
        %2819 = vmatmul.mubr.bf16.gmra.mxu0 %v2584
        %v2820 = vpop.f32.mrf.mxu0
        %v2821 = vadd.f32 0.0, %v2820
        %v2822 = vpop.f32.mrf.mxu0
        %v2823 = vpop.f32.mrf.mxu0
        %v2824 = vadd.f32 0.0, %v2823
        %v2825 = vpop.f32.mrf.mxu0
        %2826 = vmatprep.mubr.bf16.mxu0 %v2587
        %2827 = vmatmul.mubr.bf16.gmra.mxu0 %v2586
        %v2828 = vpop.f32.mrf.mxu0
        %v2829 = vadd.f32 0.0, %v2828
        %v2830 = vpop.f32.mrf.mxu0
        %v2831 = vpop.f32.mrf.mxu0
        %v2832 = vadd.f32 0.0, %v2831
        %v2833 = vpop.f32.mrf.mxu0
        %2834 = vmatprep.mubr.bf16.mxu0 %v2589
        %2835 = vmatmul.mubr.bf16.gmra.mxu0 %v2588
        %v2836 = vpop.f32.mrf.mxu0
        %v2837 = vadd.f32 0.0, %v2836
        %v2838 = vpop.f32.mrf.mxu0
        %v2839 = vpop.f32.mrf.mxu0
        %v2840 = vadd.f32 0.0, %v2839
        %v2841 = vpop.f32.mrf.mxu0
        %2842 = vmatprep.mubr.bf16.mxu0 %v2591
        %2843 = vmatmul.mubr.bf16.gmra.mxu0 %v2590
        %v2844 = vpop.f32.mrf.mxu0
        %v2845 = vadd.f32 0.0, %v2844
        %v2846 = vpop.f32.mrf.mxu0
        %v2847 = vpop.f32.mrf.mxu0
        %v2848 = vadd.f32 0.0, %v2847
        %v2849 = vpop.f32.mrf.mxu0
        %2850 = vmatprep.mubr.bf16.mxu0 %v2593
        %2851 = vmatmul.mubr.bf16.gmra.mxu0 %v2592
        %v2852 = vpop.f32.mrf.mxu0
        %v2853 = vadd.f32 0.0, %v2852
        %v2854 = vpop.f32.mrf.mxu0
        %v2855 = vpop.f32.mrf.mxu0
        %v2856 = vadd.f32 0.0, %v2855
        %v2857 = vpop.f32.mrf.mxu0
        %2858 = vmatprep.mubr.bf16.mxu0 %v2595
        %2859 = vmatmul.mubr.bf16.gmra.mxu0 %v2594
        %v2860 = vpop.f32.mrf.mxu0
        %v2861 = vadd.f32 0.0, %v2860
        %v2862 = vpop.f32.mrf.mxu0
        %v2863 = vpop.f32.mrf.mxu0
        %v2864 = vadd.f32 0.0, %v2863
        %v2865 = vpop.f32.mrf.mxu0
        %2866 = vmatprep.mubr.bf16.mxu0 %v2597
        %2867 = vmatmul.mubr.bf16.gmra.mxu0 %v2596
        %v2868 = vpop.f32.mrf.mxu0
        %v2869 = vadd.f32 0.0, %v2868
        %v2870 = vpop.f32.mrf.mxu0
        %v2871 = vpop.f32.mrf.mxu0
        %v2872 = vadd.f32 0.0, %v2871
        %v2873 = vpop.f32.mrf.mxu0
        %2874 = vmatprep.mubr.bf16.mxu0 %v2599
        %2875 = vmatmul.mubr.bf16.gmra.mxu0 %v2598
        %v2876 = vpop.f32.mrf.mxu0
        %v2877 = vadd.f32 0.0, %v2876
        %v2878 = vpop.f32.mrf.mxu0
        %v2879 = vpop.f32.mrf.mxu0
        %v2880 = vadd.f32 0.0, %v2879
        %v2881 = vpop.f32.mrf.mxu0
        %2882 = vmatprep.mubr.bf16.mxu0 %v2601
        %2883 = vmatmul.mubr.bf16.gmra.mxu0 %v2600
        %v2884 = vpop.f32.mrf.mxu0
        %v2885 = vadd.f32 0.0, %v2884
        %v2886 = vpop.f32.mrf.mxu0
        %v2887 = vpop.f32.mrf.mxu0
        %v2888 = vadd.f32 0.0, %v2887
        %v2889 = vpop.f32.mrf.mxu0
        %2890 = vdwg.mxu0
        %2891 = vst [vmem:[%s217] sm:$0xff] %v2765
        %2892 = vst [vmem:[%s217 + $0x8] sm:$0xff] %v2768
        %2893 = vst [vmem:[%s217 + $0x10] sm:$0xff] %v2773
        %2894 = vst [vmem:[%s217 + $0x18] sm:$0xff] %v2776
        %2895 = vst [vmem:[%s217 + $0x20] sm:$0xff] %v2781
        %2896 = vst [vmem:[%s217 + $0x28] sm:$0xff] %v2784
        %2897 = vst [vmem:[%s217 + $0x30] sm:$0xff] %v2789
        %2898 = vst [vmem:[%s217 + $0x38] sm:$0xff] %v2792
        %2899 = vst [vmem:[%s217 + $0x40] sm:$0xff] %v2797
        %2900 = vst [vmem:[%s217 + $0x48] sm:$0xff] %v2800
        %2901 = vst [vmem:[%s217 + $0x50] sm:$0xff] %v2805
        %2902 = vst [vmem:[%s217 + $0x58] sm:$0xff] %v2808
        %2903 = vst [vmem:[%s217 + $0x60] sm:$0xff] %v2813
        %2904 = vst [vmem:[%s217 + $0x68] sm:$0xff] %v2816
        %2905 = vst [vmem:[%s217 + $0x70] sm:$0xff] %v2821
        %2906 = vst [vmem:[%s217 + $0x78] sm:$0xff] %v2824
        %2907 = vst [vmem:[%s217 + $0x80] sm:$0xff] %v2829
        %2908 = vst [vmem:[%s217 + $0x88] sm:$0xff] %v2832
        %2909 = vst [vmem:[%s217 + $0x90] sm:$0xff] %v2837
        %2910 = vst [vmem:[%s217 + $0x98] sm:$0xff] %v2840
        %2911 = vst [vmem:[%s217 + $0xa0] sm:$0xff] %v2845
        %2912 = vst [vmem:[%s217 + $0xa8] sm:$0xff] %v2848
        %2913 = vst [vmem:[%s217 + $0xb0] sm:$0xff] %v2853
        %2914 = vst [vmem:[%s217 + $0xb8] sm:$0xff] %v2856
        %2915 = vst [vmem:[%s217 + $0xc0] sm:$0xff] %v2861
        %2916 = vst [vmem:[%s217 + $0xc8] sm:$0xff] %v2864
        %2917 = vst [vmem:[%s217 + $0xd0] sm:$0xff] %v2869
        %2918 = vst [vmem:[%s217 + $0xd8] sm:$0xff] %v2872
        %2919 = vst [vmem:[%s217 + $0xe0] sm:$0xff] %v2877
        %2920 = vst [vmem:[%s217 + $0xe8] sm:$0xff] %v2880
        %2921 = vst [vmem:[%s217 + $0xf0] sm:$0xff] %v2885
        %2922 = vst [vmem:[%s217 + $0xf8] sm:$0xff] %v2888
        %s2923 = sand.u32 %s97, 1
        %s2924 = scalar_lea.sflag [#allocation5], %s2923
        %s2925 = sand.u32 %s97, 1
        %s2926 = smul.addr %s2925, 256
        %s2927 = scalar_lea.vmem [#allocation9], %s2926
        // Predicated region
        $region45: #{tpu_custom_call.1} parent=31 // pred_check
          %p2928 = pneg %p107
        $region46: #{tpu_custom_call.1} parent=31 // pred_check_branch
          %2930 = sbr.rel (%p2928) target = $region48
        $region47: #{tpu_custom_call.1} parent=31 // pred_region
          %s2932 = ssub.s32 4096, 4096
          %2933 = vsyncadd %s2924, %s2932
          %s2934 = smul.addr %s21, 32
          %s2935 = smul.addr %s2934, 128
          %s2936 = scalar_lea.hbm %s3, %s2935
          %s2937 = sshll.u32 %s2927, 4
          %s2938 = int_to_ptr.vmem [resolvable:$true] %s2937
          %2943 = dma.vmem_to_hbm [thread:$0]  %s2938, 4096, %s2936, %s2924, 128, 128, 8
        $region48: #{tpu_custom_call.1} parent=31 // pred_fallthru
          _
      $region32: #{tpu_custom_call.1} parent=5 // pred_fallthru
        _
      %p2944 = scmp.le.s32.totalorder 2, %s16
      // Predicated region
      $region49: #{tpu_custom_call.1} parent=5 // pred_check
        %p2945 = pneg %p2944
      $region50: #{tpu_custom_call.1} parent=5 // pred_check_branch
        %2947 = sbr.rel (%p2945) target = $region52
      $region51: #{tpu_custom_call.1} parent=5 // pred_region
        %s2948 = ssub.s32 %s16, 2
        // Predicated region
        $region53: #{tpu_custom_call.1} parent=51 // pred_check
          %p2949 = pneg %p113
        $region54: #{tpu_custom_call.1} parent=51 // pred_check_branch
          %2951 = sbr.rel (%p2949) target = $region56
        $region55: #{tpu_custom_call.1} parent=51 // pred_region
          %s2952 = sand.u32 %s98, 1
          %s2953 = scalar_lea.sflag [#allocation5], %s2952
          %s2954 = sand.u32 %s98, 1
          %s2955 = smul.addr %s2954, 256
          %s2956 = scalar_lea.vmem [#allocation9], %s2955
          %2957 = dma.done %s2953, 4096
        $region56: #{tpu_custom_call.1} parent=51 // pred_fallthru
          _
      $region52: #{tpu_custom_call.1} parent=5 // pred_fallthru
        _
    $region6: #{tpu_custom_call.1} parent=1 // loop_footer
      %s20 = sadd.s32 1, %s16
    $region7: #{tpu_custom_call.1} parent=1 // loop_footer_branch
      %15 = sbr.rel target = $region3
    $region8: #{tpu_custom_call.1} parent=1 // loop_exit
      _
    %2958 = vsyncpa [#allocation4], 1
    %s2959 = scalar_lea.sflag [#allocation4], 1
    %2960 = vsyncpa %s2959, 1
    %2961 = vsyncpa [#allocation7], 1
    %2962 = vsyncpa [#allocation5], 1
    %s2963 = scalar_lea.sflag [#allocation5], 1
    %2964 = vsyncpa %s2963, 1

</llo_original>
